<compile_context>
chip_gen: v7x
topology: tpu7x:2x2x1
jax: 0.10.0
libtpu: 0.0.40
codegen_flags: <defaults>
</compile_context>

<pallas_src>
import functools

import jax
import jax.numpy as jnp
from jax import lax
from jax.experimental import pallas as pl
from jax.experimental.pallas import tpu as pltpu


# --------------------------------------------------------------------------- #
# Kernel 1: fused graph branch                                                 #
#   3 x (GCNConv + GraphNorm + ReLU)  ->  global mean pool  ->                 #
#   fc_g1 + BN(eval) + ReLU  ->  fc_g2 + ReLU                                  #
# Everything lives in VMEM for the whole call (single invocation, no grid).    #
# --------------------------------------------------------------------------- #
def graph_branch_kernel(a_ref, x_ref, mmean_ref, msel_ref,
                        w1_ref, b1_ref, g1w_ref, g1b_ref, g1m_ref,
                        w2_ref, b2_ref, g2w_ref, g2b_ref, g2m_ref,
                        w3_ref, b3_ref, g3w_ref, g3b_ref, g3m_ref,
                        fg1w_ref, fg1b_ref, bn1s_ref, bn1t_ref,
                        fg2w_ref, fg2b_ref, o_ref):
    a = a_ref[...]          # (N, N) normalized adjacency
    mmean = mmean_ref[...]  # (G, N) per-graph mean operator
    msel = msel_ref[...]    # (N, G) graph-membership selector

    def gcn_gn_relu(h, w_ref, b_ref, gw_ref, gb_ref, gms_ref):
        # GCNConv:  h = A_hat @ (h @ W) + b
        h = jnp.dot(h, w_ref[...], preferred_element_type=jnp.float32)
        h = jnp.dot(a, h, preferred_element_type=jnp.float32) + b_ref[...]
        # GraphNorm (per-graph stats via one-hot membership matmuls)
        mean = jnp.dot(mmean, h, preferred_element_type=jnp.float32)          # (G, D)
        centered = h - jnp.dot(msel, mean,
                               preferred_element_type=jnp.float32) * gms_ref[...]
        var = jnp.dot(mmean, centered * centered,
                      preferred_element_type=jnp.float32)                     # (G, D)
        inv_std = lax.rsqrt(var + 1e-5)                                       # EUP, small
        y = gw_ref[...] * centered * jnp.dot(msel, inv_std,
                                             preferred_element_type=jnp.float32)
        return jnp.maximum(y + gb_ref[...], 0.0)

    h = gcn_gn_relu(x_ref[...], w1_ref, b1_ref, g1w_ref, g1b_ref, g1m_ref)
    h = gcn_gn_relu(h, w2_ref, b2_ref, g2w_ref, g2b_ref, g2m_ref)
    h = gcn_gn_relu(h, w3_ref, b3_ref, g3w_ref, g3b_ref, g3m_ref)
    # global mean pool per graph
    xg = jnp.dot(mmean, h, preferred_element_type=jnp.float32)                # (G, 276)
    # fc_g1 + eval-BatchNorm1d + ReLU    (dropout = identity)
    z = jnp.dot(xg.astype(jnp.bfloat16), fg1w_ref[...],
                preferred_element_type=jnp.float32) + fg1b_ref[...]
    z = jnp.maximum(z * bn1s_ref[...] + bn1t_ref[...], 0.0)
    # fc_g2 + ReLU
    z = jnp.dot(z.astype(jnp.bfloat16), fg2w_ref[...],
                preferred_element_type=jnp.float32) + fg2b_ref[...]
    o_ref[...] = jnp.maximum(z, 0.0)


def graph_branch(q, x, a_hat, mmean, msel):
    g = mmean.shape[0]
    dout = q['fc_g2_w'].shape[1]
    return pl.pallas_call(
        graph_branch_kernel,
        out_shape=jax.ShapeDtypeStruct((g, dout), jnp.float32),
        compiler_params=pltpu.CompilerParams(vmem_limit_bytes=32 * 1024 * 1024),
    )(a_hat, x, mmean, msel,
      q['gc1_w'], q['gc1_b'], q['gn1_w'], q['gn1_b'], q['gn1_ms'],
      q['gc2_w'], q['gc2_b'], q['gn2_w'], q['gn2_b'], q['gn2_ms'],
      q['gc3_w'], q['gc3_b'], q['gn3_w'], q['gn3_b'], q['gn3_ms'],
      q['fc_g1_w'], q['fc_g1_b'], q['bn1_s'], q['bn1_t'],
      q['fc_g2_w'], q['fc_g2_b'])


# --------------------------------------------------------------------------- #
# Kernel 2: Conv1d (valid) + eval-BatchNorm + ReLU, (B, L, C) layout           #
#   One dot per batch element:  Y = X(L,Cin) @ W(Cin, K*Cout)  then the conv   #
#   is 12 shifted adds of the SMALL (Lout, Cout) product slices.               #
# --------------------------------------------------------------------------- #
def conv1d_bn_relu_kernel(x_ref, w_ref, b_ref, scale_ref, shift_ref, o_ref, y_ref,
                          *, ksz, lout, cout):
    # x_ref: (1, L, Cin)   w_ref: (Cin, K*Cout) bf16, column index = k*Cout + co
    y_ref[...] = jnp.dot(x_ref[0].astype(jnp.bfloat16), w_ref[...],
                         preferred_element_type=jnp.float32)           # (L, K*Cout)
    acc = y_ref[0:lout, 0:cout]
    for k in range(1, ksz):                                            # static unroll
        acc = acc + y_ref[k:k + lout, k * cout:(k + 1) * cout]
    z = (acc + b_ref[...]) * scale_ref[...] + shift_ref[...]           # folded BN
    o_ref[0] = jnp.maximum(z, 0.0)


def conv1d_bn_relu(x, w_packed, b, scale, shift, *, ksz, cout):
    # x: (B, L, Cin) activations;  w_packed: (Cin, K*Cout) bf16
    bsz, length, cin = x.shape
    lout = length - ksz + 1
    return pl.pallas_call(
        functools.partial(conv1d_bn_relu_kernel, ksz=ksz, lout=lout, cout=cout),
        out_shape=jax.ShapeDtypeStruct((bsz, lout, cout), jnp.float32),
        grid_spec=pltpu.PrefetchScalarGridSpec(
            num_scalar_prefetch=0,
            grid=(bsz,),
            in_specs=[pl.BlockSpec((1, length, cin), lambda bi: (bi, 0, 0)),
                      pl.BlockSpec((cin, ksz * cout), lambda bi: (0, 0)),
                      pl.BlockSpec((1, cout), lambda bi: (0, 0)),
                      pl.BlockSpec((1, cout), lambda bi: (0, 0)),
                      pl.BlockSpec((1, cout), lambda bi: (0, 0))],
            out_specs=pl.BlockSpec((1, lout, cout), lambda bi: (bi, 0, 0)),
            scratch_shapes=[pltpu.VMEM((length, ksz * cout), jnp.float32)]),
        compiler_params=pltpu.CompilerParams(
            dimension_semantics=("parallel",),
            vmem_limit_bytes=32 * 1024 * 1024),
    )(x, w_packed, b, scale, shift)


# --------------------------------------------------------------------------- #
# Kernel 3: Linear + eval-BatchNorm + optional ReLU                            #
#   tiled over (dout "parallel", K "arbitrary"); bf16 operands, f32 accumulate #
# --------------------------------------------------------------------------- #
def linear_kernel(x_ref, w_ref, b_ref, scale_ref, shift_ref, o_ref, acc_ref, *, relu):
    k = pl.program_id(1)

    @pl.when(k == 0)
    def _():
        acc_ref[...] = jnp.zeros_like(acc_ref)

    acc_ref[...] += jnp.dot(x_ref[...].astype(jnp.bfloat16), w_ref[...],
                            preferred_element_type=jnp.float32)

    @pl.when(k == pl.num_programs(1) - 1)
    def _():
        y = (acc_ref[...] + b_ref[...]) * scale_ref[...] + shift_ref[...]
        if relu:
            y = jnp.maximum(y, 0.0)
        o_ref[...] = y


def linear(x, w, b, scale, shift, *, relu=False):
    # x: (B, din) f32;  w: (din, dout) bf16;  b/scale/shift: (1, dout) f32
    bsz, din = x.shape
    dout = w.shape[1]
    tk = next((t for t in (2560, 2048, 1024, 512) if din % t == 0 and din > t), din)
    tn = 512 if (dout % 512 == 0 and dout > 512) else dout
    nn, nk = dout // tn, din // tk
    return pl.pallas_call(
        functools.partial(linear_kernel, relu=relu),
        out_shape=jax.ShapeDtypeStruct((bsz, dout), jnp.float32),
        grid_spec=pltpu.PrefetchScalarGridSpec(
            num_scalar_prefetch=0,
            grid=(nn, nk),
            in_specs=[pl.BlockSpec((bsz, tk), lambda j, k: (0, k)),
                      pl.BlockSpec((tk, tn), lambda j, k: (k, j)),
                      pl.BlockSpec((1, tn), lambda j, k: (0, j)),
                      pl.BlockSpec((1, tn), lambda j, k: (0, j)),
                      pl.BlockSpec((1, tn), lambda j, k: (0, j))],
            out_specs=pl.BlockSpec((bsz, tn), lambda j, k: (0, j)),
            scratch_shapes=[pltpu.VMEM((bsz, tn), jnp.float32)]),
        compiler_params=pltpu.CompilerParams(
            dimension_semantics=("parallel", "arbitrary"),
            vmem_limit_bytes=32 * 1024 * 1024),
    )(x, w, b, scale, shift)


# --------------------------------------------------------------------------- #
# Kernel 4: fused head                                                         #
#   fc2_xt + ReLU -> [concat xg|xt] fc1 + BN2 + ReLU -> fc2 + BN3 + ReLU -> out#
#   (concat removed by splitting fc1's weight into the xg / xt halves)         #
# --------------------------------------------------------------------------- #
def head_kernel(xg_ref, xt_ref,
                w2xt_ref, b2xt_ref,
                w1g_ref, w1t_ref, b1_ref, bn2s_ref, bn2t_ref,
                w2_ref, b2_ref, bn3s_ref, bn3t_ref,
                wo_ref, bo_ref, o_ref):
    xt = jnp.dot(xt_ref[...].astype(jnp.bfloat16), w2xt_ref[...],
                 preferred_element_type=jnp.float32) + b2xt_ref[...]
    xt = jnp.maximum(xt, 0.0)                                          # (G, 128)
    h = (jnp.dot(xg_ref[...].astype(jnp.bfloat16), w1g_ref[...],
                 preferred_element_type=jnp.float32)
         + jnp.dot(xt.astype(jnp.bfloat16), w1t_ref[...],
                   preferred_element_type=jnp.float32)
         + b1_ref[...])
    h = jnp.maximum(h * bn2s_ref[...] + bn2t_ref[...], 0.0)            # fc1 + BN2 + ReLU
    h = jnp.dot(h.astype(jnp.bfloat16), w2_ref[...],
                preferred_element_type=jnp.float32) + b2_ref[...]
    h = jnp.maximum(h * bn3s_ref[...] + bn3t_ref[...], 0.0)            # fc2 + BN3 + ReLU
    o_ref[...] = jnp.dot(h.astype(jnp.bfloat16), wo_ref[...],
                         preferred_element_type=jnp.float32) + bo_ref[...]


def head(xg, xt, q):
    bsz = xg.shape[0]
    n_out = q['out_w'].shape[1]
    return pl.pallas_call(
        head_kernel,
        out_shape=jax.ShapeDtypeStruct((bsz, n_out), jnp.float32),
        compiler_params=pltpu.CompilerParams(vmem_limit_bytes=32 * 1024 * 1024),
    )(xg, xt,
      q['fc2_xt_w'], q['fc2_xt_b'],
      q['fc1_w_g'], q['fc1_w_t'], q['fc1_b'], q['bn2_s'], q['bn2_t'],
      q['fc2_w'], q['fc2_b'], q['bn3_s'], q['bn3_t'],
      q['out_w'], q['out_b'])


# --------------------------------------------------------------------------- #
# Full forward pass                                                            #
# --------------------------------------------------------------------------- #
def emb_cnnet_forward(q, x, a_hat, mmean, msel, target):
    # ----- graph branch (single fused kernel) -----
    xg = graph_branch(q, x, a_hat, mmean, msel)                        # (G, 128)

    # ----- protein branch: convs consume (B, L, C) directly (no moveaxis) -----
    c = conv1d_bn_relu(target, q['c1_w'], q['c1_b'], q['xtn1_s'], q['xtn1_t'],
                       ksz=12, cout=32)                                # (B, 989, 32)
    c = conv1d_bn_relu(c, q['c2_w'], q['c2_b'], q['xtn2_s'], q['xtn2_t'],
                       ksz=12, cout=32)                                # (B, 978, 32)
    c = conv1d_bn_relu(c, q['c3_w'], q['c3_b'], q['xtn3_s'], q['xtn3_t'],
                       ksz=12, cout=64)                                # (B, 967, 64)
    # MaxPool1d(12) + channel-major flatten (tiny ~0.5 MiB tensor; left as XLA glue)
    # TODO(synk): fold the maxpool+flatten into conv3's finalize once the
    #             sublane-splitting reshape is verified to lower in Mosaic.
    bsz, lc, ch = c.shape
    nwin = lc // 12                                                    # 80
    pooled = jnp.max(c[:, :nwin * 12, :].reshape(bsz, nwin, 12, ch), axis=2)  # (B,80,64)
    xt = jnp.transpose(pooled, (0, 2, 1)).reshape(bsz, ch * nwin)      # == torch .view(-1, 80*64)
    # fc1_xt + BN + ReLU  (weight-streaming bound -> its own tiled kernel)
    xt = linear(xt, q['fc1_xt_w'], q['fc1_xt_b'], q['bn1t_s'], q['bn1t_t'], relu=True)

    # ----- fused head: fc2_xt + concat + fc1 + BN + fc2 + BN + out -----
    return head(xg, xt, q)                                             # (G, 1)


# --------------------------------------------------------------------------- #
# Parameter preparation: fold eval-BN into scale/shift, repack conv weights    #
# to (Cin, K*Cout), pre-cast big matmul weights to bf16, split fc1's weight.   #
# Done ONCE, outside the forward pass.                                         #
# --------------------------------------------------------------------------- #
def prepare_params(p, eps=1e-5):
    def bn(gamma, beta):  # eval-mode BN with running_mean=0, running_var=1
        return ((gamma / jnp.sqrt(1.0 + eps)).reshape(1, -1).astype(jnp.float32),
                beta.reshape(1, -1).astype(jnp.float32))

    def row(v):
        return v.reshape(1, -1).astype(jnp.float32)

    def conv_pack(w):  # (Cout, Cin, K) -> (Cin, K*Cout), column = k*Cout + co
        cout, cin, k = w.shape
        return jnp.transpose(w, (1, 2, 0)).reshape(cin, k * cout).astype(jnp.bfloat16)

    q = {}
    # graph branch
    for i in (1, 2, 3):
        q[f'gc{i}_w'] = p[f'gc{i}_w']
        q[f'gc{i}_b'] = row(p[f'gc{i}_b'])
        q[f'gn{i}_w'] = row(p[f'gn{i}_w'])
        q[f'gn{i}_b'] = row(p[f'gn{i}_b'])
        q[f'gn{i}_ms'] = row(p[f'gn{i}_ms'])
    q['fc_g1_w'] = p['fc_g1_w'].astype(jnp.bfloat16)
    q['fc_g1_b'] = row(p['fc_g1_b'])
    q['bn1_s'], q['bn1_t'] = bn(p['bn1_g'], p['bn1_b'])
    q['fc_g2_w'] = p['fc_g2_w'].astype(jnp.bfloat16)
    q['fc_g2_b'] = row(p['fc_g2_b'])
    # protein convs
    for i in (1, 2, 3):
        q[f'c{i}_w'] = conv_pack(p[f'c{i}_w'])
        q[f'c{i}_b'] = row(p[f'c{i}_b'])
        q[f'xtn{i}_s'], q[f'xtn{i}_t'] = bn(p[f'xtn{i}_g'], p[f'xtn{i}_b'])
    q['fc1_xt_w'] = p['fc1_xt_w'].astype(jnp.bfloat16)
    q['fc1_xt_b'] = row(p['fc1_xt_b'])
    q['bn1t_s'], q['bn1t_t'] = bn(p['bn1t_g'], p['bn1t_b'])
    # head
    q['fc2_xt_w'] = p['fc2_xt_w'].astype(jnp.bfloat16)
    q['fc2_xt_b'] = row(p['fc2_xt_b'])
    d = p['fc_g2_w'].shape[1]                      # output_dim = 128 (concat split point)
    q['fc1_w_g'] = p['fc1_w'][:d].astype(jnp.bfloat16)
    q['fc1_w_t'] = p['fc1_w'][d:].astype(jnp.bfloat16)
    q['fc1_b'] = row(p['fc1_b'])
    q['bn2_s'], q['bn2_t'] = bn(p['bn2_g'], p['bn2_b'])
    q['fc2_w'] = p['fc2_w'].astype(jnp.bfloat16)
    q['fc2_b'] = row(p['fc2_b'])
    q['bn3_s'], q['bn3_t'] = bn(p['bn3_g'], p['bn3_b'])
    q['out_w'] = p['out_w'].astype(jnp.bfloat16)
    q['out_b'] = row(p['out_b'])
    return q


# --------------------------------------------------------------------------- #
# Deterministic parameter init (synthetic; shapes match embCNNet.__init__)     #
# --------------------------------------------------------------------------- #
def init_params(key):
    keys = iter(jax.random.split(key, 64))

    def lin(din, dout):
        w = jax.random.normal(next(keys), (din, dout), jnp.float32) / jnp.sqrt(din)
        b = 0.01 * jax.random.normal(next(keys), (dout,), jnp.float32)
        return w, b

    def conv(cout, cin, k):
        w = jax.random.normal(next(keys), (cout, cin, k), jnp.float32) / jnp.sqrt(cin * k)
        b = 0.01 * jax.random.normal(next(keys), (cout,), jnp.float32)
        return w, b

    p = {}
    p['gc1_w'], p['gc1_b'] = lin(69, 69)
    p['gc2_w'], p['gc2_b'] = lin(69, 138)
    p['gc3_w'], p['gc3_b'] = lin(138, 276)
    for i, d in zip((1, 2, 3), (69, 138, 276)):  # GraphNorm defaults
        p[f'gn{i}_w'] = jnp.ones((d,), jnp.float32)
        p[f'gn{i}_b'] = jnp.zeros((d,), jnp.float32)
        p[f'gn{i}_ms'] = jnp.ones((d,), jnp.float32)
    p['fc_g1_w'], p['fc_g1_b'] = lin(276, 1024)
    p['fc_g2_w'], p['fc_g2_b'] = lin(1024, 128)
    p['c1_w'], p['c1_b'] = conv(32, 1024, 12)
    p['c2_w'], p['c2_b'] = conv(32, 32, 12)
    p['c3_w'], p['c3_b'] = conv(64, 32, 12)
    p['fc1_xt_w'], p['fc1_xt_b'] = lin(80 * 64, 1024)
    p['fc2_xt_w'], p['fc2_xt_b'] = lin(1024, 128)
    p['fc1_w'], p['fc1_b'] = lin(256, 1024)
    p['fc2_w'], p['fc2_b'] = lin(1024, 512)
    p['out_w'], p['out_b'] = lin(512, 1)
    # BatchNorm affine params (eval mode; running_mean=0, running_var=1)
    for name, d in (('xtn1', 32), ('xtn2', 32), ('xtn3', 64),
                    ('bn1', 1024), ('bn1t', 1024), ('bn2', 1024), ('bn3', 512)):
        p[f'{name}_g'] = jnp.ones((d,), jnp.float32)
        p[f'{name}_b'] = jnp.zeros((d,), jnp.float32)
    return p


if __name__ == "__main__":
    key = jax.random.PRNGKey(0)
    kp, kx, kt = jax.random.split(key, 3)
    params = init_params(kp)
    q = prepare_params(params)

    # Small graph: 2 graphs x 8 nodes (N=16), 69 node features.
    # Protein: batch=2, seq=1000, embedding dim=1024 (forced by hardcoded 80*64).
    N, G, F, L, CXT = 16, 2, 69, 1000, 1024
    x = jax.random.normal(kx, (N, F), jnp.float32)
    target = jax.random.normal(kt, (G, L, CXT), jnp.float32)
    batch = jnp.array([0] * 8 + [1] * 8, jnp.int32)

    # Ring edges within each graph, both directions (edge_index = (2, E)).
    src, dst = [], []
    for g in range(G):
        base = g * 8
        for i in range(8):
            src += [base + i, base + (i + 1) % 8]
            dst += [base + (i + 1) % 8, base + i]
    edge_index = jnp.array([src, dst], jnp.int32)

    # Dense GCN normalization:  A_hat = D^{-1/2} (A + I) D^{-1/2}
    adj = jnp.zeros((N, N), jnp.float32).at[edge_index[0], edge_index[1]].set(1.0)
    adj = jnp.maximum(adj, jnp.eye(N, dtype=jnp.float32))  # add self loops
    deg = adj.sum(axis=1)
    dinv = 1.0 / jnp.sqrt(deg)
    a_hat = dinv[:, None] * adj * dinv[None, :]

    # Graph membership matrices (for GraphNorm stats & global mean pooling).
    onehot = (batch[None, :] == jnp.arange(G)[:, None]).astype(jnp.float32)  # (G, N)
    mmean = onehot / onehot.sum(axis=1, keepdims=True)                        # (G, N)
    msel = onehot.T                                                           # (N, G)

    out = emb_cnnet_forward(q, x, a_hat, mmean, msel, target)
    out = jax.block_until_ready(out)
    assert out.shape == (G, 1), out.shape
    assert bool(jnp.all(jnp.isfinite(out)))
    print("KERNEL_OK")
</pallas_src>

<mosaic_0001>
module attributes {stable_mosaic.version = 11 : i64} {
  func.func @graph_branch_kernel(%arg0: memref<16x16xf32, #tpu.memory_space<vmem>>, %arg1: memref<16x69xf32, #tpu.memory_space<vmem>>, %arg2: memref<2x16xf32, #tpu.memory_space<vmem>>, %arg3: memref<16x2xf32, #tpu.memory_space<vmem>>, %arg4: memref<69x69xf32, #tpu.memory_space<vmem>>, %arg5: memref<1x69xf32, #tpu.memory_space<vmem>>, %arg6: memref<1x69xf32, #tpu.memory_space<vmem>>, %arg7: memref<1x69xf32, #tpu.memory_space<vmem>>, %arg8: memref<1x69xf32, #tpu.memory_space<vmem>>, %arg9: memref<69x138xf32, #tpu.memory_space<vmem>>, %arg10: memref<1x138xf32, #tpu.memory_space<vmem>>, %arg11: memref<1x138xf32, #tpu.memory_space<vmem>>, %arg12: memref<1x138xf32, #tpu.memory_space<vmem>>, %arg13: memref<1x138xf32, #tpu.memory_space<vmem>>, %arg14: memref<138x276xf32, #tpu.memory_space<vmem>>, %arg15: memref<1x276xf32, #tpu.memory_space<vmem>>, %arg16: memref<1x276xf32, #tpu.memory_space<vmem>>, %arg17: memref<1x276xf32, #tpu.memory_space<vmem>>, %arg18: memref<1x276xf32, #tpu.memory_space<vmem>>, %arg19: memref<276x1024xbf16, #tpu.memory_space<vmem>>, %arg20: memref<1x1024xf32, #tpu.memory_space<vmem>>, %arg21: memref<1x1024xf32, #tpu.memory_space<vmem>>, %arg22: memref<1x1024xf32, #tpu.memory_space<vmem>>, %arg23: memref<1024x128xbf16, #tpu.memory_space<vmem>>, %arg24: memref<1x128xf32, #tpu.memory_space<vmem>>, %arg25: memref<2x128xf32, #tpu.memory_space<vmem>>) attributes {dimension_semantics = [], scalar_prefetch = 0 : i64, scratch_operands = 0 : i64, tpu.core_type = #tpu.core_type<tc>} {
    %c0 = arith.constant 0 : index
    %c0_0 = arith.constant 0 : index
    %0 = vector.load %arg0[%c0, %c0_0] : memref<16x16xf32, #tpu.memory_space<vmem>>, vector<16x16xf32>
    %c0_1 = arith.constant 0 : index
    %c0_2 = arith.constant 0 : index
    %1 = vector.load %arg2[%c0_1, %c0_2] : memref<2x16xf32, #tpu.memory_space<vmem>>, vector<2x16xf32>
    %c0_3 = arith.constant 0 : index
    %c0_4 = arith.constant 0 : index
    %2 = vector.load %arg3[%c0_3, %c0_4] : memref<16x2xf32, #tpu.memory_space<vmem>>, vector<16x2xf32>
    %c0_5 = arith.constant 0 : index
    %c0_6 = arith.constant 0 : index
    %3 = vector.load %arg1[%c0_5, %c0_6] : memref<16x69xf32, #tpu.memory_space<vmem>>, vector<16x69xf32>
    %c0_7 = arith.constant 0 : index
    %c0_8 = arith.constant 0 : index
    %4 = vector.load %arg4[%c0_7, %c0_8] : memref<69x69xf32, #tpu.memory_space<vmem>>, vector<69x69xf32>
    %cst = arith.constant dense<0.000000e+00> : vector<16x69xf32>
    %5 = tpu.matmul %3, %4, %cst {dimension_numbers = #tpu.dot_dimension_numbers<[1], [0], [0], [1], [0, 0, 1, 1], [], []>} : vector<16x69xf32>, vector<69x69xf32>, vector<16x69xf32> -> vector<16x69xf32>
    %cst_9 = arith.constant dense<0.000000e+00> : vector<16x69xf32>
    %6 = tpu.matmul %0, %5, %cst_9 {dimension_numbers = #tpu.dot_dimension_numbers<[1], [0], [0], [1], [0, 0, 1, 1], [], []>} : vector<16x16xf32>, vector<16x69xf32>, vector<16x69xf32> -> vector<16x69xf32>
    %c0_10 = arith.constant 0 : index
    %c0_11 = arith.constant 0 : index
    %7 = vector.load %arg5[%c0_10, %c0_11] : memref<1x69xf32, #tpu.memory_space<vmem>>, vector<1x69xf32>
    %8 = vector.broadcast %7 : vector<1x69xf32> to vector<16x69xf32>
    %9 = arith.addf %6, %8 : vector<16x69xf32>
    %cst_12 = arith.constant dense<0.000000e+00> : vector<2x69xf32>
    %10 = tpu.matmul %1, %9, %cst_12 {dimension_numbers = #tpu.dot_dimension_numbers<[1], [0], [0], [1], [0, 0, 1, 1], [], []>} : vector<2x16xf32>, vector<16x69xf32>, vector<2x69xf32> -> vector<2x69xf32>
    %cst_13 = arith.constant dense<0.000000e+00> : vector<16x69xf32>
    %11 = tpu.matmul %2, %10, %cst_13 {dimension_numbers = #tpu.dot_dimension_numbers<[1], [0], [0], [1], [0, 0, 1, 1], [], []>} : vector<16x2xf32>, vector<2x69xf32>, vector<16x69xf32> -> vector<16x69xf32>
    %c0_14 = arith.constant 0 : index
    %c0_15 = arith.constant 0 : index
    %12 = vector.load %arg8[%c0_14, %c0_15] : memref<1x69xf32, #tpu.memory_space<vmem>>, vector<1x69xf32>
    %13 = vector.broadcast %12 : vector<1x69xf32> to vector<16x69xf32>
    %14 = arith.mulf %11, %13 : vector<16x69xf32>
    %15 = arith.subf %9, %14 : vector<16x69xf32>
    %16 = arith.mulf %15, %15 : vector<16x69xf32>
    %cst_16 = arith.constant dense<0.000000e+00> : vector<2x69xf32>
    %17 = tpu.matmul %1, %16, %cst_16 {dimension_numbers = #tpu.dot_dimension_numbers<[1], [0], [0], [1], [0, 0, 1, 1], [], []>} : vector<2x16xf32>, vector<16x69xf32>, vector<2x69xf32> -> vector<2x69xf32>
    %cst_17 = arith.constant 9.99999974E-6 : f32
    %18 = vector.broadcast %cst_17 : f32 to vector<2x69xf32>
    %19 = arith.addf %17, %18 : vector<2x69xf32>
    %20 = math.rsqrt %19 : vector<2x69xf32>
    %c0_18 = arith.constant 0 : index
    %c0_19 = arith.constant 0 : index
    %21 = vector.load %arg6[%c0_18, %c0_19] : memref<1x69xf32, #tpu.memory_space<vmem>>, vector<1x69xf32>
    %22 = vector.broadcast %21 : vector<1x69xf32> to vector<16x69xf32>
    %23 = arith.mulf %22, %15 : vector<16x69xf32>
    %cst_20 = arith.constant dense<0.000000e+00> : vector<16x69xf32>
    %24 = tpu.matmul %2, %20, %cst_20 {dimension_numbers = #tpu.dot_dimension_numbers<[1], [0], [0], [1], [0, 0, 1, 1], [], []>} : vector<16x2xf32>, vector<2x69xf32>, vector<16x69xf32> -> vector<16x69xf32>
    %25 = arith.mulf %23, %24 : vector<16x69xf32>
    %c0_21 = arith.constant 0 : index
    %c0_22 = arith.constant 0 : index
    %26 = vector.load %arg7[%c0_21, %c0_22] : memref<1x69xf32, #tpu.memory_space<vmem>>, vector<1x69xf32>
    %27 = vector.broadcast %26 : vector<1x69xf32> to vector<16x69xf32>
    %28 = arith.addf %25, %27 : vector<16x69xf32>
    %cst_23 = arith.constant 0.000000e+00 : f32
    %29 = vector.broadcast %cst_23 : f32 to vector<16x69xf32>
    %30 = arith.maximumf %28, %29 : vector<16x69xf32>
    %c0_24 = arith.constant 0 : index
    %c0_25 = arith.constant 0 : index
    %31 = vector.load %arg9[%c0_24, %c0_25] : memref<69x138xf32, #tpu.memory_space<vmem>>, vector<69x138xf32>
    %cst_26 = arith.constant dense<0.000000e+00> : vector<16x138xf32>
    %32 = tpu.matmul %30, %31, %cst_26 {dimension_numbers = #tpu.dot_dimension_numbers<[1], [0], [0], [1], [0, 0, 1, 1], [], []>} : vector<16x69xf32>, vector<69x138xf32>, vector<16x138xf32> -> vector<16x138xf32>
    %cst_27 = arith.constant dense<0.000000e+00> : vector<16x138xf32>
    %33 = tpu.matmul %0, %32, %cst_27 {dimension_numbers = #tpu.dot_dimension_numbers<[1], [0], [0], [1], [0, 0, 1, 1], [], []>} : vector<16x16xf32>, vector<16x138xf32>, vector<16x138xf32> -> vector<16x138xf32>
    %c0_28 = arith.constant 0 : index
    %c0_29 = arith.constant 0 : index
    %34 = vector.load %arg10[%c0_28, %c0_29] : memref<1x138xf32, #tpu.memory_space<vmem>>, vector<1x138xf32>
    %35 = vector.broadcast %34 : vector<1x138xf32> to vector<16x138xf32>
    %36 = arith.addf %33, %35 : vector<16x138xf32>
    %cst_30 = arith.constant dense<0.000000e+00> : vector<2x138xf32>
    %37 = tpu.matmul %1, %36, %cst_30 {dimension_numbers = #tpu.dot_dimension_numbers<[1], [0], [0], [1], [0, 0, 1, 1], [], []>} : vector<2x16xf32>, vector<16x138xf32>, vector<2x138xf32> -> vector<2x138xf32>
    %cst_31 = arith.constant dense<0.000000e+00> : vector<16x138xf32>
    %38 = tpu.matmul %2, %37, %cst_31 {dimension_numbers = #tpu.dot_dimension_numbers<[1], [0], [0], [1], [0, 0, 1, 1], [], []>} : vector<16x2xf32>, vector<2x138xf32>, vector<16x138xf32> -> vector<16x138xf32>
    %c0_32 = arith.constant 0 : index
    %c0_33 = arith.constant 0 : index
    %39 = vector.load %arg13[%c0_32, %c0_33] : memref<1x138xf32, #tpu.memory_space<vmem>>, vector<1x138xf32>
    %40 = vector.broadcast %39 : vector<1x138xf32> to vector<16x138xf32>
    %41 = arith.mulf %38, %40 : vector<16x138xf32>
    %42 = arith.subf %36, %41 : vector<16x138xf32>
    %43 = arith.mulf %42, %42 : vector<16x138xf32>
    %cst_34 = arith.constant dense<0.000000e+00> : vector<2x138xf32>
    %44 = tpu.matmul %1, %43, %cst_34 {dimension_numbers = #tpu.dot_dimension_numbers<[1], [0], [0], [1], [0, 0, 1, 1], [], []>} : vector<2x16xf32>, vector<16x138xf32>, vector<2x138xf32> -> vector<2x138xf32>
    %cst_35 = arith.constant 9.99999974E-6 : f32
    %45 = vector.broadcast %cst_35 : f32 to vector<2x138xf32>
    %46 = arith.addf %44, %45 : vector<2x138xf32>
    %47 = math.rsqrt %46 : vector<2x138xf32>
    %c0_36 = arith.constant 0 : index
    %c0_37 = arith.constant 0 : index
    %48 = vector.load %arg11[%c0_36, %c0_37] : memref<1x138xf32, #tpu.memory_space<vmem>>, vector<1x138xf32>
    %49 = vector.broadcast %48 : vector<1x138xf32> to vector<16x138xf32>
    %50 = arith.mulf %49, %42 : vector<16x138xf32>
    %cst_38 = arith.constant dense<0.000000e+00> : vector<16x138xf32>
    %51 = tpu.matmul %2, %47, %cst_38 {dimension_numbers = #tpu.dot_dimension_numbers<[1], [0], [0], [1], [0, 0, 1, 1], [], []>} : vector<16x2xf32>, vector<2x138xf32>, vector<16x138xf32> -> vector<16x138xf32>
    %52 = arith.mulf %50, %51 : vector<16x138xf32>
    %c0_39 = arith.constant 0 : index
    %c0_40 = arith.constant 0 : index
    %53 = vector.load %arg12[%c0_39, %c0_40] : memref<1x138xf32, #tpu.memory_space<vmem>>, vector<1x138xf32>
    %54 = vector.broadcast %53 : vector<1x138xf32> to vector<16x138xf32>
    %55 = arith.addf %52, %54 : vector<16x138xf32>
    %cst_41 = arith.constant 0.000000e+00 : f32
    %56 = vector.broadcast %cst_41 : f32 to vector<16x138xf32>
    %57 = arith.maximumf %55, %56 : vector<16x138xf32>
    %c0_42 = arith.constant 0 : index
    %c0_43 = arith.constant 0 : index
    %58 = vector.load %arg14[%c0_42, %c0_43] : memref<138x276xf32, #tpu.memory_space<vmem>>, vector<138x276xf32>
    %cst_44 = arith.constant dense<0.000000e+00> : vector<16x276xf32>
    %59 = tpu.matmul %57, %58, %cst_44 {dimension_numbers = #tpu.dot_dimension_numbers<[1], [0], [0], [1], [0, 0, 1, 1], [], []>} : vector<16x138xf32>, vector<138x276xf32>, vector<16x276xf32> -> vector<16x276xf32>
    %cst_45 = arith.constant dense<0.000000e+00> : vector<16x276xf32>
    %60 = tpu.matmul %0, %59, %cst_45 {dimension_numbers = #tpu.dot_dimension_numbers<[1], [0], [0], [1], [0, 0, 1, 1], [], []>} : vector<16x16xf32>, vector<16x276xf32>, vector<16x276xf32> -> vector<16x276xf32>
    %c0_46 = arith.constant 0 : index
    %c0_47 = arith.constant 0 : index
    %61 = vector.load %arg15[%c0_46, %c0_47] : memref<1x276xf32, #tpu.memory_space<vmem>>, vector<1x276xf32>
    %62 = vector.broadcast %61 : vector<1x276xf32> to vector<16x276xf32>
    %63 = arith.addf %60, %62 : vector<16x276xf32>
    %cst_48 = arith.constant dense<0.000000e+00> : vector<2x276xf32>
    %64 = tpu.matmul %1, %63, %cst_48 {dimension_numbers = #tpu.dot_dimension_numbers<[1], [0], [0], [1], [0, 0, 1, 1], [], []>} : vector<2x16xf32>, vector<16x276xf32>, vector<2x276xf32> -> vector<2x276xf32>
    %cst_49 = arith.constant dense<0.000000e+00> : vector<16x276xf32>
    %65 = tpu.matmul %2, %64, %cst_49 {dimension_numbers = #tpu.dot_dimension_numbers<[1], [0], [0], [1], [0, 0, 1, 1], [], []>} : vector<16x2xf32>, vector<2x276xf32>, vector<16x276xf32> -> vector<16x276xf32>
    %c0_50 = arith.constant 0 : index
    %c0_51 = arith.constant 0 : index
    %66 = vector.load %arg18[%c0_50, %c0_51] : memref<1x276xf32, #tpu.memory_space<vmem>>, vector<1x276xf32>
    %67 = vector.broadcast %66 : vector<1x276xf32> to vector<16x276xf32>
    %68 = arith.mulf %65, %67 : vector<16x276xf32>
    %69 = arith.subf %63, %68 : vector<16x276xf32>
    %70 = arith.mulf %69, %69 : vector<16x276xf32>
    %cst_52 = arith.constant dense<0.000000e+00> : vector<2x276xf32>
    %71 = tpu.matmul %1, %70, %cst_52 {dimension_numbers = #tpu.dot_dimension_numbers<[1], [0], [0], [1], [0, 0, 1, 1], [], []>} : vector<2x16xf32>, vector<16x276xf32>, vector<2x276xf32> -> vector<2x276xf32>
    %cst_53 = arith.constant 9.99999974E-6 : f32
    %72 = vector.broadcast %cst_53 : f32 to vector<2x276xf32>
    %73 = arith.addf %71, %72 : vector<2x276xf32>
    %74 = math.rsqrt %73 : vector<2x276xf32>
    %c0_54 = arith.constant 0 : index
    %c0_55 = arith.constant 0 : index
    %75 = vector.load %arg16[%c0_54, %c0_55] : memref<1x276xf32, #tpu.memory_space<vmem>>, vector<1x276xf32>
    %76 = vector.broadcast %75 : vector<1x276xf32> to vector<16x276xf32>
    %77 = arith.mulf %76, %69 : vector<16x276xf32>
    %cst_56 = arith.constant dense<0.000000e+00> : vector<16x276xf32>
    %78 = tpu.matmul %2, %74, %cst_56 {dimension_numbers = #tpu.dot_dimension_numbers<[1], [0], [0], [1], [0, 0, 1, 1], [], []>} : vector<16x2xf32>, vector<2x276xf32>, vector<16x276xf32> -> vector<16x276xf32>
    %79 = arith.mulf %77, %78 : vector<16x276xf32>
    %c0_57 = arith.constant 0 : index
    %c0_58 = arith.constant 0 : index
    %80 = vector.load %arg17[%c0_57, %c0_58] : memref<1x276xf32, #tpu.memory_space<vmem>>, vector<1x276xf32>
    %81 = vector.broadcast %80 : vector<1x276xf32> to vector<16x276xf32>
    %82 = arith.addf %79, %81 : vector<16x276xf32>
    %cst_59 = arith.constant 0.000000e+00 : f32
    %83 = vector.broadcast %cst_59 : f32 to vector<16x276xf32>
    %84 = arith.maximumf %82, %83 : vector<16x276xf32>
    %cst_60 = arith.constant dense<0.000000e+00> : vector<2x276xf32>
    %85 = tpu.matmul %1, %84, %cst_60 {dimension_numbers = #tpu.dot_dimension_numbers<[1], [0], [0], [1], [0, 0, 1, 1], [], []>} : vector<2x16xf32>, vector<16x276xf32>, vector<2x276xf32> -> vector<2x276xf32>
    %86 = arith.truncf %85 : vector<2x276xf32> to vector<2x276xbf16>
    %c0_61 = arith.constant 0 : index
    %c0_62 = arith.constant 0 : index
    %87 = vector.load %arg19[%c0_61, %c0_62] : memref<276x1024xbf16, #tpu.memory_space<vmem>>, vector<276x1024xbf16>
    %cst_63 = arith.constant dense<0.000000e+00> : vector<2x1024xf32>
    %88 = tpu.matmul %86, %87, %cst_63 {dimension_numbers = #tpu.dot_dimension_numbers<[1], [0], [0], [1], [0, 0, 1, 1], [], []>} : vector<2x276xbf16>, vector<276x1024xbf16>, vector<2x1024xf32> -> vector<2x1024xf32>
    %c0_64 = arith.constant 0 : index
    %c0_65 = arith.constant 0 : index
    %89 = vector.load %arg20[%c0_64, %c0_65] : memref<1x1024xf32, #tpu.memory_space<vmem>>, vector<1x1024xf32>
    %90 = vector.broadcast %89 : vector<1x1024xf32> to vector<2x1024xf32>
    %91 = arith.addf %88, %90 : vector<2x1024xf32>
    %c0_66 = arith.constant 0 : index
    %c0_67 = arith.constant 0 : index
    %92 = vector.load %arg21[%c0_66, %c0_67] : memref<1x1024xf32, #tpu.memory_space<vmem>>, vector<1x1024xf32>
    %93 = vector.broadcast %92 : vector<1x1024xf32> to vector<2x1024xf32>
    %94 = arith.mulf %91, %93 : vector<2x1024xf32>
    %c0_68 = arith.constant 0 : index
    %c0_69 = arith.constant 0 : index
    %95 = vector.load %arg22[%c0_68, %c0_69] : memref<1x1024xf32, #tpu.memory_space<vmem>>, vector<1x1024xf32>
    %96 = vector.broadcast %95 : vector<1x1024xf32> to vector<2x1024xf32>
    %97 = arith.addf %94, %96 : vector<2x1024xf32>
    %cst_70 = arith.constant 0.000000e+00 : f32
    %98 = vector.broadcast %cst_70 : f32 to vector<2x1024xf32>
    %99 = arith.maximumf %97, %98 : vector<2x1024xf32>
    %100 = arith.truncf %99 : vector<2x1024xf32> to vector<2x1024xbf16>
    %c0_71 = arith.constant 0 : index
    %c0_72 = arith.constant 0 : index
    %101 = vector.load %arg23[%c0_71, %c0_72] : memref<1024x128xbf16, #tpu.memory_space<vmem>>, vector<1024x128xbf16>
    %cst_73 = arith.constant dense<0.000000e+00> : vector<2x128xf32>
    %102 = tpu.matmul %100, %101, %cst_73 {dimension_numbers = #tpu.dot_dimension_numbers<[1], [0], [0], [1], [0, 0, 1, 1], [], []>} : vector<2x1024xbf16>, vector<1024x128xbf16>, vector<2x128xf32> -> vector<2x128xf32>
    %c0_74 = arith.constant 0 : index
    %c0_75 = arith.constant 0 : index
    %103 = vector.load %arg24[%c0_74, %c0_75] : memref<1x128xf32, #tpu.memory_space<vmem>>, vector<1x128xf32>
    %104 = vector.broadcast %103 : vector<1x128xf32> to vector<2x128xf32>
    %105 = arith.addf %102, %104 : vector<2x128xf32>
    %cst_76 = arith.constant 0.000000e+00 : f32
    %106 = vector.broadcast %cst_76 : f32 to vector<2x128xf32>
    %107 = arith.maximumf %105, %106 : vector<2x128xf32>
    %c0_77 = arith.constant 0 : index
    %c0_78 = arith.constant 0 : index
    %108 = vector.load %arg25[%c0_77, %c0_78] : memref<2x128xf32, #tpu.memory_space<vmem>>, vector<2x128xf32>
    tpu.vector_store %arg25[%c0_77, %c0_78], %107 {strides = array<i32>} : memref<2x128xf32, #tpu.memory_space<vmem>>, vector<2x128xf32>,
    return
  }
}

</mosaic_0001>

<llo_original>
// kernel: tpu_custom_call.1
$region0: #{tpu_custom_call.1}
  #allocation0 [shape = 'u32[]', space=smem, size = 0x4, offset = 0x4, fixed_abs, tag = 'smem constant byte address 0x4 - core index']
  #allocation1 [shape = 'u32[144,128]{1,0:T(1,128)}', space=vmem, size = 0x12000, scoped, tag = 'internal scratch']
  %s0 = inlined_call_operand.vmem [shape: f32[16,16], index: 0, kind: input, shape index: {}]
  %s1 = inlined_call_operand.hbm [shape: f32[16,69], index: 1, kind: input, shape index: {}]
  %s2 = inlined_call_operand.hbm [shape: f32[2,16], index: 2, kind: input, shape index: {}]
  %s3 = inlined_call_operand.vmem [shape: f32[16,2], index: 3, kind: input, shape index: {}]
  %s4 = inlined_call_operand.hbm [shape: f32[69,69], index: 4, kind: input, shape index: {}]
  %s5 = inlined_call_operand.hbm [shape: f32[1,69], index: 5, kind: input, shape index: {}]
  %s6 = inlined_call_operand.hbm [shape: f32[1,69], index: 6, kind: input, shape index: {}]
  %s7 = inlined_call_operand.hbm [shape: f32[1,69], index: 7, kind: input, shape index: {}]
  %s8 = inlined_call_operand.hbm [shape: f32[1,69], index: 8, kind: input, shape index: {}]
  %s9 = inlined_call_operand.hbm [shape: f32[69,138], index: 9, kind: input, shape index: {}]
  %s10 = inlined_call_operand.vmem [shape: f32[1,138], index: 10, kind: input, shape index: {}]
  %s11 = inlined_call_operand.vmem [shape: f32[1,138], index: 11, kind: input, shape index: {}]
  %s12 = inlined_call_operand.vmem [shape: f32[1,138], index: 12, kind: input, shape index: {}]
  %s13 = inlined_call_operand.vmem [shape: f32[1,138], index: 13, kind: input, shape index: {}]
  %s14 = inlined_call_operand.hbm [shape: f32[138,276], index: 14, kind: input, shape index: {}]
  %s15 = inlined_call_operand.vmem [shape: f32[1,276], index: 15, kind: input, shape index: {}]
  %s16 = inlined_call_operand.vmem [shape: f32[1,276], index: 16, kind: input, shape index: {}]
  %s17 = inlined_call_operand.vmem [shape: f32[1,276], index: 17, kind: input, shape index: {}]
  %s18 = inlined_call_operand.vmem [shape: f32[1,276], index: 18, kind: input, shape index: {}]
  %s19 = inlined_call_operand.hbm [shape: bf16[276,1024], index: 19, kind: input, shape index: {}]
  %s20 = inlined_call_operand.vmem [shape: f32[1,1024], index: 20, kind: input, shape index: {}]
  %s21 = inlined_call_operand.vmem [shape: f32[1,1024], index: 21, kind: input, shape index: {}]
  %s22 = inlined_call_operand.vmem [shape: f32[1,1024], index: 22, kind: input, shape index: {}]
  %s23 = inlined_call_operand.hbm [shape: bf16[1024,128], index: 23, kind: input, shape index: {}]
  %s24 = inlined_call_operand.vmem [shape: f32[1,128], index: 24, kind: input, shape index: {}]
  %s25 = inlined_call_operand.hbm [shape: f32[2,128], index: 25, kind: output, shape index: {}]
  %s26 = sld [smem:[#allocation0]]
  $region154: #{tpu_custom_call.1} parent=0
    _
  %s28 = ssub.s32 1, %s26
  %s29 = scalar_select 0, %s28, %s26
  $region1: #{tpu_custom_call.1} parent=0
    #allocation2 [shape = 'u8[8192]{0}', space=vmem, size = 0x2000, scoped, tag = 'input window, operand 1, single buffered']
    #allocation3 [shape = 's32[1]{0}', space=sflag, size = 0x4, scoped, tag = 'scoped memory for tpu_custom_call.1']
    #allocation4 [shape = 's32[1]{0}', space=sflag, size = 0x4, scoped, tag = 'scoped memory for tpu_custom_call.1']
    #allocation5 [shape = 'u8[1024]{0}', space=vmem, size = 0x400, scoped, tag = 'input window, operand 2, single buffered']
    #allocation6 [shape = 's32[1]{0}', space=sflag, size = 0x4, scoped, tag = 'scoped memory for tpu_custom_call.1']
    #allocation7 [shape = 'u8[36864]{0}', space=vmem, size = 0x9000, scoped, tag = 'input window, operand 4, single buffered']
    #allocation8 [shape = 'u8[512]{0}', space=vmem, size = 0x400, scoped, tag = 'input window, operand 5, single buffered']
    #allocation9 [shape = 's32[1]{0}', space=sflag, size = 0x4, scoped, tag = 'scoped memory for tpu_custom_call.1']
    #allocation10 [shape = 'u8[512]{0}', space=vmem, size = 0x400, scoped, tag = 'input window, operand 6, single buffered']
    #allocation11 [shape = 'u8[512]{0}', space=vmem, size = 0x400, scoped, tag = 'input window, operand 7, single buffered']
    #allocation12 [shape = 's32[1]{0}', space=sflag, size = 0x4, scoped, tag = 'scoped memory for tpu_custom_call.1']
    #allocation13 [shape = 'u8[512]{0}', space=vmem, size = 0x400, scoped, tag = 'input window, operand 8, single buffered']
    #allocation14 [shape = 'u8[73728]{0}', space=vmem, size = 0x12000, scoped, tag = 'input window, operand 9, single buffered']
    #allocation15 [shape = 's32[1]{0}', space=sflag, size = 0x4, scoped, tag = 'scoped memory for tpu_custom_call.1']
    #allocation16 [shape = 'u8[221184]{0}', space=vmem, size = 0x36000, scoped, tag = 'input window, operand 14, single buffered']
    #allocation17 [shape = 'u8[573440]{0}', space=vmem, size = 0x8c000, scoped, tag = 'input window, operand 19, single buffered']
    #allocation18 [shape = 's32[1]{0}', space=sflag, size = 0x4, scoped, tag = 'scoped memory for tpu_custom_call.1']
    #allocation19 [shape = 'u8[262144]{0}', space=vmem, size = 0x40000, scoped, tag = 'input window, operand 23, single buffered']
    #allocation20 [shape = 'u8[1024]{0}', space=vmem, size = 0x400, scoped, tag = 'output window, operand 0, single buffered']
    %30 = vsyncpa [#allocation3], 0
    %31 = vsyncpa [#allocation6], 0
    %32 = vsyncpa [#allocation9], 0
    %33 = vsyncpa [#allocation12], 0
    %34 = vsyncpa [#allocation15], 0
    %35 = vsyncpa [#allocation18], 0
    %36 = vsyncpa [#allocation4], 0
    // Predicated region
    $region2: #{tpu_custom_call.1} parent=1 // pred_check
      _
    $region3: #{tpu_custom_call.1} parent=1 // pred_check_branch
      %38 = sbr.rel (0) target = $region5
    $region4: #{tpu_custom_call.1} parent=1 // pred_region
      _
    $region5: #{tpu_custom_call.1} parent=1 // pred_fallthru
      _
    // Predicated region
    $region6: #{tpu_custom_call.1} parent=1 // pred_check
      _
    $region7: #{tpu_custom_call.1} parent=1 // pred_check_branch
      %40 = sbr.rel (0) target = $region9
    $region8: #{tpu_custom_call.1} parent=1 // pred_region
      %s42 = ssub.s32 256, 256
      %43 = vsyncadd [#allocation3], %s42
      %s44 = sshll.u32 [#allocation2], 4
      %s45 = int_to_ptr.vmem [resolvable:$true] %s44
      %50 = dma.hbm_to_vmem [thread:$0]  %s1, 256, %s45, [#allocation3], 128, 128, 8
    $region9: #{tpu_custom_call.1} parent=1 // pred_fallthru
      _
    // Predicated region
    $region10: #{tpu_custom_call.1} parent=1 // pred_check
      _
    $region11: #{tpu_custom_call.1} parent=1 // pred_check_branch
      %52 = sbr.rel (0) target = $region13
    $region12: #{tpu_custom_call.1} parent=1 // pred_region
      %s54 = ssub.s32 32, 32
      %55 = vsyncadd [#allocation6], %s54
      %s57 = sshll.u32 [#allocation5], 4
      %s58 = int_to_ptr.vmem [resolvable:$true] %s57
      %60 = dma.hbm_to_vmem [thread:$0]  %s2, 32, %s58, [#allocation6]
    $region13: #{tpu_custom_call.1} parent=1 // pred_fallthru
      _
    // Predicated region
    $region14: #{tpu_custom_call.1} parent=1 // pred_check
      _
    $region15: #{tpu_custom_call.1} parent=1 // pred_check_branch
      %62 = sbr.rel (0) target = $region17
    $region16: #{tpu_custom_call.1} parent=1 // pred_region
      _
    $region17: #{tpu_custom_call.1} parent=1 // pred_fallthru
      _
    // Predicated region
    $region18: #{tpu_custom_call.1} parent=1 // pred_check
      _
    $region19: #{tpu_custom_call.1} parent=1 // pred_check_branch
      %64 = sbr.rel (0) target = $region21
    $region20: #{tpu_custom_call.1} parent=1 // pred_region
      %s66 = ssub.s32 1152, 1152
      %67 = vsyncadd [#allocation6], %s66
      %s68 = sshll.u32 [#allocation7], 4
      %s69 = int_to_ptr.vmem [resolvable:$true] %s68
      %74 = dma.hbm_to_vmem [thread:$0]  %s4, 1152, %s69, [#allocation6], 128, 128, 8
    $region21: #{tpu_custom_call.1} parent=1 // pred_fallthru
      _
    // Predicated region
    $region22: #{tpu_custom_call.1} parent=1 // pred_check
      _
    $region23: #{tpu_custom_call.1} parent=1 // pred_check_branch
      %76 = sbr.rel (0) target = $region25
    $region24: #{tpu_custom_call.1} parent=1 // pred_region
      %s78 = ssub.s32 16, 16
      %79 = vsyncadd [#allocation9], %s78
      %s81 = sshll.u32 [#allocation8], 4
      %s82 = int_to_ptr.vmem [resolvable:$true] %s81
      %84 = dma.hbm_to_vmem [thread:$0]  %s5, 16, %s82, [#allocation9]
    $region25: #{tpu_custom_call.1} parent=1 // pred_fallthru
      _
    // Predicated region
    $region26: #{tpu_custom_call.1} parent=1 // pred_check
      _
    $region27: #{tpu_custom_call.1} parent=1 // pred_check_branch
      %86 = sbr.rel (0) target = $region29
    $region28: #{tpu_custom_call.1} parent=1 // pred_region
      %s88 = ssub.s32 16, 16
      %89 = vsyncadd [#allocation9], %s88
      %s91 = sshll.u32 [#allocation10], 4
      %s92 = int_to_ptr.vmem [resolvable:$true] %s91
      %94 = dma.hbm_to_vmem [thread:$0]  %s6, 16, %s92, [#allocation9]
    $region29: #{tpu_custom_call.1} parent=1 // pred_fallthru
      _
    // Predicated region
    $region30: #{tpu_custom_call.1} parent=1 // pred_check
      _
    $region31: #{tpu_custom_call.1} parent=1 // pred_check_branch
      %96 = sbr.rel (0) target = $region33
    $region32: #{tpu_custom_call.1} parent=1 // pred_region
      %s98 = ssub.s32 16, 16
      %99 = vsyncadd [#allocation12], %s98
      %s101 = sshll.u32 [#allocation11], 4
      %s102 = int_to_ptr.vmem [resolvable:$true] %s101
      %104 = dma.hbm_to_vmem [thread:$0]  %s7, 16, %s102, [#allocation12]
    $region33: #{tpu_custom_call.1} parent=1 // pred_fallthru
      _
    // Predicated region
    $region34: #{tpu_custom_call.1} parent=1 // pred_check
      _
    $region35: #{tpu_custom_call.1} parent=1 // pred_check_branch
      %106 = sbr.rel (0) target = $region37
    $region36: #{tpu_custom_call.1} parent=1 // pred_region
      %s108 = ssub.s32 16, 16
      %109 = vsyncadd [#allocation12], %s108
      %s111 = sshll.u32 [#allocation13], 4
      %s112 = int_to_ptr.vmem [resolvable:$true] %s111
      %114 = dma.hbm_to_vmem [thread:$0]  %s8, 16, %s112, [#allocation12]
    $region37: #{tpu_custom_call.1} parent=1 // pred_fallthru
      _
    // Predicated region
    $region38: #{tpu_custom_call.1} parent=1 // pred_check
      _
    $region39: #{tpu_custom_call.1} parent=1 // pred_check_branch
      %116 = sbr.rel (0) target = $region41
    $region40: #{tpu_custom_call.1} parent=1 // pred_region
      %s118 = ssub.s32 2304, 2304
      %119 = vsyncadd [#allocation15], %s118
      %s120 = sshll.u32 [#allocation14], 4
      %s121 = int_to_ptr.vmem [resolvable:$true] %s120
      %126 = dma.hbm_to_vmem [thread:$0]  %s9, 2304, %s121, [#allocation15], 256, 256, 16
    $region41: #{tpu_custom_call.1} parent=1 // pred_fallthru
      _
    // Predicated region
    $region42: #{tpu_custom_call.1} parent=1 // pred_check
      _
    $region43: #{tpu_custom_call.1} parent=1 // pred_check_branch
      %128 = sbr.rel (0) target = $region45
    $region44: #{tpu_custom_call.1} parent=1 // pred_region
      _
    $region45: #{tpu_custom_call.1} parent=1 // pred_fallthru
      _
    // Predicated region
    $region46: #{tpu_custom_call.1} parent=1 // pred_check
      _
    $region47: #{tpu_custom_call.1} parent=1 // pred_check_branch
      %130 = sbr.rel (0) target = $region49
    $region48: #{tpu_custom_call.1} parent=1 // pred_region
      _
    $region49: #{tpu_custom_call.1} parent=1 // pred_fallthru
      _
    // Predicated region
    $region50: #{tpu_custom_call.1} parent=1 // pred_check
      _
    $region51: #{tpu_custom_call.1} parent=1 // pred_check_branch
      %132 = sbr.rel (0) target = $region53
    $region52: #{tpu_custom_call.1} parent=1 // pred_region
      _
    $region53: #{tpu_custom_call.1} parent=1 // pred_fallthru
      _
    // Predicated region
    $region54: #{tpu_custom_call.1} parent=1 // pred_check
      _
    $region55: #{tpu_custom_call.1} parent=1 // pred_check_branch
      %134 = sbr.rel (0) target = $region57
    $region56: #{tpu_custom_call.1} parent=1 // pred_region
      _
    $region57: #{tpu_custom_call.1} parent=1 // pred_fallthru
      _
    // Predicated region
    $region58: #{tpu_custom_call.1} parent=1 // pred_check
      _
    $region59: #{tpu_custom_call.1} parent=1 // pred_check_branch
      %136 = sbr.rel (0) target = $region61
    $region60: #{tpu_custom_call.1} parent=1 // pred_region
      %s138 = ssub.s32 6912, 6912
      %139 = vsyncadd [#allocation15], %s138
      %s140 = sshll.u32 [#allocation16], 4
      %s141 = int_to_ptr.vmem [resolvable:$true] %s140
      %146 = dma.hbm_to_vmem [thread:$0]  %s14, 6912, %s141, [#allocation15], 384, 384, 24
    $region61: #{tpu_custom_call.1} parent=1 // pred_fallthru
      _
    // Predicated region
    $region62: #{tpu_custom_call.1} parent=1 // pred_check
      _
    $region63: #{tpu_custom_call.1} parent=1 // pred_check_branch
      %148 = sbr.rel (0) target = $region65
    $region64: #{tpu_custom_call.1} parent=1 // pred_region
      _
    $region65: #{tpu_custom_call.1} parent=1 // pred_fallthru
      _
    // Predicated region
    $region66: #{tpu_custom_call.1} parent=1 // pred_check
      _
    $region67: #{tpu_custom_call.1} parent=1 // pred_check_branch
      %150 = sbr.rel (0) target = $region69
    $region68: #{tpu_custom_call.1} parent=1 // pred_region
      _
    $region69: #{tpu_custom_call.1} parent=1 // pred_fallthru
      _
    // Predicated region
    $region70: #{tpu_custom_call.1} parent=1 // pred_check
      _
    $region71: #{tpu_custom_call.1} parent=1 // pred_check_branch
      %152 = sbr.rel (0) target = $region73
    $region72: #{tpu_custom_call.1} parent=1 // pred_region
      _
    $region73: #{tpu_custom_call.1} parent=1 // pred_fallthru
      _
    // Predicated region
    $region74: #{tpu_custom_call.1} parent=1 // pred_check
      _
    $region75: #{tpu_custom_call.1} parent=1 // pred_check_branch
      %154 = sbr.rel (0) target = $region77
    $region76: #{tpu_custom_call.1} parent=1 // pred_region
      _
    $region77: #{tpu_custom_call.1} parent=1 // pred_fallthru
      _
    // Predicated region
    $region78: #{tpu_custom_call.1} parent=1 // pred_check
      _
    $region79: #{tpu_custom_call.1} parent=1 // pred_check_branch
      %156 = sbr.rel (0) target = $region81
    $region80: #{tpu_custom_call.1} parent=1 // pred_region
      %s158 = ssub.s32 17920, 17920
      %159 = vsyncadd [#allocation18], %s158
      %s160 = sshll.u32 [#allocation17], 4
      %s161 = int_to_ptr.vmem [resolvable:$true] %s160
      %166 = dma.hbm_to_vmem [thread:$0]  %s19, 17920, %s161, [#allocation18], 512, 512, 32
    $region81: #{tpu_custom_call.1} parent=1 // pred_fallthru
      _
    // Predicated region
    $region82: #{tpu_custom_call.1} parent=1 // pred_check
      _
    $region83: #{tpu_custom_call.1} parent=1 // pred_check_branch
      %168 = sbr.rel (0) target = $region85
    $region84: #{tpu_custom_call.1} parent=1 // pred_region
      _
    $region85: #{tpu_custom_call.1} parent=1 // pred_fallthru
      _
    // Predicated region
    $region86: #{tpu_custom_call.1} parent=1 // pred_check
      _
    $region87: #{tpu_custom_call.1} parent=1 // pred_check_branch
      %170 = sbr.rel (0) target = $region89
    $region88: #{tpu_custom_call.1} parent=1 // pred_region
      _
    $region89: #{tpu_custom_call.1} parent=1 // pred_fallthru
      _
    // Predicated region
    $region90: #{tpu_custom_call.1} parent=1 // pred_check
      _
    $region91: #{tpu_custom_call.1} parent=1 // pred_check_branch
      %172 = sbr.rel (0) target = $region93
    $region92: #{tpu_custom_call.1} parent=1 // pred_region
      _
    $region93: #{tpu_custom_call.1} parent=1 // pred_fallthru
      _
    // Predicated region
    $region94: #{tpu_custom_call.1} parent=1 // pred_check
      _
    $region95: #{tpu_custom_call.1} parent=1 // pred_check_branch
      %174 = sbr.rel (0) target = $region97
    $region96: #{tpu_custom_call.1} parent=1 // pred_region
      %s176 = ssub.s32 8192, 8192
      %177 = vsyncadd [#allocation18], %s176
      %s178 = sshll.u32 [#allocation19], 4
      %s179 = int_to_ptr.vmem [resolvable:$true] %s178
      %184 = dma.hbm_to_vmem [thread:$0]  %s23, 8192, %s179, [#allocation18], 64, 64, 4
    $region97: #{tpu_custom_call.1} parent=1 // pred_fallthru
      _
    // Predicated region
    $region98: #{tpu_custom_call.1} parent=1 // pred_check
      _
    $region99: #{tpu_custom_call.1} parent=1 // pred_check_branch
      %186 = sbr.rel (0) target = $region101
    $region100: #{tpu_custom_call.1} parent=1 // pred_region
      _
    $region101: #{tpu_custom_call.1} parent=1 // pred_fallthru
      _
    // Predicated region
    $region102: #{tpu_custom_call.1} parent=1 // pred_check
      _
    $region103: #{tpu_custom_call.1} parent=1 // pred_check_branch
      %188 = sbr.rel (0) target = $region105
    $region104: #{tpu_custom_call.1} parent=1 // pred_region
      %189 = dma.done [#allocation3], 256
    $region105: #{tpu_custom_call.1} parent=1 // pred_fallthru
      _
    // Predicated region
    $region106: #{tpu_custom_call.1} parent=1 // pred_check
      _
    $region107: #{tpu_custom_call.1} parent=1 // pred_check_branch
      %191 = sbr.rel (0) target = $region109
    $region108: #{tpu_custom_call.1} parent=1 // pred_region
      %192 = dma.done [#allocation6], 32
    $region109: #{tpu_custom_call.1} parent=1 // pred_fallthru
      _
    // Predicated region
    $region110: #{tpu_custom_call.1} parent=1 // pred_check
      _
    $region111: #{tpu_custom_call.1} parent=1 // pred_check_branch
      %194 = sbr.rel (0) target = $region113
    $region112: #{tpu_custom_call.1} parent=1 // pred_region
      %195 = dma.done [#allocation6], 1152
    $region113: #{tpu_custom_call.1} parent=1 // pred_fallthru
      _
    // Predicated region
    $region114: #{tpu_custom_call.1} parent=1 // pred_check
      _
    $region115: #{tpu_custom_call.1} parent=1 // pred_check_branch
      %197 = sbr.rel (0) target = $region117
    $region116: #{tpu_custom_call.1} parent=1 // pred_region
      %198 = dma.done [#allocation9], 16
    $region117: #{tpu_custom_call.1} parent=1 // pred_fallthru
      _
    // Predicated region
    $region118: #{tpu_custom_call.1} parent=1 // pred_check
      _
    $region119: #{tpu_custom_call.1} parent=1 // pred_check_branch
      %200 = sbr.rel (0) target = $region121
    $region120: #{tpu_custom_call.1} parent=1 // pred_region
      %201 = dma.done [#allocation9], 16
    $region121: #{tpu_custom_call.1} parent=1 // pred_fallthru
      _
    // Predicated region
    $region122: #{tpu_custom_call.1} parent=1 // pred_check
      _
    $region123: #{tpu_custom_call.1} parent=1 // pred_check_branch
      %203 = sbr.rel (0) target = $region125
    $region124: #{tpu_custom_call.1} parent=1 // pred_region
      %204 = dma.done [#allocation12], 16
    $region125: #{tpu_custom_call.1} parent=1 // pred_fallthru
      _
    // Predicated region
    $region126: #{tpu_custom_call.1} parent=1 // pred_check
      _
    $region127: #{tpu_custom_call.1} parent=1 // pred_check_branch
      %206 = sbr.rel (0) target = $region129
    $region128: #{tpu_custom_call.1} parent=1 // pred_region
      %207 = dma.done [#allocation12], 16
    $region129: #{tpu_custom_call.1} parent=1 // pred_fallthru
      _
    // Predicated region
    $region130: #{tpu_custom_call.1} parent=1 // pred_check
      _
    $region131: #{tpu_custom_call.1} parent=1 // pred_check_branch
      %209 = sbr.rel (0) target = $region133
    $region132: #{tpu_custom_call.1} parent=1 // pred_region
      %210 = dma.done [#allocation15], 2304
    $region133: #{tpu_custom_call.1} parent=1 // pred_fallthru
      _
    // Predicated region
    $region134: #{tpu_custom_call.1} parent=1 // pred_check
      _
    $region135: #{tpu_custom_call.1} parent=1 // pred_check_branch
      %212 = sbr.rel (0) target = $region137
    $region136: #{tpu_custom_call.1} parent=1 // pred_region
      %213 = dma.done [#allocation15], 6912
    $region137: #{tpu_custom_call.1} parent=1 // pred_fallthru
      _
    // Predicated region
    $region138: #{tpu_custom_call.1} parent=1 // pred_check
      _
    $region139: #{tpu_custom_call.1} parent=1 // pred_check_branch
      %215 = sbr.rel (0) target = $region141
    $region140: #{tpu_custom_call.1} parent=1 // pred_region
      %216 = dma.done [#allocation18], 17920
    $region141: #{tpu_custom_call.1} parent=1 // pred_fallthru
      _
    // Predicated region
    $region142: #{tpu_custom_call.1} parent=1 // pred_check
      _
    $region143: #{tpu_custom_call.1} parent=1 // pred_check_branch
      %218 = sbr.rel (0) target = $region145
    $region144: #{tpu_custom_call.1} parent=1 // pred_region
      %219 = dma.done [#allocation18], 8192
    $region145: #{tpu_custom_call.1} parent=1 // pred_fallthru
      _
    %v221 = vld [vmem:[%s0] sm:$0xff]
    %v222 = vld [vmem:[%s0 + $0x8] sm:$0xff]
    %v223 = vld [vmem:[#allocation5] sm:$0x3]
    %v224 = vld [vmem:[%s3] sm:$0xff]
    %v225 = vld [vmem:[%s3 + $0x8] sm:$0xff]
    %v226 = vld [vmem:[#allocation2] sm:$0xff]
    %v227 = vld [vmem:[#allocation2 + $0x8] sm:$0xff]
    %v228 = vld [vmem:[#allocation7] sm:$0xff]
    %v229 = vld [vmem:[#allocation7 + $0x8] sm:$0xff]
    %v230 = vld [vmem:[#allocation7 + $0x10] sm:$0xff]
    %v231 = vld [vmem:[#allocation7 + $0x18] sm:$0xff]
    %v232 = vld [vmem:[#allocation7 + $0x20] sm:$0xff]
    %v233 = vld [vmem:[#allocation7 + $0x28] sm:$0xff]
    %v234 = vld [vmem:[#allocation7 + $0x30] sm:$0xff]
    %v235 = vld [vmem:[#allocation7 + $0x38] sm:$0xff]
    %v236 = vld [vmem:[#allocation7 + $0x40] sm:$0x1f]
    %vm237 = vcmask 564224
    %v239 = vsel %vm237, %v226, 0
    %v242 = vsel %vm237, %v227, 0
    %vm244 = vcmask 1044480
    %v246 = vsel %vm244, %v236, 0
    %248 = vmatprep.subr.mxu0 0.0
    %249 = vmatpush1.msra.mxu0 %v228
    %250 = vmatprep.subr.mxu0 0.0
    %251 = vmatpush1.msra.mxu0 %v229
    %252 = vmatprep.subr.mxu0 0.0
    %253 = vmatpush1.msra.mxu0 %v230
    %254 = vmatprep.subr.mxu0 0.0
    %255 = vmatpush1.msra.mxu0 %v231
    %256 = vmatprep.subr.mxu0 0.0
    %257 = vmatpush1.msra.mxu0 %v232
    %258 = vmatprep.subr.mxu0 0.0
    %259 = vmatpush1.msra.mxu0 %v233
    %260 = vmatprep.subr.mxu0 0.0
    %261 = vmatpush1.msra.mxu0 %v234
    %262 = vmatprep.subr.mxu0 0.0
    %263 = vmatpush1.msra.mxu0 %v235
    %264 = vmatprep.subr.mxu0 0.0
    %265 = vmatpush1.msra.mxu0 %v246
    %266 = vmatprep.subr.mxu0 0.0
    %267 = vmatpush1.msra.mxu0 0.0
    %268 = vmatprep.subr.mxu0 0.0
    %269 = vmatpush1.msra.mxu0 0.0
    %270 = vmatprep.subr.mxu0 0.0
    %271 = vmatpush1.msra.mxu0 0.0
    %272 = vmatprep.subr.mxu0 0.0
    %273 = vmatpush1.msra.mxu0 0.0
    %274 = vmatprep.subr.mxu0 0.0
    %275 = vmatpush1.msra.mxu0 0.0
    %276 = vmatprep.subr.mxu0 0.0
    %277 = vmatpush1.msra.mxu0 0.0
    %278 = vmatprep.subr.mxu0 0.0
    %279 = vmatpush1.msra.mxu0 0.0
    %280 = vmatprep.subr.mxu0 0.0
    %281 = vmatpush1.msra.mxu0 0.0
    %282 = vmatprep.subr.mxu0 0.0
    %283 = vmatpush1.msra.mxu0 0.0
    %284 = vmatprep.subr.mxu0 0.0
    %285 = vmatpush1.msra.mxu0 0.0
    %286 = vmatprep.subr.mxu0 0.0
    %287 = vmatpush1.msra.mxu0 0.0
    %288 = vmatprep.subr.mxu0 0.0
    %289 = vmatpush1.msra.mxu0 0.0
    %290 = vmatprep.subr.mxu0 0.0
    %291 = vmatpush1.msra.mxu0 0.0
    %292 = vmatprep.subr.mxu0 0.0
    %293 = vmatpush1.msra.mxu0 0.0
    %294 = vmatprep.subr.mxu0 0.0
    %295 = vmatpush1.msra.mxu0 0.0
    %296 = vmatprep.subr.mxu0 0.0
    %297 = vmatpush1.msra.mxu0 0.0
    %298 = vmatprep.subr.mxu0 0.0
    %299 = vmatpush1.msra.mxu0 0.0
    %300 = vmatprep.subr.mxu0 0.0
    %301 = vmatpush1.msra.mxu0 0.0
    %302 = vmatprep.subr.mxu0 0.0
    %303 = vmatpush1.msra.mxu0 0.0
    %304 = vmatprep.subr.mxu0 0.0
    %305 = vmatpush1.msra.mxu0 0.0
    %306 = vmatprep.subr.mxu0 0.0
    %307 = vmatpush1.msra.mxu0 0.0
    %308 = vmatprep.subr.mxu0 0.0
    %309 = vmatpush1.msra.mxu0 0.0
    %310 = vmatprep.subr.mxu0 0.0
    %311 = vmatpush1.msra.mxu0 0.0
    %312 = vmatprep.mubr.f32.mxu0 0.0
    %313 = vmatmul.mubr.f32.gmra.mrb[0].mxu0 %v239
    %v314 = vpop.f32.mrb[0].mxu0
    %v315 = vadd.f32 0.0, %v314
    %v316 = vpop.f32.mrb[0].mxu0
    %317 = vmatprep.mubr.f32.mxu0 0.0
    %318 = vmatmul.mubr.f32.gmra.mrb[0].mxu0 %v242
    %v319 = vpop.f32.mrb[0].mxu0
    %v320 = vadd.f32 0.0, %v319
    %v321 = vpop.f32.mrb[0].mxu0
    %322 = vdwg.mxu0
    %v323 = vld [vmem:[#allocation8] sm:$0x1]
    %v325 = vlaneseq
    %v326 = vshrl.u32 %v325, 7
    %v327 = vsub.s32 0, %v326
    %v328 = vrot.slane %v323, %v327
    %vm330 = vcmask 130048
    %v332 = vsel %vm330, %v221, 0
    %v335 = vsel %vm330, %v222, 0
    %337 = vmatprep.subr.mxu0 0.0
    %338 = vmatpush1.msra.mxu0 %v315
    %339 = vmatprep.subr.mxu0 0.0
    %340 = vmatpush1.msra.mxu0 %v320
    %341 = vmatprep.subr.mxu0 0.0
    %342 = vmatpush1.msra.mxu0 0.0
    %343 = vmatprep.subr.mxu0 0.0
    %344 = vmatpush1.msra.mxu0 0.0
    %345 = vmatprep.subr.mxu0 0.0
    %346 = vmatpush1.msra.mxu0 0.0
    %347 = vmatprep.subr.mxu0 0.0
    %348 = vmatpush1.msra.mxu0 0.0
    %349 = vmatprep.subr.mxu0 0.0
    %350 = vmatpush1.msra.mxu0 0.0
    %351 = vmatprep.subr.mxu0 0.0
    %352 = vmatpush1.msra.mxu0 0.0
    %353 = vmatprep.subr.mxu0 0.0
    %354 = vmatpush1.msra.mxu0 0.0
    %355 = vmatprep.subr.mxu0 0.0
    %356 = vmatpush1.msra.mxu0 0.0
    %357 = vmatprep.subr.mxu0 0.0
    %358 = vmatpush1.msra.mxu0 0.0
    %359 = vmatprep.subr.mxu0 0.0
    %360 = vmatpush1.msra.mxu0 0.0
    %361 = vmatprep.subr.mxu0 0.0
    %362 = vmatpush1.msra.mxu0 0.0
    %363 = vmatprep.subr.mxu0 0.0
    %364 = vmatpush1.msra.mxu0 0.0
    %365 = vmatprep.subr.mxu0 0.0
    %366 = vmatpush1.msra.mxu0 0.0
    %367 = vmatprep.subr.mxu0 0.0
    %368 = vmatpush1.msra.mxu0 0.0
    %369 = vmatprep.subr.mxu0 0.0
    %370 = vmatpush1.msra.mxu0 0.0
    %371 = vmatprep.subr.mxu0 0.0
    %372 = vmatpush1.msra.mxu0 0.0
    %373 = vmatprep.subr.mxu0 0.0
    %374 = vmatpush1.msra.mxu0 0.0
    %375 = vmatprep.subr.mxu0 0.0
    %376 = vmatpush1.msra.mxu0 0.0
    %377 = vmatprep.subr.mxu0 0.0
    %378 = vmatpush1.msra.mxu0 0.0
    %379 = vmatprep.subr.mxu0 0.0
    %380 = vmatpush1.msra.mxu0 0.0
    %381 = vmatprep.subr.mxu0 0.0
    %382 = vmatpush1.msra.mxu0 0.0
    %383 = vmatprep.subr.mxu0 0.0
    %384 = vmatpush1.msra.mxu0 0.0
    %385 = vmatprep.subr.mxu0 0.0
    %386 = vmatpush1.msra.mxu0 0.0
    %387 = vmatprep.subr.mxu0 0.0
    %388 = vmatpush1.msra.mxu0 0.0
    %389 = vmatprep.subr.mxu0 0.0
    %390 = vmatpush1.msra.mxu0 0.0
    %391 = vmatprep.subr.mxu0 0.0
    %392 = vmatpush1.msra.mxu0 0.0
    %393 = vmatprep.subr.mxu0 0.0
    %394 = vmatpush1.msra.mxu0 0.0
    %395 = vmatprep.subr.mxu0 0.0
    %396 = vmatpush1.msra.mxu0 0.0
    %397 = vmatprep.subr.mxu0 0.0
    %398 = vmatpush1.msra.mxu0 0.0
    %399 = vmatprep.subr.mxu0 0.0
    %400 = vmatpush1.msra.mxu0 0.0
    %401 = vmatprep.mubr.f32.mxu0 0.0
    %402 = vmatmul.mubr.f32.gmra.mrb[0].mxu0 %v332
    %v403 = vpop.f32.mrb[0].mxu0
    %v404 = vadd.f32 %v328, %v403
    %v405 = vpop.f32.mrb[0].mxu0
    %406 = vmatprep.mubr.f32.mxu0 0.0
    %407 = vmatmul.mubr.f32.gmra.mrb[0].mxu0 %v335
    %v408 = vpop.f32.mrb[0].mxu0
    %v409 = vadd.f32 %v328, %v408
    %v410 = vpop.f32.mrb[0].mxu0
    %411 = vdwg.mxu0
    %v413 = vsel %vm330, %v223, 0
    %415 = vmatprep.subr.mxu0 0.0
    %416 = vmatpush1.msra.mxu0 %v404
    %417 = vmatprep.subr.mxu0 0.0
    %418 = vmatpush1.msra.mxu0 %v409
    %419 = vmatprep.subr.mxu0 0.0
    %420 = vmatpush1.msra.mxu0 0.0
    %421 = vmatprep.subr.mxu0 0.0
    %422 = vmatpush1.msra.mxu0 0.0
    %423 = vmatprep.subr.mxu0 0.0
    %424 = vmatpush1.msra.mxu0 0.0
    %425 = vmatprep.subr.mxu0 0.0
    %426 = vmatpush1.msra.mxu0 0.0
    %427 = vmatprep.subr.mxu0 0.0
    %428 = vmatpush1.msra.mxu0 0.0
    %429 = vmatprep.subr.mxu0 0.0
    %430 = vmatpush1.msra.mxu0 0.0
    %431 = vmatprep.subr.mxu0 0.0
    %432 = vmatpush1.msra.mxu0 0.0
    %433 = vmatprep.subr.mxu0 0.0
    %434 = vmatpush1.msra.mxu0 0.0
    %435 = vmatprep.subr.mxu0 0.0
    %436 = vmatpush1.msra.mxu0 0.0
    %437 = vmatprep.subr.mxu0 0.0
    %438 = vmatpush1.msra.mxu0 0.0
    %439 = vmatprep.subr.mxu0 0.0
    %440 = vmatpush1.msra.mxu0 0.0
    %441 = vmatprep.subr.mxu0 0.0
    %442 = vmatpush1.msra.mxu0 0.0
    %443 = vmatprep.subr.mxu0 0.0
    %444 = vmatpush1.msra.mxu0 0.0
    %445 = vmatprep.subr.mxu0 0.0
    %446 = vmatpush1.msra.mxu0 0.0
    %447 = vmatprep.subr.mxu0 0.0
    %448 = vmatpush1.msra.mxu0 0.0
    %449 = vmatprep.subr.mxu0 0.0
    %450 = vmatpush1.msra.mxu0 0.0
    %451 = vmatprep.subr.mxu0 0.0
    %452 = vmatpush1.msra.mxu0 0.0
    %453 = vmatprep.subr.mxu0 0.0
    %454 = vmatpush1.msra.mxu0 0.0
    %455 = vmatprep.subr.mxu0 0.0
    %456 = vmatpush1.msra.mxu0 0.0
    %457 = vmatprep.subr.mxu0 0.0
    %458 = vmatpush1.msra.mxu0 0.0
    %459 = vmatprep.subr.mxu0 0.0
    %460 = vmatpush1.msra.mxu0 0.0
    %461 = vmatprep.subr.mxu0 0.0
    %462 = vmatpush1.msra.mxu0 0.0
    %463 = vmatprep.subr.mxu0 0.0
    %464 = vmatpush1.msra.mxu0 0.0
    %465 = vmatprep.subr.mxu0 0.0
    %466 = vmatpush1.msra.mxu0 0.0
    %467 = vmatprep.subr.mxu0 0.0
    %468 = vmatpush1.msra.mxu0 0.0
    %469 = vmatprep.subr.mxu0 0.0
    %470 = vmatpush1.msra.mxu0 0.0
    %471 = vmatprep.subr.mxu0 0.0
    %472 = vmatpush1.msra.mxu0 0.0
    %473 = vmatprep.subr.mxu0 0.0
    %474 = vmatpush1.msra.mxu0 0.0
    %475 = vmatprep.subr.mxu0 0.0
    %476 = vmatpush1.msra.mxu0 0.0
    %477 = vmatprep.subr.mxu0 0.0
    %478 = vmatpush1.msra.mxu0 0.0
    %479 = vmatprep.mubr.f32.mxu0 0.0
    %480 = vmatmul.mubr.f32.gmra.mrb[0].mxu0 %v413
    %v481 = vpop.f32.mrb[0].mxu0
    %v482 = vadd.f32 0.0, %v481
    %v483 = vpop.f32.mrb[0].mxu0
    %484 = vdwg.mxu0
    %vm485 = vcmask 15360
    %v487 = vsel %vm485, %v224, 0
    %v490 = vsel %vm485, %v225, 0
    %vm492 = vcmask 1041408
    %v494 = vsel %vm492, %v482, 0
    %496 = vmatprep.subr.mxu0 0.0
    %497 = vmatpush1.msra.mxu0 %v494
    %498 = vmatprep.subr.mxu0 0.0
    %499 = vmatpush1.msra.mxu0 0.0
    %500 = vmatprep.subr.mxu0 0.0
    %501 = vmatpush1.msra.mxu0 0.0
    %502 = vmatprep.subr.mxu0 0.0
    %503 = vmatpush1.msra.mxu0 0.0
    %504 = vmatprep.subr.mxu0 0.0
    %505 = vmatpush1.msra.mxu0 0.0
    %506 = vmatprep.subr.mxu0 0.0
    %507 = vmatpush1.msra.mxu0 0.0
    %508 = vmatprep.subr.mxu0 0.0
    %509 = vmatpush1.msra.mxu0 0.0
    %510 = vmatprep.subr.mxu0 0.0
    %511 = vmatpush1.msra.mxu0 0.0
    %512 = vmatprep.subr.mxu0 0.0
    %513 = vmatpush1.msra.mxu0 0.0
    %514 = vmatprep.subr.mxu0 0.0
    %515 = vmatpush1.msra.mxu0 0.0
    %516 = vmatprep.subr.mxu0 0.0
    %517 = vmatpush1.msra.mxu0 0.0
    %518 = vmatprep.subr.mxu0 0.0
    %519 = vmatpush1.msra.mxu0 0.0
    %520 = vmatprep.subr.mxu0 0.0
    %521 = vmatpush1.msra.mxu0 0.0
    %522 = vmatprep.subr.mxu0 0.0
    %523 = vmatpush1.msra.mxu0 0.0
    %524 = vmatprep.subr.mxu0 0.0
    %525 = vmatpush1.msra.mxu0 0.0
    %526 = vmatprep.subr.mxu0 0.0
    %527 = vmatpush1.msra.mxu0 0.0
    %528 = vmatprep.subr.mxu0 0.0
    %529 = vmatpush1.msra.mxu0 0.0
    %530 = vmatprep.subr.mxu0 0.0
    %531 = vmatpush1.msra.mxu0 0.0
    %532 = vmatprep.subr.mxu0 0.0
    %533 = vmatpush1.msra.mxu0 0.0
    %534 = vmatprep.subr.mxu0 0.0
    %535 = vmatpush1.msra.mxu0 0.0
    %536 = vmatprep.subr.mxu0 0.0
    %537 = vmatpush1.msra.mxu0 0.0
    %538 = vmatprep.subr.mxu0 0.0
    %539 = vmatpush1.msra.mxu0 0.0
    %540 = vmatprep.subr.mxu0 0.0
    %541 = vmatpush1.msra.mxu0 0.0
    %542 = vmatprep.subr.mxu0 0.0
    %543 = vmatpush1.msra.mxu0 0.0
    %544 = vmatprep.subr.mxu0 0.0
    %545 = vmatpush1.msra.mxu0 0.0
    %546 = vmatprep.subr.mxu0 0.0
    %547 = vmatpush1.msra.mxu0 0.0
    %548 = vmatprep.subr.mxu0 0.0
    %549 = vmatpush1.msra.mxu0 0.0
    %550 = vmatprep.subr.mxu0 0.0
    %551 = vmatpush1.msra.mxu0 0.0
    %552 = vmatprep.subr.mxu0 0.0
    %553 = vmatpush1.msra.mxu0 0.0
    %554 = vmatprep.subr.mxu0 0.0
    %555 = vmatpush1.msra.mxu0 0.0
    %556 = vmatprep.subr.mxu0 0.0
    %557 = vmatpush1.msra.mxu0 0.0
    %558 = vmatprep.subr.mxu0 0.0
    %559 = vmatpush1.msra.mxu0 0.0
    %560 = vmatprep.mubr.f32.mxu0 0.0
    %561 = vmatmul.mubr.f32.gmra.mrb[0].mxu0 %v487
    %v562 = vpop.f32.mrb[0].mxu0
    %v563 = vadd.f32 0.0, %v562
    %v564 = vpop.f32.mrb[0].mxu0
    %565 = vmatprep.mubr.f32.mxu0 0.0
    %566 = vmatmul.mubr.f32.gmra.mrb[0].mxu0 %v490
    %v567 = vpop.f32.mrb[0].mxu0
    %v568 = vadd.f32 0.0, %v567
    %v569 = vpop.f32.mrb[0].mxu0
    %570 = vdwg.mxu0
    %v571 = vld [vmem:[#allocation13] sm:$0x1]
    %v573 = vlaneseq
    %v574 = vshrl.u32 %v573, 7
    %v575 = vsub.s32 0, %v574
    %v576 = vrot.slane %v571, %v575
    %v578 = vmul.f32 %v563, %v576
    %v579 = vmul.f32 %v568, %v576
    %v580 = vsub.f32 %v404, %v578
    %v581 = vsub.f32 %v409, %v579
    %v582 = vmul.f32 %v580, %v580
    %v583 = vmul.f32 %v581, %v581
    %584 = vmatprep.subr.mxu0 0.0
    %585 = vmatpush1.msra.mxu0 %v582
    %586 = vmatprep.subr.mxu0 0.0
    %587 = vmatpush1.msra.mxu0 %v583
    %588 = vmatprep.subr.mxu0 0.0
    %589 = vmatpush1.msra.mxu0 0.0
    %590 = vmatprep.subr.mxu0 0.0
    %591 = vmatpush1.msra.mxu0 0.0
    %592 = vmatprep.subr.mxu0 0.0
    %593 = vmatpush1.msra.mxu0 0.0
    %594 = vmatprep.subr.mxu0 0.0
    %595 = vmatpush1.msra.mxu0 0.0
    %596 = vmatprep.subr.mxu0 0.0
    %597 = vmatpush1.msra.mxu0 0.0
    %598 = vmatprep.subr.mxu0 0.0
    %599 = vmatpush1.msra.mxu0 0.0
    %600 = vmatprep.subr.mxu0 0.0
    %601 = vmatpush1.msra.mxu0 0.0
    %602 = vmatprep.subr.mxu0 0.0
    %603 = vmatpush1.msra.mxu0 0.0
    %604 = vmatprep.subr.mxu0 0.0
    %605 = vmatpush1.msra.mxu0 0.0
    %606 = vmatprep.subr.mxu0 0.0
    %607 = vmatpush1.msra.mxu0 0.0
    %608 = vmatprep.subr.mxu0 0.0
    %609 = vmatpush1.msra.mxu0 0.0
    %610 = vmatprep.subr.mxu0 0.0
    %611 = vmatpush1.msra.mxu0 0.0
    %612 = vmatprep.subr.mxu0 0.0
    %613 = vmatpush1.msra.mxu0 0.0
    %614 = vmatprep.subr.mxu0 0.0
    %615 = vmatpush1.msra.mxu0 0.0
    %616 = vmatprep.subr.mxu0 0.0
    %617 = vmatpush1.msra.mxu0 0.0
    %618 = vmatprep.subr.mxu0 0.0
    %619 = vmatpush1.msra.mxu0 0.0
    %620 = vmatprep.subr.mxu0 0.0
    %621 = vmatpush1.msra.mxu0 0.0
    %622 = vmatprep.subr.mxu0 0.0
    %623 = vmatpush1.msra.mxu0 0.0
    %624 = vmatprep.subr.mxu0 0.0
    %625 = vmatpush1.msra.mxu0 0.0
    %626 = vmatprep.subr.mxu0 0.0
    %627 = vmatpush1.msra.mxu0 0.0
    %628 = vmatprep.subr.mxu0 0.0
    %629 = vmatpush1.msra.mxu0 0.0
    %630 = vmatprep.subr.mxu0 0.0
    %631 = vmatpush1.msra.mxu0 0.0
    %632 = vmatprep.subr.mxu0 0.0
    %633 = vmatpush1.msra.mxu0 0.0
    %634 = vmatprep.subr.mxu0 0.0
    %635 = vmatpush1.msra.mxu0 0.0
    %636 = vmatprep.subr.mxu0 0.0
    %637 = vmatpush1.msra.mxu0 0.0
    %638 = vmatprep.subr.mxu0 0.0
    %639 = vmatpush1.msra.mxu0 0.0
    %640 = vmatprep.subr.mxu0 0.0
    %641 = vmatpush1.msra.mxu0 0.0
    %642 = vmatprep.subr.mxu0 0.0
    %643 = vmatpush1.msra.mxu0 0.0
    %644 = vmatprep.subr.mxu0 0.0
    %645 = vmatpush1.msra.mxu0 0.0
    %646 = vmatprep.subr.mxu0 0.0
    %647 = vmatpush1.msra.mxu0 0.0
    %648 = vmatprep.mubr.f32.mxu0 0.0
    %649 = vmatmul.mubr.f32.gmra.mrb[0].mxu0 %v413
    %v650 = vpop.f32.mrb[0].mxu0
    %v651 = vadd.f32 1e-05, %v650
    %v652 = vpop.f32.mrb[0].mxu0
    %653 = vdwg.mxu0
    %v654 = vrsqrt.pop %v651
    %v655 = vld [vmem:[#allocation10] sm:$0x1]
    %v657 = vlaneseq
    %v658 = vshrl.u32 %v657, 7
    %v659 = vsub.s32 0, %v658
    %v660 = vrot.slane %v655, %v659
    %v662 = vmul.f32 %v660, %v580
    %v663 = vmul.f32 %v660, %v581
    %v665 = vsel %vm492, %v654, 0
    %667 = vmatprep.subr.mxu0 0.0
    %668 = vmatpush1.msra.mxu0 %v665
    %669 = vmatprep.subr.mxu0 0.0
    %670 = vmatpush1.msra.mxu0 0.0
    %671 = vmatprep.subr.mxu0 0.0
    %672 = vmatpush1.msra.mxu0 0.0
    %673 = vmatprep.subr.mxu0 0.0
    %674 = vmatpush1.msra.mxu0 0.0
    %675 = vmatprep.subr.mxu0 0.0
    %676 = vmatpush1.msra.mxu0 0.0
    %677 = vmatprep.subr.mxu0 0.0
    %678 = vmatpush1.msra.mxu0 0.0
    %679 = vmatprep.subr.mxu0 0.0
    %680 = vmatpush1.msra.mxu0 0.0
    %681 = vmatprep.subr.mxu0 0.0
    %682 = vmatpush1.msra.mxu0 0.0
    %683 = vmatprep.subr.mxu0 0.0
    %684 = vmatpush1.msra.mxu0 0.0
    %685 = vmatprep.subr.mxu0 0.0
    %686 = vmatpush1.msra.mxu0 0.0
    %687 = vmatprep.subr.mxu0 0.0
    %688 = vmatpush1.msra.mxu0 0.0
    %689 = vmatprep.subr.mxu0 0.0
    %690 = vmatpush1.msra.mxu0 0.0
    %691 = vmatprep.subr.mxu0 0.0
    %692 = vmatpush1.msra.mxu0 0.0
    %693 = vmatprep.subr.mxu0 0.0
    %694 = vmatpush1.msra.mxu0 0.0
    %695 = vmatprep.subr.mxu0 0.0
    %696 = vmatpush1.msra.mxu0 0.0
    %697 = vmatprep.subr.mxu0 0.0
    %698 = vmatpush1.msra.mxu0 0.0
    %699 = vmatprep.subr.mxu0 0.0
    %700 = vmatpush1.msra.mxu0 0.0
    %701 = vmatprep.subr.mxu0 0.0
    %702 = vmatpush1.msra.mxu0 0.0
    %703 = vmatprep.subr.mxu0 0.0
    %704 = vmatpush1.msra.mxu0 0.0
    %705 = vmatprep.subr.mxu0 0.0
    %706 = vmatpush1.msra.mxu0 0.0
    %707 = vmatprep.subr.mxu0 0.0
    %708 = vmatpush1.msra.mxu0 0.0
    %709 = vmatprep.subr.mxu0 0.0
    %710 = vmatpush1.msra.mxu0 0.0
    %711 = vmatprep.subr.mxu0 0.0
    %712 = vmatpush1.msra.mxu0 0.0
    %713 = vmatprep.subr.mxu0 0.0
    %714 = vmatpush1.msra.mxu0 0.0
    %715 = vmatprep.subr.mxu0 0.0
    %716 = vmatpush1.msra.mxu0 0.0
    %717 = vmatprep.subr.mxu0 0.0
    %718 = vmatpush1.msra.mxu0 0.0
    %719 = vmatprep.subr.mxu0 0.0
    %720 = vmatpush1.msra.mxu0 0.0
    %721 = vmatprep.subr.mxu0 0.0
    %722 = vmatpush1.msra.mxu0 0.0
    %723 = vmatprep.subr.mxu0 0.0
    %724 = vmatpush1.msra.mxu0 0.0
    %725 = vmatprep.subr.mxu0 0.0
    %726 = vmatpush1.msra.mxu0 0.0
    %727 = vmatprep.subr.mxu0 0.0
    %728 = vmatpush1.msra.mxu0 0.0
    %729 = vmatprep.subr.mxu0 0.0
    %730 = vmatpush1.msra.mxu0 0.0
    %731 = vmatprep.mubr.f32.mxu0 0.0
    %732 = vmatmul.mubr.f32.gmra.mrb[0].mxu0 %v487
    %v733 = vpop.f32.mrb[0].mxu0
    %v734 = vadd.f32 0.0, %v733
    %v735 = vpop.f32.mrb[0].mxu0
    %736 = vmatprep.mubr.f32.mxu0 0.0
    %737 = vmatmul.mubr.f32.gmra.mrb[0].mxu0 %v490
    %v738 = vpop.f32.mrb[0].mxu0
    %v739 = vadd.f32 0.0, %v738
    %v740 = vpop.f32.mrb[0].mxu0
    %741 = vdwg.mxu0
    %v742 = vmul.f32 %v662, %v734
    %v743 = vmul.f32 %v663, %v739
    %v744 = vld [vmem:[#allocation11] sm:$0x1]
    %v746 = vlaneseq
    %v747 = vshrl.u32 %v746, 7
    %v748 = vsub.s32 0, %v747
    %v749 = vrot.slane %v744, %v748
    %v751 = vadd.f32 %v742, %v749
    %v752 = vadd.f32 %v743, %v749
    %v753 = vmax.f32 %v751, 0.0
    %v754 = vmax.f32 %v752, 0.0
    %v755 = vld [vmem:[#allocation14] sm:$0xff]
    %v756 = vld [vmem:[#allocation14 + $0x8] sm:$0xff]
    %v757 = vld [vmem:[#allocation14 + $0x10] sm:$0xff]
    %v758 = vld [vmem:[#allocation14 + $0x18] sm:$0xff]
    %v759 = vld [vmem:[#allocation14 + $0x20] sm:$0xff]
    %v760 = vld [vmem:[#allocation14 + $0x28] sm:$0xff]
    %v761 = vld [vmem:[#allocation14 + $0x30] sm:$0xff]
    %v762 = vld [vmem:[#allocation14 + $0x38] sm:$0xff]
    %v763 = vld [vmem:[#allocation14 + $0x40] sm:$0xff]
    %v764 = vld [vmem:[#allocation14 + $0x48] sm:$0xff]
    %v765 = vld [vmem:[#allocation14 + $0x50] sm:$0xff]
    %v766 = vld [vmem:[#allocation14 + $0x58] sm:$0xff]
    %v767 = vld [vmem:[#allocation14 + $0x60] sm:$0xff]
    %v768 = vld [vmem:[#allocation14 + $0x68] sm:$0xff]
    %v769 = vld [vmem:[#allocation14 + $0x70] sm:$0xff]
    %v770 = vld [vmem:[#allocation14 + $0x78] sm:$0xff]
    %v771 = vld [vmem:[#allocation14 + $0x80] sm:$0x1f]
    %v772 = vld [vmem:[#allocation14 + $0x88] sm:$0x1f]
    %v774 = vsel %vm237, %v753, 0
    %v777 = vsel %vm237, %v754, 0
    %v780 = vsel %vm244, %v771, 0
    %v783 = vsel %vm244, %v772, 0
    %785 = vmatprep.subr.mxu0 %v756
    %786 = vmatpush1.msra.mxu0 %v755
    %787 = vmatprep.subr.mxu0 %v758
    %788 = vmatpush1.msra.mxu0 %v757
    %789 = vmatprep.subr.mxu0 %v760
    %790 = vmatpush1.msra.mxu0 %v759
    %791 = vmatprep.subr.mxu0 %v762
    %792 = vmatpush1.msra.mxu0 %v761
    %793 = vmatprep.subr.mxu0 %v764
    %794 = vmatpush1.msra.mxu0 %v763
    %795 = vmatprep.subr.mxu0 %v766
    %796 = vmatpush1.msra.mxu0 %v765
    %797 = vmatprep.subr.mxu0 %v768
    %798 = vmatpush1.msra.mxu0 %v767
    %799 = vmatprep.subr.mxu0 %v770
    %800 = vmatpush1.msra.mxu0 %v769
    %801 = vmatprep.subr.mxu0 %v783
    %802 = vmatpush1.msra.mxu0 %v780
    %803 = vmatprep.subr.mxu0 0.0
    %804 = vmatpush1.msra.mxu0 0.0
    %805 = vmatprep.subr.mxu0 0.0
    %806 = vmatpush1.msra.mxu0 0.0
    %807 = vmatprep.subr.mxu0 0.0
    %808 = vmatpush1.msra.mxu0 0.0
    %809 = vmatprep.subr.mxu0 0.0
    %810 = vmatpush1.msra.mxu0 0.0
    %811 = vmatprep.subr.mxu0 0.0
    %812 = vmatpush1.msra.mxu0 0.0
    %813 = vmatprep.subr.mxu0 0.0
    %814 = vmatpush1.msra.mxu0 0.0
    %815 = vmatprep.subr.mxu0 0.0
    %816 = vmatpush1.msra.mxu0 0.0
    %817 = vmatprep.subr.mxu0 0.0
    %818 = vmatpush1.msra.mxu0 0.0
    %819 = vmatprep.subr.mxu0 0.0
    %820 = vmatpush1.msra.mxu0 0.0
    %821 = vmatprep.subr.mxu0 0.0
    %822 = vmatpush1.msra.mxu0 0.0
    %823 = vmatprep.subr.mxu0 0.0
    %824 = vmatpush1.msra.mxu0 0.0
    %825 = vmatprep.subr.mxu0 0.0
    %826 = vmatpush1.msra.mxu0 0.0
    %827 = vmatprep.subr.mxu0 0.0
    %828 = vmatpush1.msra.mxu0 0.0
    %829 = vmatprep.subr.mxu0 0.0
    %830 = vmatpush1.msra.mxu0 0.0
    %831 = vmatprep.subr.mxu0 0.0
    %832 = vmatpush1.msra.mxu0 0.0
    %833 = vmatprep.subr.mxu0 0.0
    %834 = vmatpush1.msra.mxu0 0.0
    %835 = vmatprep.subr.mxu0 0.0
    %836 = vmatpush1.msra.mxu0 0.0
    %837 = vmatprep.subr.mxu0 0.0
    %838 = vmatpush1.msra.mxu0 0.0
    %839 = vmatprep.subr.mxu0 0.0
    %840 = vmatpush1.msra.mxu0 0.0
    %841 = vmatprep.subr.mxu0 0.0
    %842 = vmatpush1.msra.mxu0 0.0
    %843 = vmatprep.subr.mxu0 0.0
    %844 = vmatpush1.msra.mxu0 0.0
    %845 = vmatprep.subr.mxu0 0.0
    %846 = vmatpush1.msra.mxu0 0.0
    %847 = vmatprep.subr.mxu0 0.0
    %848 = vmatpush1.msra.mxu0 0.0
    %849 = vmatprep.mubr.f32.mxu0 0.0
    %850 = vmatmul.mubr.f32.gmra.mrb[0].mxu0 %v774
    %v851 = vpop.f32.mrb[0].mxu0
    %v852 = vadd.f32 0.0, %v851
    %v853 = vpop.f32.mrb[0].mxu0
    %v854 = vadd.f32 0.0, %v853
    %855 = vmatprep.mubr.f32.mxu0 0.0
    %856 = vmatmul.mubr.f32.gmra.mrb[0].mxu0 %v777
    %v857 = vpop.f32.mrb[0].mxu0
    %v858 = vadd.f32 0.0, %v857
    %v859 = vpop.f32.mrb[0].mxu0
    %v860 = vadd.f32 0.0, %v859
    %861 = vdwg.mxu0
    %v862 = vld [vmem:[%s10] sm:$0x3]
    %v864 = vlaneseq
    %v865 = vshrl.u32 %v864, 7
    %v866 = vsub.s32 0, %v865
    %v867 = vrot.slane %v862, %v866
    %v868 = vlaneseq
    %v869 = vshrl.u32 %v868, 7
    %v870 = vsub.s32 1, %v869
    %v871 = vrot.slane %v862, %v870
    %874 = vmatprep.subr.mxu0 %v854
    %875 = vmatpush1.msra.mxu0 %v852
    %876 = vmatprep.subr.mxu0 %v860
    %877 = vmatpush1.msra.mxu0 %v858
    %878 = vmatprep.subr.mxu0 0.0
    %879 = vmatpush1.msra.mxu0 0.0
    %880 = vmatprep.subr.mxu0 0.0
    %881 = vmatpush1.msra.mxu0 0.0
    %882 = vmatprep.subr.mxu0 0.0
    %883 = vmatpush1.msra.mxu0 0.0
    %884 = vmatprep.subr.mxu0 0.0
    %885 = vmatpush1.msra.mxu0 0.0
    %886 = vmatprep.subr.mxu0 0.0
    %887 = vmatpush1.msra.mxu0 0.0
    %888 = vmatprep.subr.mxu0 0.0
    %889 = vmatpush1.msra.mxu0 0.0
    %890 = vmatprep.subr.mxu0 0.0
    %891 = vmatpush1.msra.mxu0 0.0
    %892 = vmatprep.subr.mxu0 0.0
    %893 = vmatpush1.msra.mxu0 0.0
    %894 = vmatprep.subr.mxu0 0.0
    %895 = vmatpush1.msra.mxu0 0.0
    %896 = vmatprep.subr.mxu0 0.0
    %897 = vmatpush1.msra.mxu0 0.0
    %898 = vmatprep.subr.mxu0 0.0
    %899 = vmatpush1.msra.mxu0 0.0
    %900 = vmatprep.subr.mxu0 0.0
    %901 = vmatpush1.msra.mxu0 0.0
    %902 = vmatprep.subr.mxu0 0.0
    %903 = vmatpush1.msra.mxu0 0.0
    %904 = vmatprep.subr.mxu0 0.0
    %905 = vmatpush1.msra.mxu0 0.0
    %906 = vmatprep.subr.mxu0 0.0
    %907 = vmatpush1.msra.mxu0 0.0
    %908 = vmatprep.subr.mxu0 0.0
    %909 = vmatpush1.msra.mxu0 0.0
    %910 = vmatprep.subr.mxu0 0.0
    %911 = vmatpush1.msra.mxu0 0.0
    %912 = vmatprep.subr.mxu0 0.0
    %913 = vmatpush1.msra.mxu0 0.0
    %914 = vmatprep.subr.mxu0 0.0
    %915 = vmatpush1.msra.mxu0 0.0
    %916 = vmatprep.subr.mxu0 0.0
    %917 = vmatpush1.msra.mxu0 0.0
    %918 = vmatprep.subr.mxu0 0.0
    %919 = vmatpush1.msra.mxu0 0.0
    %920 = vmatprep.subr.mxu0 0.0
    %921 = vmatpush1.msra.mxu0 0.0
    %922 = vmatprep.subr.mxu0 0.0
    %923 = vmatpush1.msra.mxu0 0.0
    %924 = vmatprep.subr.mxu0 0.0
    %925 = vmatpush1.msra.mxu0 0.0
    %926 = vmatprep.subr.mxu0 0.0
    %927 = vmatpush1.msra.mxu0 0.0
    %928 = vmatprep.subr.mxu0 0.0
    %929 = vmatpush1.msra.mxu0 0.0
    %930 = vmatprep.subr.mxu0 0.0
    %931 = vmatpush1.msra.mxu0 0.0
    %932 = vmatprep.subr.mxu0 0.0
    %933 = vmatpush1.msra.mxu0 0.0
    %934 = vmatprep.subr.mxu0 0.0
    %935 = vmatpush1.msra.mxu0 0.0
    %936 = vmatprep.subr.mxu0 0.0
    %937 = vmatpush1.msra.mxu0 0.0
    %938 = vmatprep.mubr.f32.mxu0 0.0
    %939 = vmatmul.mubr.f32.gmra.mrb[0].mxu0 %v332
    %v940 = vpop.f32.mrb[0].mxu0
    %v941 = vadd.f32 %v867, %v940
    %v942 = vpop.f32.mrb[0].mxu0
    %v943 = vadd.f32 %v871, %v942
    %944 = vmatprep.mubr.f32.mxu0 0.0
    %945 = vmatmul.mubr.f32.gmra.mrb[0].mxu0 %v335
    %v946 = vpop.f32.mrb[0].mxu0
    %v947 = vadd.f32 %v867, %v946
    %v948 = vpop.f32.mrb[0].mxu0
    %v949 = vadd.f32 %v871, %v948
    %950 = vdwg.mxu0
    %951 = vmatprep.subr.mxu0 %v943
    %952 = vmatpush1.msra.mxu0 %v941
    %953 = vmatprep.subr.mxu0 %v949
    %954 = vmatpush1.msra.mxu0 %v947
    %955 = vmatprep.subr.mxu0 0.0
    %956 = vmatpush1.msra.mxu0 0.0
    %957 = vmatprep.subr.mxu0 0.0
    %958 = vmatpush1.msra.mxu0 0.0
    %959 = vmatprep.subr.mxu0 0.0
    %960 = vmatpush1.msra.mxu0 0.0
    %961 = vmatprep.subr.mxu0 0.0
    %962 = vmatpush1.msra.mxu0 0.0
    %963 = vmatprep.subr.mxu0 0.0
    %964 = vmatpush1.msra.mxu0 0.0
    %965 = vmatprep.subr.mxu0 0.0
    %966 = vmatpush1.msra.mxu0 0.0
    %967 = vmatprep.subr.mxu0 0.0
    %968 = vmatpush1.msra.mxu0 0.0
    %969 = vmatprep.subr.mxu0 0.0
    %970 = vmatpush1.msra.mxu0 0.0
    %971 = vmatprep.subr.mxu0 0.0
    %972 = vmatpush1.msra.mxu0 0.0
    %973 = vmatprep.subr.mxu0 0.0
    %974 = vmatpush1.msra.mxu0 0.0
    %975 = vmatprep.subr.mxu0 0.0
    %976 = vmatpush1.msra.mxu0 0.0
    %977 = vmatprep.subr.mxu0 0.0
    %978 = vmatpush1.msra.mxu0 0.0
    %979 = vmatprep.subr.mxu0 0.0
    %980 = vmatpush1.msra.mxu0 0.0
    %981 = vmatprep.subr.mxu0 0.0
    %982 = vmatpush1.msra.mxu0 0.0
    %983 = vmatprep.subr.mxu0 0.0
    %984 = vmatpush1.msra.mxu0 0.0
    %985 = vmatprep.subr.mxu0 0.0
    %986 = vmatpush1.msra.mxu0 0.0
    %987 = vmatprep.subr.mxu0 0.0
    %988 = vmatpush1.msra.mxu0 0.0
    %989 = vmatprep.subr.mxu0 0.0
    %990 = vmatpush1.msra.mxu0 0.0
    %991 = vmatprep.subr.mxu0 0.0
    %992 = vmatpush1.msra.mxu0 0.0
    %993 = vmatprep.subr.mxu0 0.0
    %994 = vmatpush1.msra.mxu0 0.0
    %995 = vmatprep.subr.mxu0 0.0
    %996 = vmatpush1.msra.mxu0 0.0
    %997 = vmatprep.subr.mxu0 0.0
    %998 = vmatpush1.msra.mxu0 0.0
    %999 = vmatprep.subr.mxu0 0.0
    %1000 = vmatpush1.msra.mxu0 0.0
    %1001 = vmatprep.subr.mxu0 0.0
    %1002 = vmatpush1.msra.mxu0 0.0
    %1003 = vmatprep.subr.mxu0 0.0
    %1004 = vmatpush1.msra.mxu0 0.0
    %1005 = vmatprep.subr.mxu0 0.0
    %1006 = vmatpush1.msra.mxu0 0.0
    %1007 = vmatprep.subr.mxu0 0.0
    %1008 = vmatpush1.msra.mxu0 0.0
    %1009 = vmatprep.subr.mxu0 0.0
    %1010 = vmatpush1.msra.mxu0 0.0
    %1011 = vmatprep.subr.mxu0 0.0
    %1012 = vmatpush1.msra.mxu0 0.0
    %1013 = vmatprep.subr.mxu0 0.0
    %1014 = vmatpush1.msra.mxu0 0.0
    %1015 = vmatprep.mubr.f32.mxu0 0.0
    %1016 = vmatmul.mubr.f32.gmra.mrb[0].mxu0 %v413
    %v1017 = vpop.f32.mrb[0].mxu0
    %v1018 = vadd.f32 0.0, %v1017
    %v1019 = vpop.f32.mrb[0].mxu0
    %v1020 = vadd.f32 0.0, %v1019
    %1021 = vdwg.mxu0
    %v1023 = vsel %vm492, %v1018, 0
    %v1026 = vsel %vm492, %v1020, 0
    %1028 = vmatprep.subr.mxu0 %v1026
    %1029 = vmatpush1.msra.mxu0 %v1023
    %1030 = vmatprep.subr.mxu0 0.0
    %1031 = vmatpush1.msra.mxu0 0.0
    %1032 = vmatprep.subr.mxu0 0.0
    %1033 = vmatpush1.msra.mxu0 0.0
    %1034 = vmatprep.subr.mxu0 0.0
    %1035 = vmatpush1.msra.mxu0 0.0
    %1036 = vmatprep.subr.mxu0 0.0
    %1037 = vmatpush1.msra.mxu0 0.0
    %1038 = vmatprep.subr.mxu0 0.0
    %1039 = vmatpush1.msra.mxu0 0.0
    %1040 = vmatprep.subr.mxu0 0.0
    %1041 = vmatpush1.msra.mxu0 0.0
    %1042 = vmatprep.subr.mxu0 0.0
    %1043 = vmatpush1.msra.mxu0 0.0
    %1044 = vmatprep.subr.mxu0 0.0
    %1045 = vmatpush1.msra.mxu0 0.0
    %1046 = vmatprep.subr.mxu0 0.0
    %1047 = vmatpush1.msra.mxu0 0.0
    %1048 = vmatprep.subr.mxu0 0.0
    %1049 = vmatpush1.msra.mxu0 0.0
    %1050 = vmatprep.subr.mxu0 0.0
    %1051 = vmatpush1.msra.mxu0 0.0
    %1052 = vmatprep.subr.mxu0 0.0
    %1053 = vmatpush1.msra.mxu0 0.0
    %1054 = vmatprep.subr.mxu0 0.0
    %1055 = vmatpush1.msra.mxu0 0.0
    %1056 = vmatprep.subr.mxu0 0.0
    %1057 = vmatpush1.msra.mxu0 0.0
    %1058 = vmatprep.subr.mxu0 0.0
    %1059 = vmatpush1.msra.mxu0 0.0
    %1060 = vmatprep.subr.mxu0 0.0
    %1061 = vmatpush1.msra.mxu0 0.0
    %1062 = vmatprep.subr.mxu0 0.0
    %1063 = vmatpush1.msra.mxu0 0.0
    %1064 = vmatprep.subr.mxu0 0.0
    %1065 = vmatpush1.msra.mxu0 0.0
    %1066 = vmatprep.subr.mxu0 0.0
    %1067 = vmatpush1.msra.mxu0 0.0
    %1068 = vmatprep.subr.mxu0 0.0
    %1069 = vmatpush1.msra.mxu0 0.0
    %1070 = vmatprep.subr.mxu0 0.0
    %1071 = vmatpush1.msra.mxu0 0.0
    %1072 = vmatprep.subr.mxu0 0.0
    %1073 = vmatpush1.msra.mxu0 0.0
    %1074 = vmatprep.subr.mxu0 0.0
    %1075 = vmatpush1.msra.mxu0 0.0
    %1076 = vmatprep.subr.mxu0 0.0
    %1077 = vmatpush1.msra.mxu0 0.0
    %1078 = vmatprep.subr.mxu0 0.0
    %1079 = vmatpush1.msra.mxu0 0.0
    %1080 = vmatprep.subr.mxu0 0.0
    %1081 = vmatpush1.msra.mxu0 0.0
    %1082 = vmatprep.subr.mxu0 0.0
    %1083 = vmatpush1.msra.mxu0 0.0
    %1084 = vmatprep.subr.mxu0 0.0
    %1085 = vmatpush1.msra.mxu0 0.0
    %1086 = vmatprep.subr.mxu0 0.0
    %1087 = vmatpush1.msra.mxu0 0.0
    %1088 = vmatprep.subr.mxu0 0.0
    %1089 = vmatpush1.msra.mxu0 0.0
    %1090 = vmatprep.subr.mxu0 0.0
    %1091 = vmatpush1.msra.mxu0 0.0
    %1092 = vmatprep.mubr.f32.mxu0 0.0
    %1093 = vmatmul.mubr.f32.gmra.mrb[0].mxu0 %v487
    %v1094 = vpop.f32.mrb[0].mxu0
    %v1095 = vadd.f32 0.0, %v1094
    %v1096 = vpop.f32.mrb[0].mxu0
    %v1097 = vadd.f32 0.0, %v1096
    %1098 = vmatprep.mubr.f32.mxu0 0.0
    %1099 = vmatmul.mubr.f32.gmra.mrb[0].mxu0 %v490
    %v1100 = vpop.f32.mrb[0].mxu0
    %v1101 = vadd.f32 0.0, %v1100
    %v1102 = vpop.f32.mrb[0].mxu0
    %v1103 = vadd.f32 0.0, %v1102
    %1104 = vdwg.mxu0
    %v1105 = vld [vmem:[%s13] sm:$0x3]
    %v1107 = vlaneseq
    %v1108 = vshrl.u32 %v1107, 7
    %v1109 = vsub.s32 0, %v1108
    %v1110 = vrot.slane %v1105, %v1109
    %v1111 = vlaneseq
    %v1112 = vshrl.u32 %v1111, 7
    %v1113 = vsub.s32 1, %v1112
    %v1114 = vrot.slane %v1105, %v1113
    %v1117 = vmul.f32 %v1095, %v1110
    %v1118 = vmul.f32 %v1097, %v1114
    %v1119 = vmul.f32 %v1101, %v1110
    %v1120 = vmul.f32 %v1103, %v1114
    %v1121 = vsub.f32 %v941, %v1117
    %v1122 = vsub.f32 %v943, %v1118
    %v1123 = vsub.f32 %v947, %v1119
    %v1124 = vsub.f32 %v949, %v1120
    %v1125 = vmul.f32 %v1121, %v1121
    %v1126 = vmul.f32 %v1122, %v1122
    %v1127 = vmul.f32 %v1123, %v1123
    %v1128 = vmul.f32 %v1124, %v1124
    %1129 = vmatprep.subr.mxu0 %v1126
    %1130 = vmatpush1.msra.mxu0 %v1125
    %1131 = vmatprep.subr.mxu0 %v1128
    %1132 = vmatpush1.msra.mxu0 %v1127
    %1133 = vmatprep.subr.mxu0 0.0
    %1134 = vmatpush1.msra.mxu0 0.0
    %1135 = vmatprep.subr.mxu0 0.0
    %1136 = vmatpush1.msra.mxu0 0.0
    %1137 = vmatprep.subr.mxu0 0.0
    %1138 = vmatpush1.msra.mxu0 0.0
    %1139 = vmatprep.subr.mxu0 0.0
    %1140 = vmatpush1.msra.mxu0 0.0
    %1141 = vmatprep.subr.mxu0 0.0
    %1142 = vmatpush1.msra.mxu0 0.0
    %1143 = vmatprep.subr.mxu0 0.0
    %1144 = vmatpush1.msra.mxu0 0.0
    %1145 = vmatprep.subr.mxu0 0.0
    %1146 = vmatpush1.msra.mxu0 0.0
    %1147 = vmatprep.subr.mxu0 0.0
    %1148 = vmatpush1.msra.mxu0 0.0
    %1149 = vmatprep.subr.mxu0 0.0
    %1150 = vmatpush1.msra.mxu0 0.0
    %1151 = vmatprep.subr.mxu0 0.0
    %1152 = vmatpush1.msra.mxu0 0.0
    %1153 = vmatprep.subr.mxu0 0.0
    %1154 = vmatpush1.msra.mxu0 0.0
    %1155 = vmatprep.subr.mxu0 0.0
    %1156 = vmatpush1.msra.mxu0 0.0
    %1157 = vmatprep.subr.mxu0 0.0
    %1158 = vmatpush1.msra.mxu0 0.0
    %1159 = vmatprep.subr.mxu0 0.0
    %1160 = vmatpush1.msra.mxu0 0.0
    %1161 = vmatprep.subr.mxu0 0.0
    %1162 = vmatpush1.msra.mxu0 0.0
    %1163 = vmatprep.subr.mxu0 0.0
    %1164 = vmatpush1.msra.mxu0 0.0
    %1165 = vmatprep.subr.mxu0 0.0
    %1166 = vmatpush1.msra.mxu0 0.0
    %1167 = vmatprep.subr.mxu0 0.0
    %1168 = vmatpush1.msra.mxu0 0.0
    %1169 = vmatprep.subr.mxu0 0.0
    %1170 = vmatpush1.msra.mxu0 0.0
    %1171 = vmatprep.subr.mxu0 0.0
    %1172 = vmatpush1.msra.mxu0 0.0
    %1173 = vmatprep.subr.mxu0 0.0
    %1174 = vmatpush1.msra.mxu0 0.0
    %1175 = vmatprep.subr.mxu0 0.0
    %1176 = vmatpush1.msra.mxu0 0.0
    %1177 = vmatprep.subr.mxu0 0.0
    %1178 = vmatpush1.msra.mxu0 0.0
    %1179 = vmatprep.subr.mxu0 0.0
    %1180 = vmatpush1.msra.mxu0 0.0
    %1181 = vmatprep.subr.mxu0 0.0
    %1182 = vmatpush1.msra.mxu0 0.0
    %1183 = vmatprep.subr.mxu0 0.0
    %1184 = vmatpush1.msra.mxu0 0.0
    %1185 = vmatprep.subr.mxu0 0.0
    %1186 = vmatpush1.msra.mxu0 0.0
    %1187 = vmatprep.subr.mxu0 0.0
    %1188 = vmatpush1.msra.mxu0 0.0
    %1189 = vmatprep.subr.mxu0 0.0
    %1190 = vmatpush1.msra.mxu0 0.0
    %1191 = vmatprep.subr.mxu0 0.0
    %1192 = vmatpush1.msra.mxu0 0.0
    %1193 = vmatprep.mubr.f32.mxu0 0.0
    %1194 = vmatmul.mubr.f32.gmra.mrb[0].mxu0 %v413
    %v1195 = vpop.f32.mrb[0].mxu0
    %v1196 = vadd.f32 1e-05, %v1195
    %v1197 = vpop.f32.mrb[0].mxu0
    %v1198 = vadd.f32 1e-05, %v1197
    %1199 = vdwg.mxu0
    %v1200 = vrsqrt.pop %v1196
    %v1201 = vrsqrt.pop %v1198
    %v1202 = vld [vmem:[%s11] sm:$0x3]
    %v1204 = vlaneseq
    %v1205 = vshrl.u32 %v1204, 7
    %v1206 = vsub.s32 0, %v1205
    %v1207 = vrot.slane %v1202, %v1206
    %v1208 = vlaneseq
    %v1209 = vshrl.u32 %v1208, 7
    %v1210 = vsub.s32 1, %v1209
    %v1211 = vrot.slane %v1202, %v1210
    %v1214 = vmul.f32 %v1207, %v1121
    %v1215 = vmul.f32 %v1211, %v1122
    %v1216 = vmul.f32 %v1207, %v1123
    %v1217 = vmul.f32 %v1211, %v1124
    %v1219 = vsel %vm492, %v1200, 0
    %v1222 = vsel %vm492, %v1201, 0
    %1224 = vmatprep.subr.mxu0 %v1222
    %1225 = vmatpush1.msra.mxu0 %v1219
    %1226 = vmatprep.subr.mxu0 0.0
    %1227 = vmatpush1.msra.mxu0 0.0
    %1228 = vmatprep.subr.mxu0 0.0
    %1229 = vmatpush1.msra.mxu0 0.0
    %1230 = vmatprep.subr.mxu0 0.0
    %1231 = vmatpush1.msra.mxu0 0.0
    %1232 = vmatprep.subr.mxu0 0.0
    %1233 = vmatpush1.msra.mxu0 0.0
    %1234 = vmatprep.subr.mxu0 0.0
    %1235 = vmatpush1.msra.mxu0 0.0
    %1236 = vmatprep.subr.mxu0 0.0
    %1237 = vmatpush1.msra.mxu0 0.0
    %1238 = vmatprep.subr.mxu0 0.0
    %1239 = vmatpush1.msra.mxu0 0.0
    %1240 = vmatprep.subr.mxu0 0.0
    %1241 = vmatpush1.msra.mxu0 0.0
    %1242 = vmatprep.subr.mxu0 0.0
    %1243 = vmatpush1.msra.mxu0 0.0
    %1244 = vmatprep.subr.mxu0 0.0
    %1245 = vmatpush1.msra.mxu0 0.0
    %1246 = vmatprep.subr.mxu0 0.0
    %1247 = vmatpush1.msra.mxu0 0.0
    %1248 = vmatprep.subr.mxu0 0.0
    %1249 = vmatpush1.msra.mxu0 0.0
    %1250 = vmatprep.subr.mxu0 0.0
    %1251 = vmatpush1.msra.mxu0 0.0
    %1252 = vmatprep.subr.mxu0 0.0
    %1253 = vmatpush1.msra.mxu0 0.0
    %1254 = vmatprep.subr.mxu0 0.0
    %1255 = vmatpush1.msra.mxu0 0.0
    %1256 = vmatprep.subr.mxu0 0.0
    %1257 = vmatpush1.msra.mxu0 0.0
    %1258 = vmatprep.subr.mxu0 0.0
    %1259 = vmatpush1.msra.mxu0 0.0
    %1260 = vmatprep.subr.mxu0 0.0
    %1261 = vmatpush1.msra.mxu0 0.0
    %1262 = vmatprep.subr.mxu0 0.0
    %1263 = vmatpush1.msra.mxu0 0.0
    %1264 = vmatprep.subr.mxu0 0.0
    %1265 = vmatpush1.msra.mxu0 0.0
    %1266 = vmatprep.subr.mxu0 0.0
    %1267 = vmatpush1.msra.mxu0 0.0
    %1268 = vmatprep.subr.mxu0 0.0
    %1269 = vmatpush1.msra.mxu0 0.0
    %1270 = vmatprep.subr.mxu0 0.0
    %1271 = vmatpush1.msra.mxu0 0.0
    %1272 = vmatprep.subr.mxu0 0.0
    %1273 = vmatpush1.msra.mxu0 0.0
    %1274 = vmatprep.subr.mxu0 0.0
    %1275 = vmatpush1.msra.mxu0 0.0
    %1276 = vmatprep.subr.mxu0 0.0
    %1277 = vmatpush1.msra.mxu0 0.0
    %1278 = vmatprep.subr.mxu0 0.0
    %1279 = vmatpush1.msra.mxu0 0.0
    %1280 = vmatprep.subr.mxu0 0.0
    %1281 = vmatpush1.msra.mxu0 0.0
    %1282 = vmatprep.subr.mxu0 0.0
    %1283 = vmatpush1.msra.mxu0 0.0
    %1284 = vmatprep.subr.mxu0 0.0
    %1285 = vmatpush1.msra.mxu0 0.0
    %1286 = vmatprep.subr.mxu0 0.0
    %1287 = vmatpush1.msra.mxu0 0.0
    %1288 = vmatprep.mubr.f32.mxu0 0.0
    %1289 = vmatmul.mubr.f32.gmra.mrb[0].mxu0 %v487
    %v1290 = vpop.f32.mrb[0].mxu0
    %v1291 = vadd.f32 0.0, %v1290
    %v1292 = vpop.f32.mrb[0].mxu0
    %v1293 = vadd.f32 0.0, %v1292
    %1294 = vmatprep.mubr.f32.mxu0 0.0
    %1295 = vmatmul.mubr.f32.gmra.mrb[0].mxu0 %v490
    %v1296 = vpop.f32.mrb[0].mxu0
    %v1297 = vadd.f32 0.0, %v1296
    %v1298 = vpop.f32.mrb[0].mxu0
    %v1299 = vadd.f32 0.0, %v1298
    %1300 = vdwg.mxu0
    %v1301 = vmul.f32 %v1214, %v1291
    %v1302 = vmul.f32 %v1215, %v1293
    %v1303 = vmul.f32 %v1216, %v1297
    %v1304 = vmul.f32 %v1217, %v1299
    %v1305 = vld [vmem:[%s12] sm:$0x3]
    %v1307 = vlaneseq
    %v1308 = vshrl.u32 %v1307, 7
    %v1309 = vsub.s32 0, %v1308
    %v1310 = vrot.slane %v1305, %v1309
    %v1311 = vlaneseq
    %v1312 = vshrl.u32 %v1311, 7
    %v1313 = vsub.s32 1, %v1312
    %v1314 = vrot.slane %v1305, %v1313
    %v1317 = vadd.f32 %v1301, %v1310
    %v1318 = vadd.f32 %v1302, %v1314
    %v1319 = vadd.f32 %v1303, %v1310
    %v1320 = vadd.f32 %v1304, %v1314
    %v1321 = vmax.f32 %v1317, 0.0
    %v1322 = vmax.f32 %v1318, 0.0
    %v1323 = vmax.f32 %v1319, 0.0
    %v1324 = vmax.f32 %v1320, 0.0
    %v1325 = vld [vmem:[#allocation16] sm:$0xff]
    %v1326 = vld [vmem:[#allocation16 + $0x8] sm:$0xff]
    %v1327 = vld [vmem:[#allocation16 + $0x10] sm:$0xff]
    %v1328 = vld [vmem:[#allocation16 + $0x18] sm:$0xff]
    %v1329 = vld [vmem:[#allocation16 + $0x20] sm:$0xff]
    %v1330 = vld [vmem:[#allocation16 + $0x28] sm:$0xff]
    %v1331 = vld [vmem:[#allocation16 + $0x30] sm:$0xff]
    %v1332 = vld [vmem:[#allocation16 + $0x38] sm:$0xff]
    %v1333 = vld [vmem:[#allocation16 + $0x40] sm:$0xff]
    %v1334 = vld [vmem:[#allocation16 + $0x48] sm:$0xff]
    %v1335 = vld [vmem:[#allocation16 + $0x50] sm:$0xff]
    %v1336 = vld [vmem:[#allocation16 + $0x58] sm:$0xff]
    %v1337 = vld [vmem:[#allocation16 + $0x60] sm:$0xff]
    %v1338 = vld [vmem:[#allocation16 + $0x68] sm:$0xff]
    %v1339 = vld [vmem:[#allocation16 + $0x70] sm:$0xff]
    %v1340 = vld [vmem:[#allocation16 + $0x78] sm:$0xff]
    %v1341 = vld [vmem:[#allocation16 + $0x80] sm:$0xff]
    %v1342 = vld [vmem:[#allocation16 + $0x88] sm:$0xff]
    %v1343 = vld [vmem:[#allocation16 + $0x90] sm:$0xff]
    %v1344 = vld [vmem:[#allocation16 + $0x98] sm:$0xff]
    %v1345 = vld [vmem:[#allocation16 + $0xa0] sm:$0xff]
    %v1346 = vld [vmem:[#allocation16 + $0xa8] sm:$0xff]
    %v1347 = vld [vmem:[#allocation16 + $0xb0] sm:$0xff]
    %v1348 = vld [vmem:[#allocation16 + $0xb8] sm:$0xff]
    %v1349 = vld [vmem:[#allocation16 + $0xc0] sm:$0xff]
    %v1350 = vld [vmem:[#allocation16 + $0xc8] sm:$0xff]
    %v1351 = vld [vmem:[#allocation16 + $0xd0] sm:$0xff]
    %v1352 = vld [vmem:[#allocation16 + $0xd8] sm:$0xff]
    %v1353 = vld [vmem:[#allocation16 + $0xe0] sm:$0xff]
    %v1354 = vld [vmem:[#allocation16 + $0xe8] sm:$0xff]
    %v1355 = vld [vmem:[#allocation16 + $0xf0] sm:$0xff]
    %v1356 = vld [vmem:[#allocation16 + $0xf8] sm:$0xff]
    %v1357 = vld [vmem:[#allocation16 + $0x100] sm:$0xff]
    %v1358 = vld [vmem:[#allocation16 + $0x108] sm:$0xff]
    %v1359 = vld [vmem:[#allocation16 + $0x110] sm:$0xff]
    %v1360 = vld [vmem:[#allocation16 + $0x118] sm:$0xff]
    %v1361 = vld [vmem:[#allocation16 + $0x120] sm:$0xff]
    %v1362 = vld [vmem:[#allocation16 + $0x128] sm:$0xff]
    %v1363 = vld [vmem:[#allocation16 + $0x130] sm:$0xff]
    %v1364 = vld [vmem:[#allocation16 + $0x138] sm:$0xff]
    %v1365 = vld [vmem:[#allocation16 + $0x140] sm:$0xff]
    %v1366 = vld [vmem:[#allocation16 + $0x148] sm:$0xff]
    %v1367 = vld [vmem:[#allocation16 + $0x150] sm:$0xff]
    %v1368 = vld [vmem:[#allocation16 + $0x158] sm:$0xff]
    %v1369 = vld [vmem:[#allocation16 + $0x160] sm:$0xff]
    %v1370 = vld [vmem:[#allocation16 + $0x168] sm:$0xff]
    %v1371 = vld [vmem:[#allocation16 + $0x170] sm:$0xff]
    %v1372 = vld [vmem:[#allocation16 + $0x178] sm:$0xff]
    %v1373 = vld [vmem:[#allocation16 + $0x180] sm:$0xff]
    %v1374 = vld [vmem:[#allocation16 + $0x188] sm:$0xff]
    %v1375 = vld [vmem:[#allocation16 + $0x190] sm:$0xff]
    %v1376 = vld [vmem:[#allocation16 + $0x198] sm:$0x3]
    %v1377 = vld [vmem:[#allocation16 + $0x1a0] sm:$0x3]
    %v1378 = vld [vmem:[#allocation16 + $0x1a8] sm:$0x3]
    %vm1379 = vcmask 80896
    %v1381 = vsel %vm1379, %v1322, 0
    %v1384 = vsel %vm1379, %v1324, 0
    %v1387 = vsel %vm492, %v1376, 0
    %v1390 = vsel %vm492, %v1377, 0
    %v1393 = vsel %vm492, %v1378, 0
    %1395 = vmatprep.subr.mxu0 %v1326
    %1396 = vmatpush1.msra.mxu0 %v1325
    %1397 = vmatprep.subr.mxu0 %v1329
    %1398 = vmatpush1.msra.mxu0 %v1328
    %1399 = vmatprep.subr.mxu0 %v1332
    %1400 = vmatpush1.msra.mxu0 %v1331
    %1401 = vmatprep.subr.mxu0 %v1335
    %1402 = vmatpush1.msra.mxu0 %v1334
    %1403 = vmatprep.subr.mxu0 %v1338
    %1404 = vmatpush1.msra.mxu0 %v1337
    %1405 = vmatprep.subr.mxu0 %v1341
    %1406 = vmatpush1.msra.mxu0 %v1340
    %1407 = vmatprep.subr.mxu0 %v1344
    %1408 = vmatpush1.msra.mxu0 %v1343
    %1409 = vmatprep.subr.mxu0 %v1347
    %1410 = vmatpush1.msra.mxu0 %v1346
    %1411 = vmatprep.subr.mxu0 %v1350
    %1412 = vmatpush1.msra.mxu0 %v1349
    %1413 = vmatprep.subr.mxu0 %v1353
    %1414 = vmatpush1.msra.mxu0 %v1352
    %1415 = vmatprep.subr.mxu0 %v1356
    %1416 = vmatpush1.msra.mxu0 %v1355
    %1417 = vmatprep.subr.mxu0 %v1359
    %1418 = vmatpush1.msra.mxu0 %v1358
    %1419 = vmatprep.subr.mxu0 %v1362
    %1420 = vmatpush1.msra.mxu0 %v1361
    %1421 = vmatprep.subr.mxu0 %v1365
    %1422 = vmatpush1.msra.mxu0 %v1364
    %1423 = vmatprep.subr.mxu0 %v1368
    %1424 = vmatpush1.msra.mxu0 %v1367
    %1425 = vmatprep.subr.mxu0 %v1371
    %1426 = vmatpush1.msra.mxu0 %v1370
    %1427 = vmatprep.subr.mxu0 %v1374
    %1428 = vmatpush1.msra.mxu0 %v1373
    %1429 = vmatprep.subr.mxu0 %v1390
    %1430 = vmatpush1.msra.mxu0 %v1387
    %1431 = vmatprep.subr.mxu0 0.0
    %1432 = vmatpush1.msra.mxu0 0.0
    %1433 = vmatprep.subr.mxu0 0.0
    %1434 = vmatpush1.msra.mxu0 0.0
    %1435 = vmatprep.subr.mxu0 0.0
    %1436 = vmatpush1.msra.mxu0 0.0
    %1437 = vmatprep.subr.mxu0 0.0
    %1438 = vmatpush1.msra.mxu0 0.0
    %1439 = vmatprep.subr.mxu0 0.0
    %1440 = vmatpush1.msra.mxu0 0.0
    %1441 = vmatprep.subr.mxu0 0.0
    %1442 = vmatpush1.msra.mxu0 0.0
    %1443 = vmatprep.subr.mxu0 0.0
    %1444 = vmatpush1.msra.mxu0 0.0
    %1445 = vmatprep.subr.mxu0 0.0
    %1446 = vmatpush1.msra.mxu0 0.0
    %1447 = vmatprep.subr.mxu0 0.0
    %1448 = vmatpush1.msra.mxu0 0.0
    %1449 = vmatprep.subr.mxu0 0.0
    %1450 = vmatpush1.msra.mxu0 0.0
    %1451 = vmatprep.subr.mxu0 0.0
    %1452 = vmatpush1.msra.mxu0 0.0
    %1453 = vmatprep.subr.mxu0 0.0
    %1454 = vmatpush1.msra.mxu0 0.0
    %1455 = vmatprep.subr.mxu0 0.0
    %1456 = vmatpush1.msra.mxu0 0.0
    %1457 = vmatprep.subr.mxu0 0.0
    %1458 = vmatpush1.msra.mxu0 0.0
    %1459 = vmatprep.mubr.f32.mxu0 %v1381
    %1460 = vmatmul.mubr.f32.gmra.mrb[0].mxu0 %v1321
    %v1461 = vpop.f32.mrb[0].mxu0
    %v1462 = vadd.f32 0.0, %v1461
    %v1463 = vpop.f32.mrb[0].mxu0
    %v1464 = vadd.f32 0.0, %v1463
    %1465 = vmatprep.mubr.f32.mxu0 %v1384
    %1466 = vmatmul.mubr.f32.gmra.mrb[0].mxu0 %v1323
    %v1467 = vpop.f32.mrb[0].mxu0
    %v1468 = vadd.f32 0.0, %v1467
    %v1469 = vpop.f32.mrb[0].mxu0
    %v1470 = vadd.f32 0.0, %v1469
    %1471 = vdwg.mxu0
    %1472 = vmatprep.subr.mxu0 0.0
    %1473 = vmatpush1.msra.mxu0 %v1327
    %1474 = vmatprep.subr.mxu0 0.0
    %1475 = vmatpush1.msra.mxu0 %v1330
    %1476 = vmatprep.subr.mxu0 0.0
    %1477 = vmatpush1.msra.mxu0 %v1333
    %1478 = vmatprep.subr.mxu0 0.0
    %1479 = vmatpush1.msra.mxu0 %v1336
    %1480 = vmatprep.subr.mxu0 0.0
    %1481 = vmatpush1.msra.mxu0 %v1339
    %1482 = vmatprep.subr.mxu0 0.0
    %1483 = vmatpush1.msra.mxu0 %v1342
    %1484 = vmatprep.subr.mxu0 0.0
    %1485 = vmatpush1.msra.mxu0 %v1345
    %1486 = vmatprep.subr.mxu0 0.0
    %1487 = vmatpush1.msra.mxu0 %v1348
    %1488 = vmatprep.subr.mxu0 0.0
    %1489 = vmatpush1.msra.mxu0 %v1351
    %1490 = vmatprep.subr.mxu0 0.0
    %1491 = vmatpush1.msra.mxu0 %v1354
    %1492 = vmatprep.subr.mxu0 0.0
    %1493 = vmatpush1.msra.mxu0 %v1357
    %1494 = vmatprep.subr.mxu0 0.0
    %1495 = vmatpush1.msra.mxu0 %v1360
    %1496 = vmatprep.subr.mxu0 0.0
    %1497 = vmatpush1.msra.mxu0 %v1363
    %1498 = vmatprep.subr.mxu0 0.0
    %1499 = vmatpush1.msra.mxu0 %v1366
    %1500 = vmatprep.subr.mxu0 0.0
    %1501 = vmatpush1.msra.mxu0 %v1369
    %1502 = vmatprep.subr.mxu0 0.0
    %1503 = vmatpush1.msra.mxu0 %v1372
    %1504 = vmatprep.subr.mxu0 0.0
    %1505 = vmatpush1.msra.mxu0 %v1375
    %1506 = vmatprep.subr.mxu0 0.0
    %1507 = vmatpush1.msra.mxu0 %v1393
    %1508 = vmatprep.subr.mxu0 0.0
    %1509 = vmatpush1.msra.mxu0 0.0
    %1510 = vmatprep.subr.mxu0 0.0
    %1511 = vmatpush1.msra.mxu0 0.0
    %1512 = vmatprep.subr.mxu0 0.0
    %1513 = vmatpush1.msra.mxu0 0.0
    %1514 = vmatprep.subr.mxu0 0.0
    %1515 = vmatpush1.msra.mxu0 0.0
    %1516 = vmatprep.subr.mxu0 0.0
    %1517 = vmatpush1.msra.mxu0 0.0
    %1518 = vmatprep.subr.mxu0 0.0
    %1519 = vmatpush1.msra.mxu0 0.0
    %1520 = vmatprep.subr.mxu0 0.0
    %1521 = vmatpush1.msra.mxu0 0.0
    %1522 = vmatprep.subr.mxu0 0.0
    %1523 = vmatpush1.msra.mxu0 0.0
    %1524 = vmatprep.subr.mxu0 0.0
    %1525 = vmatpush1.msra.mxu0 0.0
    %1526 = vmatprep.subr.mxu0 0.0
    %1527 = vmatpush1.msra.mxu0 0.0
    %1528 = vmatprep.subr.mxu0 0.0
    %1529 = vmatpush1.msra.mxu0 0.0
    %1530 = vmatprep.subr.mxu0 0.0
    %1531 = vmatpush1.msra.mxu0 0.0
    %1532 = vmatprep.subr.mxu0 0.0
    %1533 = vmatpush1.msra.mxu0 0.0
    %1534 = vmatprep.subr.mxu0 0.0
    %1535 = vmatpush1.msra.mxu0 0.0
    %1536 = vmatprep.mubr.f32.mxu0 %v1381
    %1537 = vmatmul.mubr.f32.gmra.mrb[0].mxu0 %v1321
    %v1538 = vpop.f32.mrb[0].mxu0
    %v1539 = vadd.f32 0.0, %v1538
    %v1540 = vpop.f32.mrb[0].mxu0
    %1541 = vmatprep.mubr.f32.mxu0 %v1384
    %1542 = vmatmul.mubr.f32.gmra.mrb[0].mxu0 %v1323
    %v1543 = vpop.f32.mrb[0].mxu0
    %v1544 = vadd.f32 0.0, %v1543
    %v1545 = vpop.f32.mrb[0].mxu0
    %1546 = vdwg.mxu0
    %v1547 = vld [vmem:[%s15] sm:$0x7]
    %v1549 = vlaneseq
    %v1550 = vshrl.u32 %v1549, 7
    %v1551 = vsub.s32 0, %v1550
    %v1552 = vrot.slane %v1547, %v1551
    %v1553 = vlaneseq
    %v1554 = vshrl.u32 %v1553, 7
    %v1555 = vsub.s32 1, %v1554
    %v1556 = vrot.slane %v1547, %v1555
    %v1557 = vlaneseq
    %v1558 = vshrl.u32 %v1557, 7
    %v1559 = vsub.s32 2, %v1558
    %v1560 = vrot.slane %v1547, %v1559
    %1564 = vmatprep.subr.mxu0 %v1464
    %1565 = vmatpush1.msra.mxu0 %v1462
    %1566 = vmatprep.subr.mxu0 %v1470
    %1567 = vmatpush1.msra.mxu0 %v1468
    %1568 = vmatprep.subr.mxu0 0.0
    %1569 = vmatpush1.msra.mxu0 0.0
    %1570 = vmatprep.subr.mxu0 0.0
    %1571 = vmatpush1.msra.mxu0 0.0
    %1572 = vmatprep.subr.mxu0 0.0
    %1573 = vmatpush1.msra.mxu0 0.0
    %1574 = vmatprep.subr.mxu0 0.0
    %1575 = vmatpush1.msra.mxu0 0.0
    %1576 = vmatprep.subr.mxu0 0.0
    %1577 = vmatpush1.msra.mxu0 0.0
    %1578 = vmatprep.subr.mxu0 0.0
    %1579 = vmatpush1.msra.mxu0 0.0
    %1580 = vmatprep.subr.mxu0 0.0
    %1581 = vmatpush1.msra.mxu0 0.0
    %1582 = vmatprep.subr.mxu0 0.0
    %1583 = vmatpush1.msra.mxu0 0.0
    %1584 = vmatprep.subr.mxu0 0.0
    %1585 = vmatpush1.msra.mxu0 0.0
    %1586 = vmatprep.subr.mxu0 0.0
    %1587 = vmatpush1.msra.mxu0 0.0
    %1588 = vmatprep.subr.mxu0 0.0
    %1589 = vmatpush1.msra.mxu0 0.0
    %1590 = vmatprep.subr.mxu0 0.0
    %1591 = vmatpush1.msra.mxu0 0.0
    %1592 = vmatprep.subr.mxu0 0.0
    %1593 = vmatpush1.msra.mxu0 0.0
    %1594 = vmatprep.subr.mxu0 0.0
    %1595 = vmatpush1.msra.mxu0 0.0
    %1596 = vmatprep.subr.mxu0 0.0
    %1597 = vmatpush1.msra.mxu0 0.0
    %1598 = vmatprep.subr.mxu0 0.0
    %1599 = vmatpush1.msra.mxu0 0.0
    %1600 = vmatprep.subr.mxu0 0.0
    %1601 = vmatpush1.msra.mxu0 0.0
    %1602 = vmatprep.subr.mxu0 0.0
    %1603 = vmatpush1.msra.mxu0 0.0
    %1604 = vmatprep.subr.mxu0 0.0
    %1605 = vmatpush1.msra.mxu0 0.0
    %1606 = vmatprep.subr.mxu0 0.0
    %1607 = vmatpush1.msra.mxu0 0.0
    %1608 = vmatprep.subr.mxu0 0.0
    %1609 = vmatpush1.msra.mxu0 0.0
    %1610 = vmatprep.subr.mxu0 0.0
    %1611 = vmatpush1.msra.mxu0 0.0
    %1612 = vmatprep.subr.mxu0 0.0
    %1613 = vmatpush1.msra.mxu0 0.0
    %1614 = vmatprep.subr.mxu0 0.0
    %1615 = vmatpush1.msra.mxu0 0.0
    %1616 = vmatprep.subr.mxu0 0.0
    %1617 = vmatpush1.msra.mxu0 0.0
    %1618 = vmatprep.subr.mxu0 0.0
    %1619 = vmatpush1.msra.mxu0 0.0
    %1620 = vmatprep.subr.mxu0 0.0
    %1621 = vmatpush1.msra.mxu0 0.0
    %1622 = vmatprep.subr.mxu0 0.0
    %1623 = vmatpush1.msra.mxu0 0.0
    %1624 = vmatprep.subr.mxu0 0.0
    %1625 = vmatpush1.msra.mxu0 0.0
    %1626 = vmatprep.subr.mxu0 0.0
    %1627 = vmatpush1.msra.mxu0 0.0
    %1628 = vmatprep.mubr.f32.mxu0 0.0
    %1629 = vmatmul.mubr.f32.gmra.mrb[0].mxu0 %v332
    %v1630 = vpop.f32.mrb[0].mxu0
    %v1631 = vadd.f32 %v1552, %v1630
    %v1632 = vpop.f32.mrb[0].mxu0
    %v1633 = vadd.f32 %v1556, %v1632
    %1634 = vmatprep.mubr.f32.mxu0 0.0
    %1635 = vmatmul.mubr.f32.gmra.mrb[0].mxu0 %v335
    %v1636 = vpop.f32.mrb[0].mxu0
    %v1637 = vadd.f32 %v1552, %v1636
    %v1638 = vpop.f32.mrb[0].mxu0
    %v1639 = vadd.f32 %v1556, %v1638
    %1640 = vdwg.mxu0
    %1641 = vmatprep.subr.mxu0 0.0
    %1642 = vmatpush1.msra.mxu0 %v1539
    %1643 = vmatprep.subr.mxu0 0.0
    %1644 = vmatpush1.msra.mxu0 %v1544
    %1645 = vmatprep.subr.mxu0 0.0
    %1646 = vmatpush1.msra.mxu0 0.0
    %1647 = vmatprep.subr.mxu0 0.0
    %1648 = vmatpush1.msra.mxu0 0.0
    %1649 = vmatprep.subr.mxu0 0.0
    %1650 = vmatpush1.msra.mxu0 0.0
    %1651 = vmatprep.subr.mxu0 0.0
    %1652 = vmatpush1.msra.mxu0 0.0
    %1653 = vmatprep.subr.mxu0 0.0
    %1654 = vmatpush1.msra.mxu0 0.0
    %1655 = vmatprep.subr.mxu0 0.0
    %1656 = vmatpush1.msra.mxu0 0.0
    %1657 = vmatprep.subr.mxu0 0.0
    %1658 = vmatpush1.msra.mxu0 0.0
    %1659 = vmatprep.subr.mxu0 0.0
    %1660 = vmatpush1.msra.mxu0 0.0
    %1661 = vmatprep.subr.mxu0 0.0
    %1662 = vmatpush1.msra.mxu0 0.0
    %1663 = vmatprep.subr.mxu0 0.0
    %1664 = vmatpush1.msra.mxu0 0.0
    %1665 = vmatprep.subr.mxu0 0.0
    %1666 = vmatpush1.msra.mxu0 0.0
    %1667 = vmatprep.subr.mxu0 0.0
    %1668 = vmatpush1.msra.mxu0 0.0
    %1669 = vmatprep.subr.mxu0 0.0
    %1670 = vmatpush1.msra.mxu0 0.0
    %1671 = vmatprep.subr.mxu0 0.0
    %1672 = vmatpush1.msra.mxu0 0.0
    %1673 = vmatprep.subr.mxu0 0.0
    %1674 = vmatpush1.msra.mxu0 0.0
    %1675 = vmatprep.subr.mxu0 0.0
    %1676 = vmatpush1.msra.mxu0 0.0
    %1677 = vmatprep.subr.mxu0 0.0
    %1678 = vmatpush1.msra.mxu0 0.0
    %1679 = vmatprep.subr.mxu0 0.0
    %1680 = vmatpush1.msra.mxu0 0.0
    %1681 = vmatprep.subr.mxu0 0.0
    %1682 = vmatpush1.msra.mxu0 0.0
    %1683 = vmatprep.subr.mxu0 0.0
    %1684 = vmatpush1.msra.mxu0 0.0
    %1685 = vmatprep.subr.mxu0 0.0
    %1686 = vmatpush1.msra.mxu0 0.0
    %1687 = vmatprep.subr.mxu0 0.0
    %1688 = vmatpush1.msra.mxu0 0.0
    %1689 = vmatprep.subr.mxu0 0.0
    %1690 = vmatpush1.msra.mxu0 0.0
    %1691 = vmatprep.subr.mxu0 0.0
    %1692 = vmatpush1.msra.mxu0 0.0
    %1693 = vmatprep.subr.mxu0 0.0
    %1694 = vmatpush1.msra.mxu0 0.0
    %1695 = vmatprep.subr.mxu0 0.0
    %1696 = vmatpush1.msra.mxu0 0.0
    %1697 = vmatprep.subr.mxu0 0.0
    %1698 = vmatpush1.msra.mxu0 0.0
    %1699 = vmatprep.subr.mxu0 0.0
    %1700 = vmatpush1.msra.mxu0 0.0
    %1701 = vmatprep.subr.mxu0 0.0
    %1702 = vmatpush1.msra.mxu0 0.0
    %1703 = vmatprep.subr.mxu0 0.0
    %1704 = vmatpush1.msra.mxu0 0.0
    %1705 = vmatprep.mubr.f32.mxu0 0.0
    %1706 = vmatmul.mubr.f32.gmra.mrb[0].mxu0 %v332
    %v1707 = vpop.f32.mrb[0].mxu0
    %v1708 = vadd.f32 %v1560, %v1707
    %v1709 = vpop.f32.mrb[0].mxu0
    %1710 = vmatprep.mubr.f32.mxu0 0.0
    %1711 = vmatmul.mubr.f32.gmra.mrb[0].mxu0 %v335
    %v1712 = vpop.f32.mrb[0].mxu0
    %v1713 = vadd.f32 %v1560, %v1712
    %v1714 = vpop.f32.mrb[0].mxu0
    %1715 = vdwg.mxu0
    %1716 = vmatprep.subr.mxu0 %v1633
    %1717 = vmatpush1.msra.mxu0 %v1631
    %1718 = vmatprep.subr.mxu0 %v1639
    %1719 = vmatpush1.msra.mxu0 %v1637
    %1720 = vmatprep.subr.mxu0 0.0
    %1721 = vmatpush1.msra.mxu0 0.0
    %1722 = vmatprep.subr.mxu0 0.0
    %1723 = vmatpush1.msra.mxu0 0.0
    %1724 = vmatprep.subr.mxu0 0.0
    %1725 = vmatpush1.msra.mxu0 0.0
    %1726 = vmatprep.subr.mxu0 0.0
    %1727 = vmatpush1.msra.mxu0 0.0
    %1728 = vmatprep.subr.mxu0 0.0
    %1729 = vmatpush1.msra.mxu0 0.0
    %1730 = vmatprep.subr.mxu0 0.0
    %1731 = vmatpush1.msra.mxu0 0.0
    %1732 = vmatprep.subr.mxu0 0.0
    %1733 = vmatpush1.msra.mxu0 0.0
    %1734 = vmatprep.subr.mxu0 0.0
    %1735 = vmatpush1.msra.mxu0 0.0
    %1736 = vmatprep.subr.mxu0 0.0
    %1737 = vmatpush1.msra.mxu0 0.0
    %1738 = vmatprep.subr.mxu0 0.0
    %1739 = vmatpush1.msra.mxu0 0.0
    %1740 = vmatprep.subr.mxu0 0.0
    %1741 = vmatpush1.msra.mxu0 0.0
    %1742 = vmatprep.subr.mxu0 0.0
    %1743 = vmatpush1.msra.mxu0 0.0
    %1744 = vmatprep.subr.mxu0 0.0
    %1745 = vmatpush1.msra.mxu0 0.0
    %1746 = vmatprep.subr.mxu0 0.0
    %1747 = vmatpush1.msra.mxu0 0.0
    %1748 = vmatprep.subr.mxu0 0.0
    %1749 = vmatpush1.msra.mxu0 0.0
    %1750 = vmatprep.subr.mxu0 0.0
    %1751 = vmatpush1.msra.mxu0 0.0
    %1752 = vmatprep.subr.mxu0 0.0
    %1753 = vmatpush1.msra.mxu0 0.0
    %1754 = vmatprep.subr.mxu0 0.0
    %1755 = vmatpush1.msra.mxu0 0.0
    %1756 = vmatprep.subr.mxu0 0.0
    %1757 = vmatpush1.msra.mxu0 0.0
    %1758 = vmatprep.subr.mxu0 0.0
    %1759 = vmatpush1.msra.mxu0 0.0
    %1760 = vmatprep.subr.mxu0 0.0
    %1761 = vmatpush1.msra.mxu0 0.0
    %1762 = vmatprep.subr.mxu0 0.0
    %1763 = vmatpush1.msra.mxu0 0.0
    %1764 = vmatprep.subr.mxu0 0.0
    %1765 = vmatpush1.msra.mxu0 0.0
    %1766 = vmatprep.subr.mxu0 0.0
    %1767 = vmatpush1.msra.mxu0 0.0
    %1768 = vmatprep.subr.mxu0 0.0
    %1769 = vmatpush1.msra.mxu0 0.0
    %1770 = vmatprep.subr.mxu0 0.0
    %1771 = vmatpush1.msra.mxu0 0.0
    %1772 = vmatprep.subr.mxu0 0.0
    %1773 = vmatpush1.msra.mxu0 0.0
    %1774 = vmatprep.subr.mxu0 0.0
    %1775 = vmatpush1.msra.mxu0 0.0
    %1776 = vmatprep.subr.mxu0 0.0
    %1777 = vmatpush1.msra.mxu0 0.0
    %1778 = vmatprep.subr.mxu0 0.0
    %1779 = vmatpush1.msra.mxu0 0.0
    %1780 = vmatprep.mubr.f32.mxu0 0.0
    %1781 = vmatmul.mubr.f32.gmra.mrb[0].mxu0 %v413
    %v1782 = vpop.f32.mrb[0].mxu0
    %v1783 = vadd.f32 0.0, %v1782
    %v1784 = vpop.f32.mrb[0].mxu0
    %v1785 = vadd.f32 0.0, %v1784
    %1786 = vdwg.mxu0
    %1787 = vmatprep.subr.mxu0 0.0
    %1788 = vmatpush1.msra.mxu0 %v1708
    %1789 = vmatprep.subr.mxu0 0.0
    %1790 = vmatpush1.msra.mxu0 %v1713
    %1791 = vmatprep.subr.mxu0 0.0
    %1792 = vmatpush1.msra.mxu0 0.0
    %1793 = vmatprep.subr.mxu0 0.0
    %1794 = vmatpush1.msra.mxu0 0.0
    %1795 = vmatprep.subr.mxu0 0.0
    %1796 = vmatpush1.msra.mxu0 0.0
    %1797 = vmatprep.subr.mxu0 0.0
    %1798 = vmatpush1.msra.mxu0 0.0
    %1799 = vmatprep.subr.mxu0 0.0
    %1800 = vmatpush1.msra.mxu0 0.0
    %1801 = vmatprep.subr.mxu0 0.0
    %1802 = vmatpush1.msra.mxu0 0.0
    %1803 = vmatprep.subr.mxu0 0.0
    %1804 = vmatpush1.msra.mxu0 0.0
    %1805 = vmatprep.subr.mxu0 0.0
    %1806 = vmatpush1.msra.mxu0 0.0
    %1807 = vmatprep.subr.mxu0 0.0
    %1808 = vmatpush1.msra.mxu0 0.0
    %1809 = vmatprep.subr.mxu0 0.0
    %1810 = vmatpush1.msra.mxu0 0.0
    %1811 = vmatprep.subr.mxu0 0.0
    %1812 = vmatpush1.msra.mxu0 0.0
    %1813 = vmatprep.subr.mxu0 0.0
    %1814 = vmatpush1.msra.mxu0 0.0
    %1815 = vmatprep.subr.mxu0 0.0
    %1816 = vmatpush1.msra.mxu0 0.0
    %1817 = vmatprep.subr.mxu0 0.0
    %1818 = vmatpush1.msra.mxu0 0.0
    %1819 = vmatprep.subr.mxu0 0.0
    %1820 = vmatpush1.msra.mxu0 0.0
    %1821 = vmatprep.subr.mxu0 0.0
    %1822 = vmatpush1.msra.mxu0 0.0
    %1823 = vmatprep.subr.mxu0 0.0
    %1824 = vmatpush1.msra.mxu0 0.0
    %1825 = vmatprep.subr.mxu0 0.0
    %1826 = vmatpush1.msra.mxu0 0.0
    %1827 = vmatprep.subr.mxu0 0.0
    %1828 = vmatpush1.msra.mxu0 0.0
    %1829 = vmatprep.subr.mxu0 0.0
    %1830 = vmatpush1.msra.mxu0 0.0
    %1831 = vmatprep.subr.mxu0 0.0
    %1832 = vmatpush1.msra.mxu0 0.0
    %1833 = vmatprep.subr.mxu0 0.0
    %1834 = vmatpush1.msra.mxu0 0.0
    %1835 = vmatprep.subr.mxu0 0.0
    %1836 = vmatpush1.msra.mxu0 0.0
    %1837 = vmatprep.subr.mxu0 0.0
    %1838 = vmatpush1.msra.mxu0 0.0
    %1839 = vmatprep.subr.mxu0 0.0
    %1840 = vmatpush1.msra.mxu0 0.0
    %1841 = vmatprep.subr.mxu0 0.0
    %1842 = vmatpush1.msra.mxu0 0.0
    %1843 = vmatprep.subr.mxu0 0.0
    %1844 = vmatpush1.msra.mxu0 0.0
    %1845 = vmatprep.subr.mxu0 0.0
    %1846 = vmatpush1.msra.mxu0 0.0
    %1847 = vmatprep.subr.mxu0 0.0
    %1848 = vmatpush1.msra.mxu0 0.0
    %1849 = vmatprep.subr.mxu0 0.0
    %1850 = vmatpush1.msra.mxu0 0.0
    %1851 = vmatprep.mubr.f32.mxu0 0.0
    %1852 = vmatmul.mubr.f32.gmra.mrb[0].mxu0 %v413
    %v1853 = vpop.f32.mrb[0].mxu0
    %v1854 = vadd.f32 0.0, %v1853
    %v1855 = vpop.f32.mrb[0].mxu0
    %1856 = vdwg.mxu0
    %v1858 = vsel %vm492, %v1783, 0
    %v1861 = vsel %vm492, %v1785, 0
    %v1864 = vsel %vm492, %v1854, 0
    %1866 = vmatprep.subr.mxu0 %v1861
    %1867 = vmatpush1.msra.mxu0 %v1858
    %1868 = vmatprep.subr.mxu0 0.0
    %1869 = vmatpush1.msra.mxu0 0.0
    %1870 = vmatprep.subr.mxu0 0.0
    %1871 = vmatpush1.msra.mxu0 0.0
    %1872 = vmatprep.subr.mxu0 0.0
    %1873 = vmatpush1.msra.mxu0 0.0
    %1874 = vmatprep.subr.mxu0 0.0
    %1875 = vmatpush1.msra.mxu0 0.0
    %1876 = vmatprep.subr.mxu0 0.0
    %1877 = vmatpush1.msra.mxu0 0.0
    %1878 = vmatprep.subr.mxu0 0.0
    %1879 = vmatpush1.msra.mxu0 0.0
    %1880 = vmatprep.subr.mxu0 0.0
    %1881 = vmatpush1.msra.mxu0 0.0
    %1882 = vmatprep.subr.mxu0 0.0
    %1883 = vmatpush1.msra.mxu0 0.0
    %1884 = vmatprep.subr.mxu0 0.0
    %1885 = vmatpush1.msra.mxu0 0.0
    %1886 = vmatprep.subr.mxu0 0.0
    %1887 = vmatpush1.msra.mxu0 0.0
    %1888 = vmatprep.subr.mxu0 0.0
    %1889 = vmatpush1.msra.mxu0 0.0
    %1890 = vmatprep.subr.mxu0 0.0
    %1891 = vmatpush1.msra.mxu0 0.0
    %1892 = vmatprep.subr.mxu0 0.0
    %1893 = vmatpush1.msra.mxu0 0.0
    %1894 = vmatprep.subr.mxu0 0.0
    %1895 = vmatpush1.msra.mxu0 0.0
    %1896 = vmatprep.subr.mxu0 0.0
    %1897 = vmatpush1.msra.mxu0 0.0
    %1898 = vmatprep.subr.mxu0 0.0
    %1899 = vmatpush1.msra.mxu0 0.0
    %1900 = vmatprep.subr.mxu0 0.0
    %1901 = vmatpush1.msra.mxu0 0.0
    %1902 = vmatprep.subr.mxu0 0.0
    %1903 = vmatpush1.msra.mxu0 0.0
    %1904 = vmatprep.subr.mxu0 0.0
    %1905 = vmatpush1.msra.mxu0 0.0
    %1906 = vmatprep.subr.mxu0 0.0
    %1907 = vmatpush1.msra.mxu0 0.0
    %1908 = vmatprep.subr.mxu0 0.0
    %1909 = vmatpush1.msra.mxu0 0.0
    %1910 = vmatprep.subr.mxu0 0.0
    %1911 = vmatpush1.msra.mxu0 0.0
    %1912 = vmatprep.subr.mxu0 0.0
    %1913 = vmatpush1.msra.mxu0 0.0
    %1914 = vmatprep.subr.mxu0 0.0
    %1915 = vmatpush1.msra.mxu0 0.0
    %1916 = vmatprep.subr.mxu0 0.0
    %1917 = vmatpush1.msra.mxu0 0.0
    %1918 = vmatprep.subr.mxu0 0.0
    %1919 = vmatpush1.msra.mxu0 0.0
    %1920 = vmatprep.subr.mxu0 0.0
    %1921 = vmatpush1.msra.mxu0 0.0
    %1922 = vmatprep.subr.mxu0 0.0
    %1923 = vmatpush1.msra.mxu0 0.0
    %1924 = vmatprep.subr.mxu0 0.0
    %1925 = vmatpush1.msra.mxu0 0.0
    %1926 = vmatprep.subr.mxu0 0.0
    %1927 = vmatpush1.msra.mxu0 0.0
    %1928 = vmatprep.subr.mxu0 0.0
    %1929 = vmatpush1.msra.mxu0 0.0
    %1930 = vmatprep.mubr.f32.mxu0 0.0
    %1931 = vmatmul.mubr.f32.gmra.mrb[0].mxu0 %v487
    %v1932 = vpop.f32.mrb[0].mxu0
    %v1933 = vadd.f32 0.0, %v1932
    %v1934 = vpop.f32.mrb[0].mxu0
    %v1935 = vadd.f32 0.0, %v1934
    %1936 = vmatprep.mubr.f32.mxu0 0.0
    %1937 = vmatmul.mubr.f32.gmra.mrb[0].mxu0 %v490
    %v1938 = vpop.f32.mrb[0].mxu0
    %v1939 = vadd.f32 0.0, %v1938
    %v1940 = vpop.f32.mrb[0].mxu0
    %v1941 = vadd.f32 0.0, %v1940
    %1942 = vdwg.mxu0
    %1943 = vmatprep.subr.mxu0 0.0
    %1944 = vmatpush1.msra.mxu0 %v1864
    %1945 = vmatprep.subr.mxu0 0.0
    %1946 = vmatpush1.msra.mxu0 0.0
    %1947 = vmatprep.subr.mxu0 0.0
    %1948 = vmatpush1.msra.mxu0 0.0
    %1949 = vmatprep.subr.mxu0 0.0
    %1950 = vmatpush1.msra.mxu0 0.0
    %1951 = vmatprep.subr.mxu0 0.0
    %1952 = vmatpush1.msra.mxu0 0.0
    %1953 = vmatprep.subr.mxu0 0.0
    %1954 = vmatpush1.msra.mxu0 0.0
    %1955 = vmatprep.subr.mxu0 0.0
    %1956 = vmatpush1.msra.mxu0 0.0
    %1957 = vmatprep.subr.mxu0 0.0
    %1958 = vmatpush1.msra.mxu0 0.0
    %1959 = vmatprep.subr.mxu0 0.0
    %1960 = vmatpush1.msra.mxu0 0.0
    %1961 = vmatprep.subr.mxu0 0.0
    %1962 = vmatpush1.msra.mxu0 0.0
    %1963 = vmatprep.subr.mxu0 0.0
    %1964 = vmatpush1.msra.mxu0 0.0
    %1965 = vmatprep.subr.mxu0 0.0
    %1966 = vmatpush1.msra.mxu0 0.0
    %1967 = vmatprep.subr.mxu0 0.0
    %1968 = vmatpush1.msra.mxu0 0.0
    %1969 = vmatprep.subr.mxu0 0.0
    %1970 = vmatpush1.msra.mxu0 0.0
    %1971 = vmatprep.subr.mxu0 0.0
    %1972 = vmatpush1.msra.mxu0 0.0
    %1973 = vmatprep.subr.mxu0 0.0
    %1974 = vmatpush1.msra.mxu0 0.0
    %1975 = vmatprep.subr.mxu0 0.0
    %1976 = vmatpush1.msra.mxu0 0.0
    %1977 = vmatprep.subr.mxu0 0.0
    %1978 = vmatpush1.msra.mxu0 0.0
    %1979 = vmatprep.subr.mxu0 0.0
    %1980 = vmatpush1.msra.mxu0 0.0
    %1981 = vmatprep.subr.mxu0 0.0
    %1982 = vmatpush1.msra.mxu0 0.0
    %1983 = vmatprep.subr.mxu0 0.0
    %1984 = vmatpush1.msra.mxu0 0.0
    %1985 = vmatprep.subr.mxu0 0.0
    %1986 = vmatpush1.msra.mxu0 0.0
    %1987 = vmatprep.subr.mxu0 0.0
    %1988 = vmatpush1.msra.mxu0 0.0
    %1989 = vmatprep.subr.mxu0 0.0
    %1990 = vmatpush1.msra.mxu0 0.0
    %1991 = vmatprep.subr.mxu0 0.0
    %1992 = vmatpush1.msra.mxu0 0.0
    %1993 = vmatprep.subr.mxu0 0.0
    %1994 = vmatpush1.msra.mxu0 0.0
    %1995 = vmatprep.subr.mxu0 0.0
    %1996 = vmatpush1.msra.mxu0 0.0
    %1997 = vmatprep.subr.mxu0 0.0
    %1998 = vmatpush1.msra.mxu0 0.0
    %1999 = vmatprep.subr.mxu0 0.0
    %2000 = vmatpush1.msra.mxu0 0.0
    %2001 = vmatprep.subr.mxu0 0.0
    %2002 = vmatpush1.msra.mxu0 0.0
    %2003 = vmatprep.subr.mxu0 0.0
    %2004 = vmatpush1.msra.mxu0 0.0
    %2005 = vmatprep.subr.mxu0 0.0
    %2006 = vmatpush1.msra.mxu0 0.0
    %2007 = vmatprep.mubr.f32.mxu0 0.0
    %2008 = vmatmul.mubr.f32.gmra.mrb[0].mxu0 %v487
    %v2009 = vpop.f32.mrb[0].mxu0
    %v2010 = vadd.f32 0.0, %v2009
    %v2011 = vpop.f32.mrb[0].mxu0
    %2012 = vmatprep.mubr.f32.mxu0 0.0
    %2013 = vmatmul.mubr.f32.gmra.mrb[0].mxu0 %v490
    %v2014 = vpop.f32.mrb[0].mxu0
    %v2015 = vadd.f32 0.0, %v2014
    %v2016 = vpop.f32.mrb[0].mxu0
    %2017 = vdwg.mxu0
    %v2018 = vld [vmem:[%s18] sm:$0x7]
    %v2020 = vlaneseq
    %v2021 = vshrl.u32 %v2020, 7
    %v2022 = vsub.s32 0, %v2021
    %v2023 = vrot.slane %v2018, %v2022
    %v2024 = vlaneseq
    %v2025 = vshrl.u32 %v2024, 7
    %v2026 = vsub.s32 1, %v2025
    %v2027 = vrot.slane %v2018, %v2026
    %v2028 = vlaneseq
    %v2029 = vshrl.u32 %v2028, 7
    %v2030 = vsub.s32 2, %v2029
    %v2031 = vrot.slane %v2018, %v2030
    %v2035 = vmul.f32 %v1933, %v2023
    %v2036 = vmul.f32 %v1935, %v2027
    %v2037 = vmul.f32 %v2010, %v2031
    %v2038 = vmul.f32 %v1939, %v2023
    %v2039 = vmul.f32 %v1941, %v2027
    %v2040 = vmul.f32 %v2015, %v2031
    %v2041 = vsub.f32 %v1631, %v2035
    %v2042 = vsub.f32 %v1633, %v2036
    %v2043 = vsub.f32 %v1708, %v2037
    %v2044 = vsub.f32 %v1637, %v2038
    %v2045 = vsub.f32 %v1639, %v2039
    %v2046 = vsub.f32 %v1713, %v2040
    %v2047 = vmul.f32 %v2041, %v2041
    %v2048 = vmul.f32 %v2042, %v2042
    %v2049 = vmul.f32 %v2043, %v2043
    %v2050 = vmul.f32 %v2044, %v2044
    %v2051 = vmul.f32 %v2045, %v2045
    %v2052 = vmul.f32 %v2046, %v2046
    %2053 = vmatprep.subr.mxu0 %v2048
    %2054 = vmatpush1.msra.mxu0 %v2047
    %2055 = vmatprep.subr.mxu0 %v2051
    %2056 = vmatpush1.msra.mxu0 %v2050
    %2057 = vmatprep.subr.mxu0 0.0
    %2058 = vmatpush1.msra.mxu0 0.0
    %2059 = vmatprep.subr.mxu0 0.0
    %2060 = vmatpush1.msra.mxu0 0.0
    %2061 = vmatprep.subr.mxu0 0.0
    %2062 = vmatpush1.msra.mxu0 0.0
    %2063 = vmatprep.subr.mxu0 0.0
    %2064 = vmatpush1.msra.mxu0 0.0
    %2065 = vmatprep.subr.mxu0 0.0
    %2066 = vmatpush1.msra.mxu0 0.0
    %2067 = vmatprep.subr.mxu0 0.0
    %2068 = vmatpush1.msra.mxu0 0.0
    %2069 = vmatprep.subr.mxu0 0.0
    %2070 = vmatpush1.msra.mxu0 0.0
    %2071 = vmatprep.subr.mxu0 0.0
    %2072 = vmatpush1.msra.mxu0 0.0
    %2073 = vmatprep.subr.mxu0 0.0
    %2074 = vmatpush1.msra.mxu0 0.0
    %2075 = vmatprep.subr.mxu0 0.0
    %2076 = vmatpush1.msra.mxu0 0.0
    %2077 = vmatprep.subr.mxu0 0.0
    %2078 = vmatpush1.msra.mxu0 0.0
    %2079 = vmatprep.subr.mxu0 0.0
    %2080 = vmatpush1.msra.mxu0 0.0
    %2081 = vmatprep.subr.mxu0 0.0
    %2082 = vmatpush1.msra.mxu0 0.0
    %2083 = vmatprep.subr.mxu0 0.0
    %2084 = vmatpush1.msra.mxu0 0.0
    %2085 = vmatprep.subr.mxu0 0.0
    %2086 = vmatpush1.msra.mxu0 0.0
    %2087 = vmatprep.subr.mxu0 0.0
    %2088 = vmatpush1.msra.mxu0 0.0
    %2089 = vmatprep.subr.mxu0 0.0
    %2090 = vmatpush1.msra.mxu0 0.0
    %2091 = vmatprep.subr.mxu0 0.0
    %2092 = vmatpush1.msra.mxu0 0.0
    %2093 = vmatprep.subr.mxu0 0.0
    %2094 = vmatpush1.msra.mxu0 0.0
    %2095 = vmatprep.subr.mxu0 0.0
    %2096 = vmatpush1.msra.mxu0 0.0
    %2097 = vmatprep.subr.mxu0 0.0
    %2098 = vmatpush1.msra.mxu0 0.0
    %2099 = vmatprep.subr.mxu0 0.0
    %2100 = vmatpush1.msra.mxu0 0.0
    %2101 = vmatprep.subr.mxu0 0.0
    %2102 = vmatpush1.msra.mxu0 0.0
    %2103 = vmatprep.subr.mxu0 0.0
    %2104 = vmatpush1.msra.mxu0 0.0
    %2105 = vmatprep.subr.mxu0 0.0
    %2106 = vmatpush1.msra.mxu0 0.0
    %2107 = vmatprep.subr.mxu0 0.0
    %2108 = vmatpush1.msra.mxu0 0.0
    %2109 = vmatprep.subr.mxu0 0.0
    %2110 = vmatpush1.msra.mxu0 0.0
    %2111 = vmatprep.subr.mxu0 0.0
    %2112 = vmatpush1.msra.mxu0 0.0
    %2113 = vmatprep.subr.mxu0 0.0
    %2114 = vmatpush1.msra.mxu0 0.0
    %2115 = vmatprep.subr.mxu0 0.0
    %2116 = vmatpush1.msra.mxu0 0.0
    %2117 = vmatprep.mubr.f32.mxu0 0.0
    %2118 = vmatmul.mubr.f32.gmra.mrb[0].mxu0 %v413
    %v2119 = vpop.f32.mrb[0].mxu0
    %v2120 = vadd.f32 1e-05, %v2119
    %v2121 = vpop.f32.mrb[0].mxu0
    %v2122 = vadd.f32 1e-05, %v2121
    %2123 = vdwg.mxu0
    %2124 = vmatprep.subr.mxu0 0.0
    %2125 = vmatpush1.msra.mxu0 %v2049
    %2126 = vmatprep.subr.mxu0 0.0
    %2127 = vmatpush1.msra.mxu0 %v2052
    %2128 = vmatprep.subr.mxu0 0.0
    %2129 = vmatpush1.msra.mxu0 0.0
    %2130 = vmatprep.subr.mxu0 0.0
    %2131 = vmatpush1.msra.mxu0 0.0
    %2132 = vmatprep.subr.mxu0 0.0
    %2133 = vmatpush1.msra.mxu0 0.0
    %2134 = vmatprep.subr.mxu0 0.0
    %2135 = vmatpush1.msra.mxu0 0.0
    %2136 = vmatprep.subr.mxu0 0.0
    %2137 = vmatpush1.msra.mxu0 0.0
    %2138 = vmatprep.subr.mxu0 0.0
    %2139 = vmatpush1.msra.mxu0 0.0
    %2140 = vmatprep.subr.mxu0 0.0
    %2141 = vmatpush1.msra.mxu0 0.0
    %2142 = vmatprep.subr.mxu0 0.0
    %2143 = vmatpush1.msra.mxu0 0.0
    %2144 = vmatprep.subr.mxu0 0.0
    %2145 = vmatpush1.msra.mxu0 0.0
    %2146 = vmatprep.subr.mxu0 0.0
    %2147 = vmatpush1.msra.mxu0 0.0
    %2148 = vmatprep.subr.mxu0 0.0
    %2149 = vmatpush1.msra.mxu0 0.0
    %2150 = vmatprep.subr.mxu0 0.0
    %2151 = vmatpush1.msra.mxu0 0.0
    %2152 = vmatprep.subr.mxu0 0.0
    %2153 = vmatpush1.msra.mxu0 0.0
    %2154 = vmatprep.subr.mxu0 0.0
    %2155 = vmatpush1.msra.mxu0 0.0
    %2156 = vmatprep.subr.mxu0 0.0
    %2157 = vmatpush1.msra.mxu0 0.0
    %2158 = vmatprep.subr.mxu0 0.0
    %2159 = vmatpush1.msra.mxu0 0.0
    %2160 = vmatprep.subr.mxu0 0.0
    %2161 = vmatpush1.msra.mxu0 0.0
    %2162 = vmatprep.subr.mxu0 0.0
    %2163 = vmatpush1.msra.mxu0 0.0
    %2164 = vmatprep.subr.mxu0 0.0
    %2165 = vmatpush1.msra.mxu0 0.0
    %2166 = vmatprep.subr.mxu0 0.0
    %2167 = vmatpush1.msra.mxu0 0.0
    %2168 = vmatprep.subr.mxu0 0.0
    %2169 = vmatpush1.msra.mxu0 0.0
    %2170 = vmatprep.subr.mxu0 0.0
    %2171 = vmatpush1.msra.mxu0 0.0
    %2172 = vmatprep.subr.mxu0 0.0
    %2173 = vmatpush1.msra.mxu0 0.0
    %2174 = vmatprep.subr.mxu0 0.0
    %2175 = vmatpush1.msra.mxu0 0.0
    %2176 = vmatprep.subr.mxu0 0.0
    %2177 = vmatpush1.msra.mxu0 0.0
    %2178 = vmatprep.subr.mxu0 0.0
    %2179 = vmatpush1.msra.mxu0 0.0
    %2180 = vmatprep.subr.mxu0 0.0
    %2181 = vmatpush1.msra.mxu0 0.0
    %2182 = vmatprep.subr.mxu0 0.0
    %2183 = vmatpush1.msra.mxu0 0.0
    %2184 = vmatprep.subr.mxu0 0.0
    %2185 = vmatpush1.msra.mxu0 0.0
    %2186 = vmatprep.subr.mxu0 0.0
    %2187 = vmatpush1.msra.mxu0 0.0
    %2188 = vmatprep.mubr.f32.mxu0 0.0
    %2189 = vmatmul.mubr.f32.gmra.mrb[0].mxu0 %v413
    %v2190 = vpop.f32.mrb[0].mxu0
    %v2191 = vadd.f32 1e-05, %v2190
    %v2192 = vpop.f32.mrb[0].mxu0
    %2193 = vdwg.mxu0
    %v2194 = vrsqrt.pop %v2120
    %v2195 = vrsqrt.pop %v2122
    %v2196 = vrsqrt.pop %v2191
    %v2197 = vld [vmem:[%s16] sm:$0x7]
    %v2199 = vlaneseq
    %v2200 = vshrl.u32 %v2199, 7
    %v2201 = vsub.s32 0, %v2200
    %v2202 = vrot.slane %v2197, %v2201
    %v2203 = vlaneseq
    %v2204 = vshrl.u32 %v2203, 7
    %v2205 = vsub.s32 1, %v2204
    %v2206 = vrot.slane %v2197, %v2205
    %v2207 = vlaneseq
    %v2208 = vshrl.u32 %v2207, 7
    %v2209 = vsub.s32 2, %v2208
    %v2210 = vrot.slane %v2197, %v2209
    %v2214 = vmul.f32 %v2202, %v2041
    %v2215 = vmul.f32 %v2206, %v2042
    %v2216 = vmul.f32 %v2210, %v2043
    %v2217 = vmul.f32 %v2202, %v2044
    %v2218 = vmul.f32 %v2206, %v2045
    %v2219 = vmul.f32 %v2210, %v2046
    %v2221 = vsel %vm492, %v2194, 0
    %v2224 = vsel %vm492, %v2195, 0
    %v2227 = vsel %vm492, %v2196, 0
    %2229 = vmatprep.subr.mxu0 %v2224
    %2230 = vmatpush1.msra.mxu0 %v2221
    %2231 = vmatprep.subr.mxu0 0.0
    %2232 = vmatpush1.msra.mxu0 0.0
    %2233 = vmatprep.subr.mxu0 0.0
    %2234 = vmatpush1.msra.mxu0 0.0
    %2235 = vmatprep.subr.mxu0 0.0
    %2236 = vmatpush1.msra.mxu0 0.0
    %2237 = vmatprep.subr.mxu0 0.0
    %2238 = vmatpush1.msra.mxu0 0.0
    %2239 = vmatprep.subr.mxu0 0.0
    %2240 = vmatpush1.msra.mxu0 0.0
    %2241 = vmatprep.subr.mxu0 0.0
    %2242 = vmatpush1.msra.mxu0 0.0
    %2243 = vmatprep.subr.mxu0 0.0
    %2244 = vmatpush1.msra.mxu0 0.0
    %2245 = vmatprep.subr.mxu0 0.0
    %2246 = vmatpush1.msra.mxu0 0.0
    %2247 = vmatprep.subr.mxu0 0.0
    %2248 = vmatpush1.msra.mxu0 0.0
    %2249 = vmatprep.subr.mxu0 0.0
    %2250 = vmatpush1.msra.mxu0 0.0
    %2251 = vmatprep.subr.mxu0 0.0
    %2252 = vmatpush1.msra.mxu0 0.0
    %2253 = vmatprep.subr.mxu0 0.0
    %2254 = vmatpush1.msra.mxu0 0.0
    %2255 = vmatprep.subr.mxu0 0.0
    %2256 = vmatpush1.msra.mxu0 0.0
    %2257 = vmatprep.subr.mxu0 0.0
    %2258 = vmatpush1.msra.mxu0 0.0
    %2259 = vmatprep.subr.mxu0 0.0
    %2260 = vmatpush1.msra.mxu0 0.0
    %2261 = vmatprep.subr.mxu0 0.0
    %2262 = vmatpush1.msra.mxu0 0.0
    %2263 = vmatprep.subr.mxu0 0.0
    %2264 = vmatpush1.msra.mxu0 0.0
    %2265 = vmatprep.subr.mxu0 0.0
    %2266 = vmatpush1.msra.mxu0 0.0
    %2267 = vmatprep.subr.mxu0 0.0
    %2268 = vmatpush1.msra.mxu0 0.0
    %2269 = vmatprep.subr.mxu0 0.0
    %2270 = vmatpush1.msra.mxu0 0.0
    %2271 = vmatprep.subr.mxu0 0.0
    %2272 = vmatpush1.msra.mxu0 0.0
    %2273 = vmatprep.subr.mxu0 0.0
    %2274 = vmatpush1.msra.mxu0 0.0
    %2275 = vmatprep.subr.mxu0 0.0
    %2276 = vmatpush1.msra.mxu0 0.0
    %2277 = vmatprep.subr.mxu0 0.0
    %2278 = vmatpush1.msra.mxu0 0.0
    %2279 = vmatprep.subr.mxu0 0.0
    %2280 = vmatpush1.msra.mxu0 0.0
    %2281 = vmatprep.subr.mxu0 0.0
    %2282 = vmatpush1.msra.mxu0 0.0
    %2283 = vmatprep.subr.mxu0 0.0
    %2284 = vmatpush1.msra.mxu0 0.0
    %2285 = vmatprep.subr.mxu0 0.0
    %2286 = vmatpush1.msra.mxu0 0.0
    %2287 = vmatprep.subr.mxu0 0.0
    %2288 = vmatpush1.msra.mxu0 0.0
    %2289 = vmatprep.subr.mxu0 0.0
    %2290 = vmatpush1.msra.mxu0 0.0
    %2291 = vmatprep.subr.mxu0 0.0
    %2292 = vmatpush1.msra.mxu0 0.0
    %2293 = vmatprep.mubr.f32.mxu0 0.0
    %2294 = vmatmul.mubr.f32.gmra.mrb[0].mxu0 %v487
    %v2295 = vpop.f32.mrb[0].mxu0
    %v2296 = vadd.f32 0.0, %v2295
    %v2297 = vpop.f32.mrb[0].mxu0
    %v2298 = vadd.f32 0.0, %v2297
    %2299 = vmatprep.mubr.f32.mxu0 0.0
    %2300 = vmatmul.mubr.f32.gmra.mrb[0].mxu0 %v490
    %v2301 = vpop.f32.mrb[0].mxu0
    %v2302 = vadd.f32 0.0, %v2301
    %v2303 = vpop.f32.mrb[0].mxu0
    %v2304 = vadd.f32 0.0, %v2303
    %2305 = vdwg.mxu0
    %2306 = vmatprep.subr.mxu0 0.0
    %2307 = vmatpush1.msra.mxu0 %v2227
    %2308 = vmatprep.subr.mxu0 0.0
    %2309 = vmatpush1.msra.mxu0 0.0
    %2310 = vmatprep.subr.mxu0 0.0
    %2311 = vmatpush1.msra.mxu0 0.0
    %2312 = vmatprep.subr.mxu0 0.0
    %2313 = vmatpush1.msra.mxu0 0.0
    %2314 = vmatprep.subr.mxu0 0.0
    %2315 = vmatpush1.msra.mxu0 0.0
    %2316 = vmatprep.subr.mxu0 0.0
    %2317 = vmatpush1.msra.mxu0 0.0
    %2318 = vmatprep.subr.mxu0 0.0
    %2319 = vmatpush1.msra.mxu0 0.0
    %2320 = vmatprep.subr.mxu0 0.0
    %2321 = vmatpush1.msra.mxu0 0.0
    %2322 = vmatprep.subr.mxu0 0.0
    %2323 = vmatpush1.msra.mxu0 0.0
    %2324 = vmatprep.subr.mxu0 0.0
    %2325 = vmatpush1.msra.mxu0 0.0
    %2326 = vmatprep.subr.mxu0 0.0
    %2327 = vmatpush1.msra.mxu0 0.0
    %2328 = vmatprep.subr.mxu0 0.0
    %2329 = vmatpush1.msra.mxu0 0.0
    %2330 = vmatprep.subr.mxu0 0.0
    %2331 = vmatpush1.msra.mxu0 0.0
    %2332 = vmatprep.subr.mxu0 0.0
    %2333 = vmatpush1.msra.mxu0 0.0
    %2334 = vmatprep.subr.mxu0 0.0
    %2335 = vmatpush1.msra.mxu0 0.0
    %2336 = vmatprep.subr.mxu0 0.0
    %2337 = vmatpush1.msra.mxu0 0.0
    %2338 = vmatprep.subr.mxu0 0.0
    %2339 = vmatpush1.msra.mxu0 0.0
    %2340 = vmatprep.subr.mxu0 0.0
    %2341 = vmatpush1.msra.mxu0 0.0
    %2342 = vmatprep.subr.mxu0 0.0
    %2343 = vmatpush1.msra.mxu0 0.0
    %2344 = vmatprep.subr.mxu0 0.0
    %2345 = vmatpush1.msra.mxu0 0.0
    %2346 = vmatprep.subr.mxu0 0.0
    %2347 = vmatpush1.msra.mxu0 0.0
    %2348 = vmatprep.subr.mxu0 0.0
    %2349 = vmatpush1.msra.mxu0 0.0
    %2350 = vmatprep.subr.mxu0 0.0
    %2351 = vmatpush1.msra.mxu0 0.0
    %2352 = vmatprep.subr.mxu0 0.0
    %2353 = vmatpush1.msra.mxu0 0.0
    %2354 = vmatprep.subr.mxu0 0.0
    %2355 = vmatpush1.msra.mxu0 0.0
    %2356 = vmatprep.subr.mxu0 0.0
    %2357 = vmatpush1.msra.mxu0 0.0
    %2358 = vmatprep.subr.mxu0 0.0
    %2359 = vmatpush1.msra.mxu0 0.0
    %2360 = vmatprep.subr.mxu0 0.0
    %2361 = vmatpush1.msra.mxu0 0.0
    %2362 = vmatprep.subr.mxu0 0.0
    %2363 = vmatpush1.msra.mxu0 0.0
    %2364 = vmatprep.subr.mxu0 0.0
    %2365 = vmatpush1.msra.mxu0 0.0
    %2366 = vmatprep.subr.mxu0 0.0
    %2367 = vmatpush1.msra.mxu0 0.0
    %2368 = vmatprep.subr.mxu0 0.0
    %2369 = vmatpush1.msra.mxu0 0.0
    %2370 = vmatprep.mubr.f32.mxu0 0.0
    %2371 = vmatmul.mubr.f32.gmra.mrb[0].mxu0 %v487
    %v2372 = vpop.f32.mrb[0].mxu0
    %v2373 = vadd.f32 0.0, %v2372
    %v2374 = vpop.f32.mrb[0].mxu0
    %2375 = vmatprep.mubr.f32.mxu0 0.0
    %2376 = vmatmul.mubr.f32.gmra.mrb[0].mxu0 %v490
    %v2377 = vpop.f32.mrb[0].mxu0
    %v2378 = vadd.f32 0.0, %v2377
    %v2379 = vpop.f32.mrb[0].mxu0
    %2380 = vdwg.mxu0
    %v2381 = vmul.f32 %v2214, %v2296
    %v2382 = vmul.f32 %v2215, %v2298
    %v2383 = vmul.f32 %v2216, %v2373
    %v2384 = vmul.f32 %v2217, %v2302
    %v2385 = vmul.f32 %v2218, %v2304
    %v2386 = vmul.f32 %v2219, %v2378
    %v2387 = vld [vmem:[%s17] sm:$0x7]
    %v2389 = vlaneseq
    %v2390 = vshrl.u32 %v2389, 7
    %v2391 = vsub.s32 0, %v2390
    %v2392 = vrot.slane %v2387, %v2391
    %v2393 = vlaneseq
    %v2394 = vshrl.u32 %v2393, 7
    %v2395 = vsub.s32 1, %v2394
    %v2396 = vrot.slane %v2387, %v2395
    %v2397 = vlaneseq
    %v2398 = vshrl.u32 %v2397, 7
    %v2399 = vsub.s32 2, %v2398
    %v2400 = vrot.slane %v2387, %v2399
    %v2404 = vadd.f32 %v2381, %v2392
    %v2405 = vadd.f32 %v2382, %v2396
    %v2406 = vadd.f32 %v2383, %v2400
    %v2407 = vadd.f32 %v2384, %v2392
    %v2408 = vadd.f32 %v2385, %v2396
    %v2409 = vadd.f32 %v2386, %v2400
    %v2410 = vmax.f32 %v2404, 0.0
    %v2411 = vmax.f32 %v2405, 0.0
    %v2412 = vmax.f32 %v2406, 0.0
    %v2413 = vmax.f32 %v2407, 0.0
    %v2414 = vmax.f32 %v2408, 0.0
    %v2415 = vmax.f32 %v2409, 0.0
    %2416 = vmatprep.subr.mxu0 %v2411
    %2417 = vmatpush1.msra.mxu0 %v2410
    %2418 = vmatprep.subr.mxu0 %v2414
    %2419 = vmatpush1.msra.mxu0 %v2413
    %2420 = vmatprep.subr.mxu0 0.0
    %2421 = vmatpush1.msra.mxu0 0.0
    %2422 = vmatprep.subr.mxu0 0.0
    %2423 = vmatpush1.msra.mxu0 0.0
    %2424 = vmatprep.subr.mxu0 0.0
    %2425 = vmatpush1.msra.mxu0 0.0
    %2426 = vmatprep.subr.mxu0 0.0
    %2427 = vmatpush1.msra.mxu0 0.0
    %2428 = vmatprep.subr.mxu0 0.0
    %2429 = vmatpush1.msra.mxu0 0.0
    %2430 = vmatprep.subr.mxu0 0.0
    %2431 = vmatpush1.msra.mxu0 0.0
    %2432 = vmatprep.subr.mxu0 0.0
    %2433 = vmatpush1.msra.mxu0 0.0
    %2434 = vmatprep.subr.mxu0 0.0
    %2435 = vmatpush1.msra.mxu0 0.0
    %2436 = vmatprep.subr.mxu0 0.0
    %2437 = vmatpush1.msra.mxu0 0.0
    %2438 = vmatprep.subr.mxu0 0.0
    %2439 = vmatpush1.msra.mxu0 0.0
    %2440 = vmatprep.subr.mxu0 0.0
    %2441 = vmatpush1.msra.mxu0 0.0
    %2442 = vmatprep.subr.mxu0 0.0
    %2443 = vmatpush1.msra.mxu0 0.0
    %2444 = vmatprep.subr.mxu0 0.0
    %2445 = vmatpush1.msra.mxu0 0.0
    %2446 = vmatprep.subr.mxu0 0.0
    %2447 = vmatpush1.msra.mxu0 0.0
    %2448 = vmatprep.subr.mxu0 0.0
    %2449 = vmatpush1.msra.mxu0 0.0
    %2450 = vmatprep.subr.mxu0 0.0
    %2451 = vmatpush1.msra.mxu0 0.0
    %2452 = vmatprep.subr.mxu0 0.0
    %2453 = vmatpush1.msra.mxu0 0.0
    %2454 = vmatprep.subr.mxu0 0.0
    %2455 = vmatpush1.msra.mxu0 0.0
    %2456 = vmatprep.subr.mxu0 0.0
    %2457 = vmatpush1.msra.mxu0 0.0
    %2458 = vmatprep.subr.mxu0 0.0
    %2459 = vmatpush1.msra.mxu0 0.0
    %2460 = vmatprep.subr.mxu0 0.0
    %2461 = vmatpush1.msra.mxu0 0.0
    %2462 = vmatprep.subr.mxu0 0.0
    %2463 = vmatpush1.msra.mxu0 0.0
    %2464 = vmatprep.subr.mxu0 0.0
    %2465 = vmatpush1.msra.mxu0 0.0
    %2466 = vmatprep.subr.mxu0 0.0
    %2467 = vmatpush1.msra.mxu0 0.0
    %2468 = vmatprep.subr.mxu0 0.0
    %2469 = vmatpush1.msra.mxu0 0.0
    %2470 = vmatprep.subr.mxu0 0.0
    %2471 = vmatpush1.msra.mxu0 0.0
    %2472 = vmatprep.subr.mxu0 0.0
    %2473 = vmatpush1.msra.mxu0 0.0
    %2474 = vmatprep.subr.mxu0 0.0
    %2475 = vmatpush1.msra.mxu0 0.0
    %2476 = vmatprep.subr.mxu0 0.0
    %2477 = vmatpush1.msra.mxu0 0.0
    %2478 = vmatprep.subr.mxu0 0.0
    %2479 = vmatpush1.msra.mxu0 0.0
    %2480 = vmatprep.mubr.f32.mxu0 0.0
    %2481 = vmatmul.mubr.f32.gmra.mrb[0].mxu0 %v413
    %v2482 = vpop.f32.mrb[0].mxu0
    %v2483 = vadd.f32 0.0, %v2482
    %v2484 = vpop.f32.mrb[0].mxu0
    %v2485 = vadd.f32 0.0, %v2484
    %2486 = vdwg.mxu0
    %2487 = vmatprep.subr.mxu0 0.0
    %2488 = vmatpush1.msra.mxu0 %v2412
    %2489 = vmatprep.subr.mxu0 0.0
    %2490 = vmatpush1.msra.mxu0 %v2415
    %2491 = vmatprep.subr.mxu0 0.0
    %2492 = vmatpush1.msra.mxu0 0.0
    %2493 = vmatprep.subr.mxu0 0.0
    %2494 = vmatpush1.msra.mxu0 0.0
    %2495 = vmatprep.subr.mxu0 0.0
    %2496 = vmatpush1.msra.mxu0 0.0
    %2497 = vmatprep.subr.mxu0 0.0
    %2498 = vmatpush1.msra.mxu0 0.0
    %2499 = vmatprep.subr.mxu0 0.0
    %2500 = vmatpush1.msra.mxu0 0.0
    %2501 = vmatprep.subr.mxu0 0.0
    %2502 = vmatpush1.msra.mxu0 0.0
    %2503 = vmatprep.subr.mxu0 0.0
    %2504 = vmatpush1.msra.mxu0 0.0
    %2505 = vmatprep.subr.mxu0 0.0
    %2506 = vmatpush1.msra.mxu0 0.0
    %2507 = vmatprep.subr.mxu0 0.0
    %2508 = vmatpush1.msra.mxu0 0.0
    %2509 = vmatprep.subr.mxu0 0.0
    %2510 = vmatpush1.msra.mxu0 0.0
    %2511 = vmatprep.subr.mxu0 0.0
    %2512 = vmatpush1.msra.mxu0 0.0
    %2513 = vmatprep.subr.mxu0 0.0
    %2514 = vmatpush1.msra.mxu0 0.0
    %2515 = vmatprep.subr.mxu0 0.0
    %2516 = vmatpush1.msra.mxu0 0.0
    %2517 = vmatprep.subr.mxu0 0.0
    %2518 = vmatpush1.msra.mxu0 0.0
    %2519 = vmatprep.subr.mxu0 0.0
    %2520 = vmatpush1.msra.mxu0 0.0
    %2521 = vmatprep.subr.mxu0 0.0
    %2522 = vmatpush1.msra.mxu0 0.0
    %2523 = vmatprep.subr.mxu0 0.0
    %2524 = vmatpush1.msra.mxu0 0.0
    %2525 = vmatprep.subr.mxu0 0.0
    %2526 = vmatpush1.msra.mxu0 0.0
    %2527 = vmatprep.subr.mxu0 0.0
    %2528 = vmatpush1.msra.mxu0 0.0
    %2529 = vmatprep.subr.mxu0 0.0
    %2530 = vmatpush1.msra.mxu0 0.0
    %2531 = vmatprep.subr.mxu0 0.0
    %2532 = vmatpush1.msra.mxu0 0.0
    %2533 = vmatprep.subr.mxu0 0.0
    %2534 = vmatpush1.msra.mxu0 0.0
    %2535 = vmatprep.subr.mxu0 0.0
    %2536 = vmatpush1.msra.mxu0 0.0
    %2537 = vmatprep.subr.mxu0 0.0
    %2538 = vmatpush1.msra.mxu0 0.0
    %2539 = vmatprep.subr.mxu0 0.0
    %2540 = vmatpush1.msra.mxu0 0.0
    %2541 = vmatprep.subr.mxu0 0.0
    %2542 = vmatpush1.msra.mxu0 0.0
    %2543 = vmatprep.subr.mxu0 0.0
    %2544 = vmatpush1.msra.mxu0 0.0
    %2545 = vmatprep.subr.mxu0 0.0
    %2546 = vmatpush1.msra.mxu0 0.0
    %2547 = vmatprep.subr.mxu0 0.0
    %2548 = vmatpush1.msra.mxu0 0.0
    %2549 = vmatprep.subr.mxu0 0.0
    %2550 = vmatpush1.msra.mxu0 0.0
    %2551 = vmatprep.mubr.f32.mxu0 0.0
    %2552 = vmatmul.mubr.f32.gmra.mrb[0].mxu0 %v413
    %v2553 = vpop.f32.mrb[0].mxu0
    %v2554 = vadd.f32 0.0, %v2553
    %v2555 = vpop.f32.mrb[0].mxu0
    %2556 = vdwg.mxu0
    %v2557 = vpack.c.bf16 %v2483, %v2483
    %v2558 = vpack.c.bf16 %v2485, %v2485
    %v2559 = vpack.c.bf16 %v2554, %v2554
    %v2560 = vld [vmem:[#allocation17] sm:$0xff]
    %v2561 = vld [vmem:[#allocation17 + $0x8] sm:$0xff]
    %v2562 = vld [vmem:[#allocation17 + $0x10] sm:$0xff]
    %v2563 = vld [vmem:[#allocation17 + $0x18] sm:$0xff]
    %v2564 = vld [vmem:[#allocation17 + $0x20] sm:$0xff]
    %v2565 = vld [vmem:[#allocation17 + $0x28] sm:$0xff]
    %v2566 = vld [vmem:[#allocation17 + $0x30] sm:$0xff]
    %v2567 = vld [vmem:[#allocation17 + $0x38] sm:$0xff]
    %v2568 = vld [vmem:[#allocation17 + $0x40] sm:$0xff]
    %v2569 = vld [vmem:[#allocation17 + $0x48] sm:$0xff]
    %v2570 = vld [vmem:[#allocation17 + $0x50] sm:$0xff]
    %v2571 = vld [vmem:[#allocation17 + $0x58] sm:$0xff]
    %v2572 = vld [vmem:[#allocation17 + $0x60] sm:$0xff]
    %v2573 = vld [vmem:[#allocation17 + $0x68] sm:$0xff]
    %v2574 = vld [vmem:[#allocation17 + $0x70] sm:$0xff]
    %v2575 = vld [vmem:[#allocation17 + $0x78] sm:$0xff]
    %v2576 = vld [vmem:[#allocation17 + $0x80] sm:$0xff]
    %v2577 = vld [vmem:[#allocation17 + $0x88] sm:$0xff]
    %v2578 = vld [vmem:[#allocation17 + $0x90] sm:$0xff]
    %v2579 = vld [vmem:[#allocation17 + $0x98] sm:$0xff]
    %v2580 = vld [vmem:[#allocation17 + $0xa0] sm:$0xff]
    %v2581 = vld [vmem:[#allocation17 + $0xa8] sm:$0xff]
    %v2582 = vld [vmem:[#allocation17 + $0xb0] sm:$0xff]
    %v2583 = vld [vmem:[#allocation17 + $0xb8] sm:$0xff]
    %v2584 = vld [vmem:[#allocation17 + $0xc0] sm:$0xff]
    %v2585 = vld [vmem:[#allocation17 + $0xc8] sm:$0xff]
    %v2586 = vld [vmem:[#allocation17 + $0xd0] sm:$0xff]
    %v2587 = vld [vmem:[#allocation17 + $0xd8] sm:$0xff]
    %v2588 = vld [vmem:[#allocation17 + $0xe0] sm:$0xff]
    %v2589 = vld [vmem:[#allocation17 + $0xe8] sm:$0xff]
    %v2590 = vld [vmem:[#allocation17 + $0xf0] sm:$0xff]
    %v2591 = vld [vmem:[#allocation17 + $0xf8] sm:$0xff]
    %v2592 = vld [vmem:[#allocation17 + $0x100] sm:$0xff]
    %v2593 = vld [vmem:[#allocation17 + $0x108] sm:$0xff]
    %v2594 = vld [vmem:[#allocation17 + $0x110] sm:$0xff]
    %v2595 = vld [vmem:[#allocation17 + $0x118] sm:$0xff]
    %v2596 = vld [vmem:[#allocation17 + $0x120] sm:$0xff]
    %v2597 = vld [vmem:[#allocation17 + $0x128] sm:$0xff]
    %v2598 = vld [vmem:[#allocation17 + $0x130] sm:$0xff]
    %v2599 = vld [vmem:[#allocation17 + $0x138] sm:$0xff]
    %v2600 = vld [vmem:[#allocation17 + $0x140] sm:$0xff]
    %v2601 = vld [vmem:[#allocation17 + $0x148] sm:$0xff]
    %v2602 = vld [vmem:[#allocation17 + $0x150] sm:$0xff]
    %v2603 = vld [vmem:[#allocation17 + $0x158] sm:$0xff]
    %v2604 = vld [vmem:[#allocation17 + $0x160] sm:$0xff]
    %v2605 = vld [vmem:[#allocation17 + $0x168] sm:$0xff]
    %v2606 = vld [vmem:[#allocation17 + $0x170] sm:$0xff]
    %v2607 = vld [vmem:[#allocation17 + $0x178] sm:$0xff]
    %v2608 = vld [vmem:[#allocation17 + $0x180] sm:$0xff]
    %v2609 = vld [vmem:[#allocation17 + $0x188] sm:$0xff]
    %v2610 = vld [vmem:[#allocation17 + $0x190] sm:$0xff]
    %v2611 = vld [vmem:[#allocation17 + $0x198] sm:$0xff]
    %v2612 = vld [vmem:[#allocation17 + $0x1a0] sm:$0xff]
    %v2613 = vld [vmem:[#allocation17 + $0x1a8] sm:$0xff]
    %v2614 = vld [vmem:[#allocation17 + $0x1b0] sm:$0xff]
    %v2615 = vld [vmem:[#allocation17 + $0x1b8] sm:$0xff]
    %v2616 = vld [vmem:[#allocation17 + $0x1c0] sm:$0xff]
    %v2617 = vld [vmem:[#allocation17 + $0x1c8] sm:$0xff]
    %v2618 = vld [vmem:[#allocation17 + $0x1d0] sm:$0xff]
    %v2619 = vld [vmem:[#allocation17 + $0x1d8] sm:$0xff]
    %v2620 = vld [vmem:[#allocation17 + $0x1e0] sm:$0xff]
    %v2621 = vld [vmem:[#allocation17 + $0x1e8] sm:$0xff]
    %v2622 = vld [vmem:[#allocation17 + $0x1f0] sm:$0xff]
    %v2623 = vld [vmem:[#allocation17 + $0x1f8] sm:$0xff]
    %v2624 = vld [vmem:[#allocation17 + $0x200] sm:$0xff]
    %v2625 = vld [vmem:[#allocation17 + $0x208] sm:$0xff]
    %v2626 = vld [vmem:[#allocation17 + $0x210] sm:$0xff]
    %v2627 = vld [vmem:[#allocation17 + $0x218] sm:$0xff]
    %v2628 = vld [vmem:[#allocation17 + $0x220] sm:$0xff]
    %v2629 = vld [vmem:[#allocation17 + $0x228] sm:$0xff]
    %v2630 = vld [vmem:[#allocation17 + $0x230] sm:$0xff]
    %v2631 = vld [vmem:[#allocation17 + $0x238] sm:$0xff]
    %v2632 = vld [vmem:[#allocation17 + $0x240] sm:$0xff]
    %v2633 = vld [vmem:[#allocation17 + $0x248] sm:$0xff]
    %v2634 = vld [vmem:[#allocation17 + $0x250] sm:$0xff]
    %v2635 = vld [vmem:[#allocation17 + $0x258] sm:$0xff]
    %v2636 = vld [vmem:[#allocation17 + $0x260] sm:$0xff]
    %v2637 = vld [vmem:[#allocation17 + $0x268] sm:$0xff]
    %v2638 = vld [vmem:[#allocation17 + $0x270] sm:$0xff]
    %v2639 = vld [vmem:[#allocation17 + $0x278] sm:$0xff]
    %v2640 = vld [vmem:[#allocation17 + $0x280] sm:$0xff]
    %v2641 = vld [vmem:[#allocation17 + $0x288] sm:$0xff]
    %v2642 = vld [vmem:[#allocation17 + $0x290] sm:$0xff]
    %v2643 = vld [vmem:[#allocation17 + $0x298] sm:$0xff]
    %v2644 = vld [vmem:[#allocation17 + $0x2a0] sm:$0xff]
    %v2645 = vld [vmem:[#allocation17 + $0x2a8] sm:$0xff]
    %v2646 = vld [vmem:[#allocation17 + $0x2b0] sm:$0xff]
    %v2647 = vld [vmem:[#allocation17 + $0x2b8] sm:$0xff]
    %v2648 = vld [vmem:[#allocation17 + $0x2c0] sm:$0xff]
    %v2649 = vld [vmem:[#allocation17 + $0x2c8] sm:$0xff]
    %v2650 = vld [vmem:[#allocation17 + $0x2d0] sm:$0xff]
    %v2651 = vld [vmem:[#allocation17 + $0x2d8] sm:$0xff]
    %v2652 = vld [vmem:[#allocation17 + $0x2e0] sm:$0xff]
    %v2653 = vld [vmem:[#allocation17 + $0x2e8] sm:$0xff]
    %v2654 = vld [vmem:[#allocation17 + $0x2f0] sm:$0xff]
    %v2655 = vld [vmem:[#allocation17 + $0x2f8] sm:$0xff]
    %v2656 = vld [vmem:[#allocation17 + $0x300] sm:$0xff]
    %v2657 = vld [vmem:[#allocation17 + $0x308] sm:$0xff]
    %v2658 = vld [vmem:[#allocation17 + $0x310] sm:$0xff]
    %v2659 = vld [vmem:[#allocation17 + $0x318] sm:$0xff]
    %v2660 = vld [vmem:[#allocation17 + $0x320] sm:$0xff]
    %v2661 = vld [vmem:[#allocation17 + $0x328] sm:$0xff]
    %v2662 = vld [vmem:[#allocation17 + $0x330] sm:$0xff]
    %v2663 = vld [vmem:[#allocation17 + $0x338] sm:$0xff]
    %v2664 = vld [vmem:[#allocation17 + $0x340] sm:$0xff]
    %v2665 = vld [vmem:[#allocation17 + $0x348] sm:$0xff]
    %v2666 = vld [vmem:[#allocation17 + $0x350] sm:$0xff]
    %v2667 = vld [vmem:[#allocation17 + $0x358] sm:$0xff]
    %v2668 = vld [vmem:[#allocation17 + $0x360] sm:$0xff]
    %v2669 = vld [vmem:[#allocation17 + $0x368] sm:$0xff]
    %v2670 = vld [vmem:[#allocation17 + $0x370] sm:$0xff]
    %v2671 = vld [vmem:[#allocation17 + $0x378] sm:$0xff]
    %v2672 = vld [vmem:[#allocation17 + $0x380] sm:$0xff]
    %v2673 = vld [vmem:[#allocation17 + $0x388] sm:$0xff]
    %v2674 = vld [vmem:[#allocation17 + $0x390] sm:$0xff]
    %v2675 = vld [vmem:[#allocation17 + $0x398] sm:$0xff]
    %v2676 = vld [vmem:[#allocation17 + $0x3a0] sm:$0xff]
    %v2677 = vld [vmem:[#allocation17 + $0x3a8] sm:$0xff]
    %v2678 = vld [vmem:[#allocation17 + $0x3b0] sm:$0xff]
    %v2679 = vld [vmem:[#allocation17 + $0x3b8] sm:$0xff]
    %v2680 = vld [vmem:[#allocation17 + $0x3c0] sm:$0xff]
    %v2681 = vld [vmem:[#allocation17 + $0x3c8] sm:$0xff]
    %v2682 = vld [vmem:[#allocation17 + $0x3d0] sm:$0xff]
    %v2683 = vld [vmem:[#allocation17 + $0x3d8] sm:$0xff]
    %v2684 = vld [vmem:[#allocation17 + $0x3e0] sm:$0xff]
    %v2685 = vld [vmem:[#allocation17 + $0x3e8] sm:$0xff]
    %v2686 = vld [vmem:[#allocation17 + $0x3f0] sm:$0xff]
    %v2687 = vld [vmem:[#allocation17 + $0x3f8] sm:$0xff]
    %v2688 = vld [vmem:[#allocation17 + $0x400] sm:$0xff]
    %v2689 = vld [vmem:[#allocation17 + $0x408] sm:$0xff]
    %v2690 = vld [vmem:[#allocation17 + $0x410] sm:$0xff]
    %v2691 = vld [vmem:[#allocation17 + $0x418] sm:$0xff]
    %v2692 = vld [vmem:[#allocation17 + $0x420] sm:$0xff]
    %v2693 = vld [vmem:[#allocation17 + $0x428] sm:$0xff]
    %v2694 = vld [vmem:[#allocation17 + $0x430] sm:$0xff]
    %v2695 = vld [vmem:[#allocation17 + $0x438] sm:$0xff]
    %v2696 = vld [vmem:[#allocation17 + $0x440] sm:$0x33]
    %v2697 = vld [vmem:[#allocation17 + $0x448] sm:$0x33]
    %v2698 = vld [vmem:[#allocation17 + $0x450] sm:$0x33]
    %v2699 = vld [vmem:[#allocation17 + $0x458] sm:$0x33]
    %v2700 = vld [vmem:[%s20] sm:$0xff]
    %v2702 = vlaneseq
    %v2703 = vshrl.u32 %v2702, 7
    %v2704 = vsub.s32 0, %v2703
    %v2705 = vrot.slane %v2700, %v2704
    %v2706 = vlaneseq
    %v2707 = vshrl.u32 %v2706, 7
    %v2708 = vsub.s32 1, %v2707
    %v2709 = vrot.slane %v2700, %v2708
    %v2710 = vlaneseq
    %v2711 = vshrl.u32 %v2710, 7
    %v2712 = vsub.s32 2, %v2711
    %v2713 = vrot.slane %v2700, %v2712
    %v2714 = vlaneseq
    %v2715 = vshrl.u32 %v2714, 7
    %v2716 = vsub.s32 3, %v2715
    %v2717 = vrot.slane %v2700, %v2716
    %v2718 = vlaneseq
    %v2719 = vshrl.u32 %v2718, 7
    %v2720 = vsub.s32 4, %v2719
    %v2721 = vrot.slane %v2700, %v2720
    %v2722 = vlaneseq
    %v2723 = vshrl.u32 %v2722, 7
    %v2724 = vsub.s32 5, %v2723
    %v2725 = vrot.slane %v2700, %v2724
    %v2726 = vlaneseq
    %v2727 = vshrl.u32 %v2726, 7
    %v2728 = vsub.s32 6, %v2727
    %v2729 = vrot.slane %v2700, %v2728
    %v2730 = vlaneseq
    %v2731 = vshrl.u32 %v2730, 7
    %v2732 = vsub.s32 7, %v2731
    %v2733 = vrot.slane %v2700, %v2732
    %v2882 = vunpack.c.l.b16 %v2560
    %v2883 = vunpack.c.h.b16 %v2560
    %v2884 = vunpack.c.l.b16 %v2561
    %v2885 = vunpack.c.h.b16 %v2561
    %v2886 = vunpack.c.l.b16 %v2562
    %v2887 = vunpack.c.h.b16 %v2562
    %v2888 = vunpack.c.l.b16 %v2563
    %v2889 = vunpack.c.h.b16 %v2563
    %v2890 = vunpack.c.l.b16 %v2564
    %v2891 = vunpack.c.h.b16 %v2564
    %v2892 = vunpack.c.l.b16 %v2565
    %v2893 = vunpack.c.h.b16 %v2565
    %v2894 = vunpack.c.l.b16 %v2566
    %v2895 = vunpack.c.h.b16 %v2566
    %v2896 = vunpack.c.l.b16 %v2567
    %v2897 = vunpack.c.h.b16 %v2567
    %v2898 = vunpack.c.l.b16 %v2568
    %v2899 = vunpack.c.h.b16 %v2568
    %v2900 = vunpack.c.l.b16 %v2569
    %v2901 = vunpack.c.h.b16 %v2569
    %v2902 = vunpack.c.l.b16 %v2570
    %v2903 = vunpack.c.h.b16 %v2570
    %v2904 = vunpack.c.l.b16 %v2571
    %v2905 = vunpack.c.h.b16 %v2571
    %v2906 = vunpack.c.l.b16 %v2572
    %v2907 = vunpack.c.h.b16 %v2572
    %v2908 = vunpack.c.l.b16 %v2573
    %v2909 = vunpack.c.h.b16 %v2573
    %v2910 = vunpack.c.l.b16 %v2574
    %v2911 = vunpack.c.h.b16 %v2574
    %v2912 = vunpack.c.l.b16 %v2575
    %v2913 = vunpack.c.h.b16 %v2575
    %v2914 = vunpack.c.l.b16 %v2576
    %v2915 = vunpack.c.h.b16 %v2576
    %v2916 = vunpack.c.l.b16 %v2577
    %v2917 = vunpack.c.h.b16 %v2577
    %v2918 = vunpack.c.l.b16 %v2578
    %v2919 = vunpack.c.h.b16 %v2578
    %v2920 = vunpack.c.l.b16 %v2579
    %v2921 = vunpack.c.h.b16 %v2579
    %v2922 = vunpack.c.l.b16 %v2580
    %v2923 = vunpack.c.h.b16 %v2580
    %v2924 = vunpack.c.l.b16 %v2581
    %v2925 = vunpack.c.h.b16 %v2581
    %v2926 = vunpack.c.l.b16 %v2582
    %v2927 = vunpack.c.h.b16 %v2582
    %v2928 = vunpack.c.l.b16 %v2583
    %v2929 = vunpack.c.h.b16 %v2583
    %v2930 = vunpack.c.l.b16 %v2584
    %v2931 = vunpack.c.h.b16 %v2584
    %v2932 = vunpack.c.l.b16 %v2585
    %v2933 = vunpack.c.h.b16 %v2585
    %v2934 = vunpack.c.l.b16 %v2586
    %v2935 = vunpack.c.h.b16 %v2586
    %v2936 = vunpack.c.l.b16 %v2587
    %v2937 = vunpack.c.h.b16 %v2587
    %v2938 = vunpack.c.l.b16 %v2588
    %v2939 = vunpack.c.h.b16 %v2588
    %v2940 = vunpack.c.l.b16 %v2589
    %v2941 = vunpack.c.h.b16 %v2589
    %v2942 = vunpack.c.l.b16 %v2590
    %v2943 = vunpack.c.h.b16 %v2590
    %v2944 = vunpack.c.l.b16 %v2591
    %v2945 = vunpack.c.h.b16 %v2591
    %v2946 = vunpack.c.l.b16 %v2592
    %v2947 = vunpack.c.h.b16 %v2592
    %v2948 = vunpack.c.l.b16 %v2593
    %v2949 = vunpack.c.h.b16 %v2593
    %v2950 = vunpack.c.l.b16 %v2594
    %v2951 = vunpack.c.h.b16 %v2594
    %v2952 = vunpack.c.l.b16 %v2595
    %v2953 = vunpack.c.h.b16 %v2595
    %v2954 = vunpack.c.l.b16 %v2596
    %v2955 = vunpack.c.h.b16 %v2596
    %v2956 = vunpack.c.l.b16 %v2597
    %v2957 = vunpack.c.h.b16 %v2597
    %v2958 = vunpack.c.l.b16 %v2598
    %v2959 = vunpack.c.h.b16 %v2598
    %v2960 = vunpack.c.l.b16 %v2599
    %v2961 = vunpack.c.h.b16 %v2599
    %v2962 = vunpack.c.l.b16 %v2600
    %v2963 = vunpack.c.h.b16 %v2600
    %v2964 = vunpack.c.l.b16 %v2601
    %v2965 = vunpack.c.h.b16 %v2601
    %v2966 = vunpack.c.l.b16 %v2602
    %v2967 = vunpack.c.h.b16 %v2602
    %v2968 = vunpack.c.l.b16 %v2603
    %v2969 = vunpack.c.h.b16 %v2603
    %v2970 = vunpack.c.l.b16 %v2604
    %v2971 = vunpack.c.h.b16 %v2604
    %v2972 = vunpack.c.l.b16 %v2605
    %v2973 = vunpack.c.h.b16 %v2605
    %v2974 = vunpack.c.l.b16 %v2606
    %v2975 = vunpack.c.h.b16 %v2606
    %v2976 = vunpack.c.l.b16 %v2607
    %v2977 = vunpack.c.h.b16 %v2607
    %v2978 = vunpack.c.l.b16 %v2608
    %v2979 = vunpack.c.h.b16 %v2608
    %v2980 = vunpack.c.l.b16 %v2609
    %v2981 = vunpack.c.h.b16 %v2609
    %v2982 = vunpack.c.l.b16 %v2610
    %v2983 = vunpack.c.h.b16 %v2610
    %v2984 = vunpack.c.l.b16 %v2611
    %v2985 = vunpack.c.h.b16 %v2611
    %v2986 = vunpack.c.l.b16 %v2612
    %v2987 = vunpack.c.h.b16 %v2612
    %v2988 = vunpack.c.l.b16 %v2613
    %v2989 = vunpack.c.h.b16 %v2613
    %v2990 = vunpack.c.l.b16 %v2614
    %v2991 = vunpack.c.h.b16 %v2614
    %v2992 = vunpack.c.l.b16 %v2615
    %v2993 = vunpack.c.h.b16 %v2615
    %v2994 = vunpack.c.l.b16 %v2616
    %v2995 = vunpack.c.h.b16 %v2616
    %v2996 = vunpack.c.l.b16 %v2617
    %v2997 = vunpack.c.h.b16 %v2617
    %v2998 = vunpack.c.l.b16 %v2618
    %v2999 = vunpack.c.h.b16 %v2618
    %v3000 = vunpack.c.l.b16 %v2619
    %v3001 = vunpack.c.h.b16 %v2619
    %v3002 = vunpack.c.l.b16 %v2620
    %v3003 = vunpack.c.h.b16 %v2620
    %v3004 = vunpack.c.l.b16 %v2621
    %v3005 = vunpack.c.h.b16 %v2621
    %v3006 = vunpack.c.l.b16 %v2622
    %v3007 = vunpack.c.h.b16 %v2622
    %v3008 = vunpack.c.l.b16 %v2623
    %v3009 = vunpack.c.h.b16 %v2623
    %v3010 = vunpack.c.l.b16 %v2624
    %v3011 = vunpack.c.h.b16 %v2624
    %v3012 = vunpack.c.l.b16 %v2625
    %v3013 = vunpack.c.h.b16 %v2625
    %v3014 = vunpack.c.l.b16 %v2626
    %v3015 = vunpack.c.h.b16 %v2626
    %v3016 = vunpack.c.l.b16 %v2627
    %v3017 = vunpack.c.h.b16 %v2627
    %v3018 = vunpack.c.l.b16 %v2628
    %v3019 = vunpack.c.h.b16 %v2628
    %v3020 = vunpack.c.l.b16 %v2629
    %v3021 = vunpack.c.h.b16 %v2629
    %v3022 = vunpack.c.l.b16 %v2630
    %v3023 = vunpack.c.h.b16 %v2630
    %v3024 = vunpack.c.l.b16 %v2631
    %v3025 = vunpack.c.h.b16 %v2631
    %v3026 = vunpack.c.l.b16 %v2632
    %v3027 = vunpack.c.h.b16 %v2632
    %v3028 = vunpack.c.l.b16 %v2633
    %v3029 = vunpack.c.h.b16 %v2633
    %v3030 = vunpack.c.l.b16 %v2634
    %v3031 = vunpack.c.h.b16 %v2634
    %v3032 = vunpack.c.l.b16 %v2635
    %v3033 = vunpack.c.h.b16 %v2635
    %v3034 = vunpack.c.l.b16 %v2636
    %v3035 = vunpack.c.h.b16 %v2636
    %v3036 = vunpack.c.l.b16 %v2637
    %v3037 = vunpack.c.h.b16 %v2637
    %v3038 = vunpack.c.l.b16 %v2638
    %v3039 = vunpack.c.h.b16 %v2638
    %v3040 = vunpack.c.l.b16 %v2639
    %v3041 = vunpack.c.h.b16 %v2639
    %v3042 = vunpack.c.l.b16 %v2640
    %v3043 = vunpack.c.h.b16 %v2640
    %v3044 = vunpack.c.l.b16 %v2641
    %v3045 = vunpack.c.h.b16 %v2641
    %v3046 = vunpack.c.l.b16 %v2642
    %v3047 = vunpack.c.h.b16 %v2642
    %v3048 = vunpack.c.l.b16 %v2643
    %v3049 = vunpack.c.h.b16 %v2643
    %v3050 = vunpack.c.l.b16 %v2644
    %v3051 = vunpack.c.h.b16 %v2644
    %v3052 = vunpack.c.l.b16 %v2645
    %v3053 = vunpack.c.h.b16 %v2645
    %v3054 = vunpack.c.l.b16 %v2646
    %v3055 = vunpack.c.h.b16 %v2646
    %v3056 = vunpack.c.l.b16 %v2647
    %v3057 = vunpack.c.h.b16 %v2647
    %v3058 = vunpack.c.l.b16 %v2648
    %v3059 = vunpack.c.h.b16 %v2648
    %v3060 = vunpack.c.l.b16 %v2649
    %v3061 = vunpack.c.h.b16 %v2649
    %v3062 = vunpack.c.l.b16 %v2650
    %v3063 = vunpack.c.h.b16 %v2650
    %v3064 = vunpack.c.l.b16 %v2651
    %v3065 = vunpack.c.h.b16 %v2651
    %v3066 = vunpack.c.l.b16 %v2652
    %v3067 = vunpack.c.h.b16 %v2652
    %v3068 = vunpack.c.l.b16 %v2653
    %v3069 = vunpack.c.h.b16 %v2653
    %v3070 = vunpack.c.l.b16 %v2654
    %v3071 = vunpack.c.h.b16 %v2654
    %v3072 = vunpack.c.l.b16 %v2655
    %v3073 = vunpack.c.h.b16 %v2655
    %v3074 = vunpack.c.l.b16 %v2656
    %v3075 = vunpack.c.h.b16 %v2656
    %v3076 = vunpack.c.l.b16 %v2657
    %v3077 = vunpack.c.h.b16 %v2657
    %v3078 = vunpack.c.l.b16 %v2658
    %v3079 = vunpack.c.h.b16 %v2658
    %v3080 = vunpack.c.l.b16 %v2659
    %v3081 = vunpack.c.h.b16 %v2659
    %v3082 = vunpack.c.l.b16 %v2660
    %v3083 = vunpack.c.h.b16 %v2660
    %v3084 = vunpack.c.l.b16 %v2661
    %v3085 = vunpack.c.h.b16 %v2661
    %v3086 = vunpack.c.l.b16 %v2662
    %v3087 = vunpack.c.h.b16 %v2662
    %v3088 = vunpack.c.l.b16 %v2663
    %v3089 = vunpack.c.h.b16 %v2663
    %v3090 = vunpack.c.l.b16 %v2664
    %v3091 = vunpack.c.h.b16 %v2664
    %v3092 = vunpack.c.l.b16 %v2665
    %v3093 = vunpack.c.h.b16 %v2665
    %v3094 = vunpack.c.l.b16 %v2666
    %v3095 = vunpack.c.h.b16 %v2666
    %v3096 = vunpack.c.l.b16 %v2667
    %v3097 = vunpack.c.h.b16 %v2667
    %v3098 = vunpack.c.l.b16 %v2668
    %v3099 = vunpack.c.h.b16 %v2668
    %v3100 = vunpack.c.l.b16 %v2669
    %v3101 = vunpack.c.h.b16 %v2669
    %v3102 = vunpack.c.l.b16 %v2670
    %v3103 = vunpack.c.h.b16 %v2670
    %v3104 = vunpack.c.l.b16 %v2671
    %v3105 = vunpack.c.h.b16 %v2671
    %v3106 = vunpack.c.l.b16 %v2672
    %v3107 = vunpack.c.h.b16 %v2672
    %v3108 = vunpack.c.l.b16 %v2673
    %v3109 = vunpack.c.h.b16 %v2673
    %v3110 = vunpack.c.l.b16 %v2674
    %v3111 = vunpack.c.h.b16 %v2674
    %v3112 = vunpack.c.l.b16 %v2675
    %v3113 = vunpack.c.h.b16 %v2675
    %v3114 = vunpack.c.l.b16 %v2676
    %v3115 = vunpack.c.h.b16 %v2676
    %v3116 = vunpack.c.l.b16 %v2677
    %v3117 = vunpack.c.h.b16 %v2677
    %v3118 = vunpack.c.l.b16 %v2678
    %v3119 = vunpack.c.h.b16 %v2678
    %v3120 = vunpack.c.l.b16 %v2679
    %v3121 = vunpack.c.h.b16 %v2679
    %v3122 = vunpack.c.l.b16 %v2680
    %v3123 = vunpack.c.h.b16 %v2680
    %v3124 = vunpack.c.l.b16 %v2681
    %v3125 = vunpack.c.h.b16 %v2681
    %v3126 = vunpack.c.l.b16 %v2682
    %v3127 = vunpack.c.h.b16 %v2682
    %v3128 = vunpack.c.l.b16 %v2683
    %v3129 = vunpack.c.h.b16 %v2683
    %v3130 = vunpack.c.l.b16 %v2684
    %v3131 = vunpack.c.h.b16 %v2684
    %v3132 = vunpack.c.l.b16 %v2685
    %v3133 = vunpack.c.h.b16 %v2685
    %v3134 = vunpack.c.l.b16 %v2686
    %v3135 = vunpack.c.h.b16 %v2686
    %v3136 = vunpack.c.l.b16 %v2687
    %v3137 = vunpack.c.h.b16 %v2687
    %v3138 = vunpack.c.l.b16 %v2688
    %v3139 = vunpack.c.h.b16 %v2688
    %v3140 = vunpack.c.l.b16 %v2689
    %v3141 = vunpack.c.h.b16 %v2689
    %v3142 = vunpack.c.l.b16 %v2690
    %v3143 = vunpack.c.h.b16 %v2690
    %v3144 = vunpack.c.l.b16 %v2691
    %v3145 = vunpack.c.h.b16 %v2691
    %v3146 = vunpack.c.l.b16 %v2692
    %v3147 = vunpack.c.h.b16 %v2692
    %v3148 = vunpack.c.l.b16 %v2693
    %v3149 = vunpack.c.h.b16 %v2693
    %v3150 = vunpack.c.l.b16 %v2694
    %v3151 = vunpack.c.h.b16 %v2694
    %v3152 = vunpack.c.l.b16 %v2695
    %v3153 = vunpack.c.h.b16 %v2695
    %v3154 = vunpack.c.l.b16 %v2696
    %v3155 = vunpack.c.h.b16 %v2696
    %v3156 = vunpack.c.l.b16 %v2697
    %v3157 = vunpack.c.h.b16 %v2697
    %v3158 = vunpack.c.l.b16 %v2698
    %v3159 = vunpack.c.h.b16 %v2698
    %v3160 = vunpack.c.l.b16 %v2699
    %v3161 = vunpack.c.h.b16 %v2699
    %v3162 = vpack.c.b16 %v2890, %v2882
    %v3163 = vpack.c.b16 %v2891, %v2883
    %v3164 = vpack.c.b16 %v2892, %v2884
    %v3165 = vpack.c.b16 %v2893, %v2885
    %v3166 = vpack.c.b16 %v2894, %v2886
    %v3167 = vpack.c.b16 %v2895, %v2887
    %v3168 = vpack.c.b16 %v2896, %v2888
    %v3169 = vpack.c.b16 %v2897, %v2889
    %v3170 = vpack.c.b16 %v2906, %v2898
    %v3171 = vpack.c.b16 %v2907, %v2899
    %v3172 = vpack.c.b16 %v2908, %v2900
    %v3173 = vpack.c.b16 %v2909, %v2901
    %v3174 = vpack.c.b16 %v2910, %v2902
    %v3175 = vpack.c.b16 %v2911, %v2903
    %v3176 = vpack.c.b16 %v2912, %v2904
    %v3177 = vpack.c.b16 %v2913, %v2905
    %v3178 = vpack.c.b16 %v2922, %v2914
    %v3179 = vpack.c.b16 %v2923, %v2915
    %v3180 = vpack.c.b16 %v2924, %v2916
    %v3181 = vpack.c.b16 %v2925, %v2917
    %v3182 = vpack.c.b16 %v2926, %v2918
    %v3183 = vpack.c.b16 %v2927, %v2919
    %v3184 = vpack.c.b16 %v2928, %v2920
    %v3185 = vpack.c.b16 %v2929, %v2921
    %v3186 = vpack.c.b16 %v2938, %v2930
    %v3187 = vpack.c.b16 %v2939, %v2931
    %v3188 = vpack.c.b16 %v2940, %v2932
    %v3189 = vpack.c.b16 %v2941, %v2933
    %v3190 = vpack.c.b16 %v2942, %v2934
    %v3191 = vpack.c.b16 %v2943, %v2935
    %v3192 = vpack.c.b16 %v2944, %v2936
    %v3193 = vpack.c.b16 %v2945, %v2937
    %v3194 = vpack.c.b16 %v2954, %v2946
    %v3195 = vpack.c.b16 %v2955, %v2947
    %v3196 = vpack.c.b16 %v2956, %v2948
    %v3197 = vpack.c.b16 %v2957, %v2949
    %v3198 = vpack.c.b16 %v2958, %v2950
    %v3199 = vpack.c.b16 %v2959, %v2951
    %v3200 = vpack.c.b16 %v2960, %v2952
    %v3201 = vpack.c.b16 %v2961, %v2953
    %v3202 = vpack.c.b16 %v2970, %v2962
    %v3203 = vpack.c.b16 %v2971, %v2963
    %v3204 = vpack.c.b16 %v2972, %v2964
    %v3205 = vpack.c.b16 %v2973, %v2965
    %v3206 = vpack.c.b16 %v2974, %v2966
    %v3207 = vpack.c.b16 %v2975, %v2967
    %v3208 = vpack.c.b16 %v2976, %v2968
    %v3209 = vpack.c.b16 %v2977, %v2969
    %v3210 = vpack.c.b16 %v2986, %v2978
    %v3211 = vpack.c.b16 %v2987, %v2979
    %v3212 = vpack.c.b16 %v2988, %v2980
    %v3213 = vpack.c.b16 %v2989, %v2981
    %v3214 = vpack.c.b16 %v2990, %v2982
    %v3215 = vpack.c.b16 %v2991, %v2983
    %v3216 = vpack.c.b16 %v2992, %v2984
    %v3217 = vpack.c.b16 %v2993, %v2985
    %v3218 = vpack.c.b16 %v3002, %v2994
    %v3219 = vpack.c.b16 %v3003, %v2995
    %v3220 = vpack.c.b16 %v3004, %v2996
    %v3221 = vpack.c.b16 %v3005, %v2997
    %v3222 = vpack.c.b16 %v3006, %v2998
    %v3223 = vpack.c.b16 %v3007, %v2999
    %v3224 = vpack.c.b16 %v3008, %v3000
    %v3225 = vpack.c.b16 %v3009, %v3001
    %v3226 = vpack.c.b16 %v3018, %v3010
    %v3227 = vpack.c.b16 %v3019, %v3011
    %v3228 = vpack.c.b16 %v3020, %v3012
    %v3229 = vpack.c.b16 %v3021, %v3013
    %v3230 = vpack.c.b16 %v3022, %v3014
    %v3231 = vpack.c.b16 %v3023, %v3015
    %v3232 = vpack.c.b16 %v3024, %v3016
    %v3233 = vpack.c.b16 %v3025, %v3017
    %v3234 = vpack.c.b16 %v3034, %v3026
    %v3235 = vpack.c.b16 %v3035, %v3027
    %v3236 = vpack.c.b16 %v3036, %v3028
    %v3237 = vpack.c.b16 %v3037, %v3029
    %v3238 = vpack.c.b16 %v3038, %v3030
    %v3239 = vpack.c.b16 %v3039, %v3031
    %v3240 = vpack.c.b16 %v3040, %v3032
    %v3241 = vpack.c.b16 %v3041, %v3033
    %v3242 = vpack.c.b16 %v3050, %v3042
    %v3243 = vpack.c.b16 %v3051, %v3043
    %v3244 = vpack.c.b16 %v3052, %v3044
    %v3245 = vpack.c.b16 %v3053, %v3045
    %v3246 = vpack.c.b16 %v3054, %v3046
    %v3247 = vpack.c.b16 %v3055, %v3047
    %v3248 = vpack.c.b16 %v3056, %v3048
    %v3249 = vpack.c.b16 %v3057, %v3049
    %v3250 = vpack.c.b16 %v3066, %v3058
    %v3251 = vpack.c.b16 %v3067, %v3059
    %v3252 = vpack.c.b16 %v3068, %v3060
    %v3253 = vpack.c.b16 %v3069, %v3061
    %v3254 = vpack.c.b16 %v3070, %v3062
    %v3255 = vpack.c.b16 %v3071, %v3063
    %v3256 = vpack.c.b16 %v3072, %v3064
    %v3257 = vpack.c.b16 %v3073, %v3065
    %v3258 = vpack.c.b16 %v3082, %v3074
    %v3259 = vpack.c.b16 %v3083, %v3075
    %v3260 = vpack.c.b16 %v3084, %v3076
    %v3261 = vpack.c.b16 %v3085, %v3077
    %v3262 = vpack.c.b16 %v3086, %v3078
    %v3263 = vpack.c.b16 %v3087, %v3079
    %v3264 = vpack.c.b16 %v3088, %v3080
    %v3265 = vpack.c.b16 %v3089, %v3081
    %v3266 = vpack.c.b16 %v3098, %v3090
    %v3267 = vpack.c.b16 %v3099, %v3091
    %v3268 = vpack.c.b16 %v3100, %v3092
    %v3269 = vpack.c.b16 %v3101, %v3093
    %v3270 = vpack.c.b16 %v3102, %v3094
    %v3271 = vpack.c.b16 %v3103, %v3095
    %v3272 = vpack.c.b16 %v3104, %v3096
    %v3273 = vpack.c.b16 %v3105, %v3097
    %v3274 = vpack.c.b16 %v3114, %v3106
    %v3275 = vpack.c.b16 %v3115, %v3107
    %v3276 = vpack.c.b16 %v3116, %v3108
    %v3277 = vpack.c.b16 %v3117, %v3109
    %v3278 = vpack.c.b16 %v3118, %v3110
    %v3279 = vpack.c.b16 %v3119, %v3111
    %v3280 = vpack.c.b16 %v3120, %v3112
    %v3281 = vpack.c.b16 %v3121, %v3113
    %v3282 = vpack.c.b16 %v3130, %v3122
    %v3283 = vpack.c.b16 %v3131, %v3123
    %v3284 = vpack.c.b16 %v3132, %v3124
    %v3285 = vpack.c.b16 %v3133, %v3125
    %v3286 = vpack.c.b16 %v3134, %v3126
    %v3287 = vpack.c.b16 %v3135, %v3127
    %v3288 = vpack.c.b16 %v3136, %v3128
    %v3289 = vpack.c.b16 %v3137, %v3129
    %v3290 = vpack.c.b16 %v3146, %v3138
    %v3291 = vpack.c.b16 %v3147, %v3139
    %v3292 = vpack.c.b16 %v3148, %v3140
    %v3293 = vpack.c.b16 %v3149, %v3141
    %v3294 = vpack.c.b16 %v3150, %v3142
    %v3295 = vpack.c.b16 %v3151, %v3143
    %v3296 = vpack.c.b16 %v3152, %v3144
    %v3297 = vpack.c.b16 %v3153, %v3145
    %v3298 = vpack.c.b16 %v3154, %v3154
    %v3299 = vpack.c.b16 %v3155, %v3155
    %v3300 = vpack.c.b16 %v3156, %v3156
    %v3301 = vpack.c.b16 %v3157, %v3157
    %v3302 = vpack.c.b16 %v3158, %v3158
    %v3303 = vpack.c.b16 %v3159, %v3159
    %v3304 = vpack.c.b16 %v3160, %v3160
    %v3305 = vpack.c.b16 %v3161, %v3161
    %vm3442 = vcmask 162816
    %v3444 = vsel %vm3442, %v2559, 0
    %v3447 = vsel %vm492, %v3298, 0
    %v3450 = vsel %vm492, %v3299, 0
    %v3453 = vsel %vm492, %v3300, 0
    %v3456 = vsel %vm492, %v3301, 0
    %v3459 = vsel %vm492, %v3302, 0
    %v3462 = vsel %vm492, %v3303, 0
    %v3465 = vsel %vm492, %v3304, 0
    %v3468 = vsel %vm492, %v3305, 0
    %3470 = vmatprep.subr.bf16.mxu0 %v3163
    %3471 = vmatpush1.bf16.msra.mxu0 %v3162
    %3472 = vmatprep.subr.bf16.mxu0 %v3171
    %3473 = vmatpush1.bf16.msra.mxu0 %v3170
    %3474 = vmatprep.subr.bf16.mxu0 %v3179
    %3475 = vmatpush1.bf16.msra.mxu0 %v3178
    %3476 = vmatprep.subr.bf16.mxu0 %v3187
    %3477 = vmatpush1.bf16.msra.mxu0 %v3186
    %3478 = vmatprep.subr.bf16.mxu0 %v3195
    %3479 = vmatpush1.bf16.msra.mxu0 %v3194
    %3480 = vmatprep.subr.bf16.mxu0 %v3203
    %3481 = vmatpush1.bf16.msra.mxu0 %v3202
    %3482 = vmatprep.subr.bf16.mxu0 %v3211
    %3483 = vmatpush1.bf16.msra.mxu0 %v3210
    %3484 = vmatprep.subr.bf16.mxu0 %v3219
    %3485 = vmatpush1.bf16.msra.mxu0 %v3218
    %3486 = vmatprep.subr.bf16.mxu0 %v3227
    %3487 = vmatpush1.bf16.msra.mxu0 %v3226
    %3488 = vmatprep.subr.bf16.mxu0 %v3235
    %3489 = vmatpush1.bf16.msra.mxu0 %v3234
    %3490 = vmatprep.subr.bf16.mxu0 %v3243
    %3491 = vmatpush1.bf16.msra.mxu0 %v3242
    %3492 = vmatprep.subr.bf16.mxu0 %v3251
    %3493 = vmatpush1.bf16.msra.mxu0 %v3250
    %3494 = vmatprep.subr.bf16.mxu0 %v3259
    %3495 = vmatpush1.bf16.msra.mxu0 %v3258
    %3496 = vmatprep.subr.bf16.mxu0 %v3267
    %3497 = vmatpush1.bf16.msra.mxu0 %v3266
    %3498 = vmatprep.subr.bf16.mxu0 %v3275
    %3499 = vmatpush1.bf16.msra.mxu0 %v3274
    %3500 = vmatprep.subr.bf16.mxu0 %v3283
    %3501 = vmatpush1.bf16.msra.mxu0 %v3282
    %3502 = vmatprep.mubr.bf16.mxu0 %v2558
    %3503 = vmatmul.mubr.bf16.gmra.mrb[0].mxu0 %v2557
    %v3504 = vpop.f32.mrb[0].mxu0
    %v3505 = vadd.f32 %v2705, %v3504
    %v3506 = vpop.f32.mrb[0].mxu0
    %v3507 = vadd.f32 %v2709, %v3506
    %v3508 = vpop.f32.mrb[0].mxu0
    %v3509 = vpop.f32.mrb[0].mxu0
    %3510 = vdwg.mxu0
    %3511 = vmatprep.subr.bf16.mxu0 %v3291
    %3512 = vmatpush1.bf16.msra.mxu0 %v3290
    %3513 = vmatprep.subr.bf16.mxu0 %v3450
    %3514 = vmatpush1.bf16.msra.mxu0 %v3447
    %3515 = vmatprep.subr.bf16.mxu0 0
    %3516 = vmatpush1.bf16.msra.mxu0 0
    %3517 = vmatprep.subr.bf16.mxu0 0
    %3518 = vmatpush1.bf16.msra.mxu0 0
    %3519 = vmatprep.subr.bf16.mxu0 0
    %3520 = vmatpush1.bf16.msra.mxu0 0
    %3521 = vmatprep.subr.bf16.mxu0 0
    %3522 = vmatpush1.bf16.msra.mxu0 0
    %3523 = vmatprep.subr.bf16.mxu0 0
    %3524 = vmatpush1.bf16.msra.mxu0 0
    %3525 = vmatprep.subr.bf16.mxu0 0
    %3526 = vmatpush1.bf16.msra.mxu0 0
    %3527 = vmatprep.subr.bf16.mxu0 0
    %3528 = vmatpush1.bf16.msra.mxu0 0
    %3529 = vmatprep.subr.bf16.mxu0 0
    %3530 = vmatpush1.bf16.msra.mxu0 0
    %3531 = vmatprep.subr.bf16.mxu0 0
    %3532 = vmatpush1.bf16.msra.mxu0 0
    %3533 = vmatprep.subr.bf16.mxu0 0
    %3534 = vmatpush1.bf16.msra.mxu0 0
    %3535 = vmatprep.subr.bf16.mxu0 0
    %3536 = vmatpush1.bf16.msra.mxu0 0
    %3537 = vmatprep.subr.bf16.mxu0 0
    %3538 = vmatpush1.bf16.msra.mxu0 0
    %3539 = vmatprep.subr.bf16.mxu0 0
    %3540 = vmatpush1.bf16.msra.mxu0 0
    %3541 = vmatprep.subr.bf16.mxu0 0
    %3542 = vmatpush1.bf16.msra.mxu0 0
    %3543 = vmatprep.mubr.bf16.mxu0 0
    %3544 = vmatmul.mubr.bf16.gmra.mrb[0].mxu0 %v3444
    %v3545 = vpop.f32.mrb[0].mxu0
    %v3546 = vadd.f32 %v3505, %v3545
    %v3547 = vpop.f32.mrb[0].mxu0
    %v3548 = vadd.f32 %v3507, %v3547
    %v3549 = vpop.f32.mrb[0].mxu0
    %v3550 = vpop.f32.mrb[0].mxu0
    %3551 = vdwg.mxu0
    %3552 = vmatprep.subr.bf16.mxu0 %v3165
    %3553 = vmatpush1.bf16.msra.mxu0 %v3164
    %3554 = vmatprep.subr.bf16.mxu0 %v3173
    %3555 = vmatpush1.bf16.msra.mxu0 %v3172
    %3556 = vmatprep.subr.bf16.mxu0 %v3181
    %3557 = vmatpush1.bf16.msra.mxu0 %v3180
    %3558 = vmatprep.subr.bf16.mxu0 %v3189
    %3559 = vmatpush1.bf16.msra.mxu0 %v3188
    %3560 = vmatprep.subr.bf16.mxu0 %v3197
    %3561 = vmatpush1.bf16.msra.mxu0 %v3196
    %3562 = vmatprep.subr.bf16.mxu0 %v3205
    %3563 = vmatpush1.bf16.msra.mxu0 %v3204
    %3564 = vmatprep.subr.bf16.mxu0 %v3213
    %3565 = vmatpush1.bf16.msra.mxu0 %v3212
    %3566 = vmatprep.subr.bf16.mxu0 %v3221
    %3567 = vmatpush1.bf16.msra.mxu0 %v3220
    %3568 = vmatprep.subr.bf16.mxu0 %v3229
    %3569 = vmatpush1.bf16.msra.mxu0 %v3228
    %3570 = vmatprep.subr.bf16.mxu0 %v3237
    %3571 = vmatpush1.bf16.msra.mxu0 %v3236
    %3572 = vmatprep.subr.bf16.mxu0 %v3245
    %3573 = vmatpush1.bf16.msra.mxu0 %v3244
    %3574 = vmatprep.subr.bf16.mxu0 %v3253
    %3575 = vmatpush1.bf16.msra.mxu0 %v3252
    %3576 = vmatprep.subr.bf16.mxu0 %v3261
    %3577 = vmatpush1.bf16.msra.mxu0 %v3260
    %3578 = vmatprep.subr.bf16.mxu0 %v3269
    %3579 = vmatpush1.bf16.msra.mxu0 %v3268
    %3580 = vmatprep.subr.bf16.mxu0 %v3277
    %3581 = vmatpush1.bf16.msra.mxu0 %v3276
    %3582 = vmatprep.subr.bf16.mxu0 %v3285
    %3583 = vmatpush1.bf16.msra.mxu0 %v3284
    %3584 = vmatprep.mubr.bf16.mxu0 %v2558
    %3585 = vmatmul.mubr.bf16.gmra.mrb[0].mxu0 %v2557
    %v3586 = vpop.f32.mrb[0].mxu0
    %v3587 = vadd.f32 %v2713, %v3586
    %v3588 = vpop.f32.mrb[0].mxu0
    %v3589 = vadd.f32 %v2717, %v3588
    %v3590 = vpop.f32.mrb[0].mxu0
    %v3591 = vpop.f32.mrb[0].mxu0
    %3592 = vdwg.mxu0
    %3593 = vmatprep.subr.bf16.mxu0 %v3293
    %3594 = vmatpush1.bf16.msra.mxu0 %v3292
    %3595 = vmatprep.subr.bf16.mxu0 %v3456
    %3596 = vmatpush1.bf16.msra.mxu0 %v3453
    %3597 = vmatprep.subr.bf16.mxu0 0
    %3598 = vmatpush1.bf16.msra.mxu0 0
    %3599 = vmatprep.subr.bf16.mxu0 0
    %3600 = vmatpush1.bf16.msra.mxu0 0
    %3601 = vmatprep.subr.bf16.mxu0 0
    %3602 = vmatpush1.bf16.msra.mxu0 0
    %3603 = vmatprep.subr.bf16.mxu0 0
    %3604 = vmatpush1.bf16.msra.mxu0 0
    %3605 = vmatprep.subr.bf16.mxu0 0
    %3606 = vmatpush1.bf16.msra.mxu0 0
    %3607 = vmatprep.subr.bf16.mxu0 0
    %3608 = vmatpush1.bf16.msra.mxu0 0
    %3609 = vmatprep.subr.bf16.mxu0 0
    %3610 = vmatpush1.bf16.msra.mxu0 0
    %3611 = vmatprep.subr.bf16.mxu0 0
    %3612 = vmatpush1.bf16.msra.mxu0 0
    %3613 = vmatprep.subr.bf16.mxu0 0
    %3614 = vmatpush1.bf16.msra.mxu0 0
    %3615 = vmatprep.subr.bf16.mxu0 0
    %3616 = vmatpush1.bf16.msra.mxu0 0
    %3617 = vmatprep.subr.bf16.mxu0 0
    %3618 = vmatpush1.bf16.msra.mxu0 0
    %3619 = vmatprep.subr.bf16.mxu0 0
    %3620 = vmatpush1.bf16.msra.mxu0 0
    %3621 = vmatprep.subr.bf16.mxu0 0
    %3622 = vmatpush1.bf16.msra.mxu0 0
    %3623 = vmatprep.subr.bf16.mxu0 0
    %3624 = vmatpush1.bf16.msra.mxu0 0
    %3625 = vmatprep.mubr.bf16.mxu0 0
    %3626 = vmatmul.mubr.bf16.gmra.mrb[0].mxu0 %v3444
    %v3627 = vpop.f32.mrb[0].mxu0
    %v3628 = vadd.f32 %v3587, %v3627
    %v3629 = vpop.f32.mrb[0].mxu0
    %v3630 = vadd.f32 %v3589, %v3629
    %v3631 = vpop.f32.mrb[0].mxu0
    %v3632 = vpop.f32.mrb[0].mxu0
    %3633 = vdwg.mxu0
    %3634 = vmatprep.subr.bf16.mxu0 %v3167
    %3635 = vmatpush1.bf16.msra.mxu0 %v3166
    %3636 = vmatprep.subr.bf16.mxu0 %v3175
    %3637 = vmatpush1.bf16.msra.mxu0 %v3174
    %3638 = vmatprep.subr.bf16.mxu0 %v3183
    %3639 = vmatpush1.bf16.msra.mxu0 %v3182
    %3640 = vmatprep.subr.bf16.mxu0 %v3191
    %3641 = vmatpush1.bf16.msra.mxu0 %v3190
    %3642 = vmatprep.subr.bf16.mxu0 %v3199
    %3643 = vmatpush1.bf16.msra.mxu0 %v3198
    %3644 = vmatprep.subr.bf16.mxu0 %v3207
    %3645 = vmatpush1.bf16.msra.mxu0 %v3206
    %3646 = vmatprep.subr.bf16.mxu0 %v3215
    %3647 = vmatpush1.bf16.msra.mxu0 %v3214
    %3648 = vmatprep.subr.bf16.mxu0 %v3223
    %3649 = vmatpush1.bf16.msra.mxu0 %v3222
    %3650 = vmatprep.subr.bf16.mxu0 %v3231
    %3651 = vmatpush1.bf16.msra.mxu0 %v3230
    %3652 = vmatprep.subr.bf16.mxu0 %v3239
    %3653 = vmatpush1.bf16.msra.mxu0 %v3238
    %3654 = vmatprep.subr.bf16.mxu0 %v3247
    %3655 = vmatpush1.bf16.msra.mxu0 %v3246
    %3656 = vmatprep.subr.bf16.mxu0 %v3255
    %3657 = vmatpush1.bf16.msra.mxu0 %v3254
    %3658 = vmatprep.subr.bf16.mxu0 %v3263
    %3659 = vmatpush1.bf16.msra.mxu0 %v3262
    %3660 = vmatprep.subr.bf16.mxu0 %v3271
    %3661 = vmatpush1.bf16.msra.mxu0 %v3270
    %3662 = vmatprep.subr.bf16.mxu0 %v3279
    %3663 = vmatpush1.bf16.msra.mxu0 %v3278
    %3664 = vmatprep.subr.bf16.mxu0 %v3287
    %3665 = vmatpush1.bf16.msra.mxu0 %v3286
    %3666 = vmatprep.mubr.bf16.mxu0 %v2558
    %3667 = vmatmul.mubr.bf16.gmra.mrb[0].mxu0 %v2557
    %v3668 = vpop.f32.mrb[0].mxu0
    %v3669 = vadd.f32 %v2721, %v3668
    %v3670 = vpop.f32.mrb[0].mxu0
    %v3671 = vadd.f32 %v2725, %v3670
    %v3672 = vpop.f32.mrb[0].mxu0
    %v3673 = vpop.f32.mrb[0].mxu0
    %3674 = vdwg.mxu0
    %3675 = vmatprep.subr.bf16.mxu0 %v3295
    %3676 = vmatpush1.bf16.msra.mxu0 %v3294
    %3677 = vmatprep.subr.bf16.mxu0 %v3462
    %3678 = vmatpush1.bf16.msra.mxu0 %v3459
    %3679 = vmatprep.subr.bf16.mxu0 0
    %3680 = vmatpush1.bf16.msra.mxu0 0
    %3681 = vmatprep.subr.bf16.mxu0 0
    %3682 = vmatpush1.bf16.msra.mxu0 0
    %3683 = vmatprep.subr.bf16.mxu0 0
    %3684 = vmatpush1.bf16.msra.mxu0 0
    %3685 = vmatprep.subr.bf16.mxu0 0
    %3686 = vmatpush1.bf16.msra.mxu0 0
    %3687 = vmatprep.subr.bf16.mxu0 0
    %3688 = vmatpush1.bf16.msra.mxu0 0
    %3689 = vmatprep.subr.bf16.mxu0 0
    %3690 = vmatpush1.bf16.msra.mxu0 0
    %3691 = vmatprep.subr.bf16.mxu0 0
    %3692 = vmatpush1.bf16.msra.mxu0 0
    %3693 = vmatprep.subr.bf16.mxu0 0
    %3694 = vmatpush1.bf16.msra.mxu0 0
    %3695 = vmatprep.subr.bf16.mxu0 0
    %3696 = vmatpush1.bf16.msra.mxu0 0
    %3697 = vmatprep.subr.bf16.mxu0 0
    %3698 = vmatpush1.bf16.msra.mxu0 0
    %3699 = vmatprep.subr.bf16.mxu0 0
    %3700 = vmatpush1.bf16.msra.mxu0 0
    %3701 = vmatprep.subr.bf16.mxu0 0
    %3702 = vmatpush1.bf16.msra.mxu0 0
    %3703 = vmatprep.subr.bf16.mxu0 0
    %3704 = vmatpush1.bf16.msra.mxu0 0
    %3705 = vmatprep.subr.bf16.mxu0 0
    %3706 = vmatpush1.bf16.msra.mxu0 0
    %3707 = vmatprep.mubr.bf16.mxu0 0
    %3708 = vmatmul.mubr.bf16.gmra.mrb[0].mxu0 %v3444
    %v3709 = vpop.f32.mrb[0].mxu0
    %v3710 = vadd.f32 %v3669, %v3709
    %v3711 = vpop.f32.mrb[0].mxu0
    %v3712 = vadd.f32 %v3671, %v3711
    %v3713 = vpop.f32.mrb[0].mxu0
    %v3714 = vpop.f32.mrb[0].mxu0
    %3715 = vdwg.mxu0
    %3716 = vmatprep.subr.bf16.mxu0 %v3169
    %3717 = vmatpush1.bf16.msra.mxu0 %v3168
    %3718 = vmatprep.subr.bf16.mxu0 %v3177
    %3719 = vmatpush1.bf16.msra.mxu0 %v3176
    %3720 = vmatprep.subr.bf16.mxu0 %v3185
    %3721 = vmatpush1.bf16.msra.mxu0 %v3184
    %3722 = vmatprep.subr.bf16.mxu0 %v3193
    %3723 = vmatpush1.bf16.msra.mxu0 %v3192
    %3724 = vmatprep.subr.bf16.mxu0 %v3201
    %3725 = vmatpush1.bf16.msra.mxu0 %v3200
    %3726 = vmatprep.subr.bf16.mxu0 %v3209
    %3727 = vmatpush1.bf16.msra.mxu0 %v3208
    %3728 = vmatprep.subr.bf16.mxu0 %v3217
    %3729 = vmatpush1.bf16.msra.mxu0 %v3216
    %3730 = vmatprep.subr.bf16.mxu0 %v3225
    %3731 = vmatpush1.bf16.msra.mxu0 %v3224
    %3732 = vmatprep.subr.bf16.mxu0 %v3233
    %3733 = vmatpush1.bf16.msra.mxu0 %v3232
    %3734 = vmatprep.subr.bf16.mxu0 %v3241
    %3735 = vmatpush1.bf16.msra.mxu0 %v3240
    %3736 = vmatprep.subr.bf16.mxu0 %v3249
    %3737 = vmatpush1.bf16.msra.mxu0 %v3248
    %3738 = vmatprep.subr.bf16.mxu0 %v3257
    %3739 = vmatpush1.bf16.msra.mxu0 %v3256
    %3740 = vmatprep.subr.bf16.mxu0 %v3265
    %3741 = vmatpush1.bf16.msra.mxu0 %v3264
    %3742 = vmatprep.subr.bf16.mxu0 %v3273
    %3743 = vmatpush1.bf16.msra.mxu0 %v3272
    %3744 = vmatprep.subr.bf16.mxu0 %v3281
    %3745 = vmatpush1.bf16.msra.mxu0 %v3280
    %3746 = vmatprep.subr.bf16.mxu0 %v3289
    %3747 = vmatpush1.bf16.msra.mxu0 %v3288
    %3748 = vmatprep.mubr.bf16.mxu0 %v2558
    %3749 = vmatmul.mubr.bf16.gmra.mrb[0].mxu0 %v2557
    %v3750 = vpop.f32.mrb[0].mxu0
    %v3751 = vadd.f32 %v2729, %v3750
    %v3752 = vpop.f32.mrb[0].mxu0
    %v3753 = vadd.f32 %v2733, %v3752
    %v3754 = vpop.f32.mrb[0].mxu0
    %v3755 = vpop.f32.mrb[0].mxu0
    %3756 = vdwg.mxu0
    %3757 = vmatprep.subr.bf16.mxu0 %v3297
    %3758 = vmatpush1.bf16.msra.mxu0 %v3296
    %3759 = vmatprep.subr.bf16.mxu0 %v3468
    %3760 = vmatpush1.bf16.msra.mxu0 %v3465
    %3761 = vmatprep.subr.bf16.mxu0 0
    %3762 = vmatpush1.bf16.msra.mxu0 0
    %3763 = vmatprep.subr.bf16.mxu0 0
    %3764 = vmatpush1.bf16.msra.mxu0 0
    %3765 = vmatprep.subr.bf16.mxu0 0
    %3766 = vmatpush1.bf16.msra.mxu0 0
    %3767 = vmatprep.subr.bf16.mxu0 0
    %3768 = vmatpush1.bf16.msra.mxu0 0
    %3769 = vmatprep.subr.bf16.mxu0 0
    %3770 = vmatpush1.bf16.msra.mxu0 0
    %3771 = vmatprep.subr.bf16.mxu0 0
    %3772 = vmatpush1.bf16.msra.mxu0 0
    %3773 = vmatprep.subr.bf16.mxu0 0
    %3774 = vmatpush1.bf16.msra.mxu0 0
    %3775 = vmatprep.subr.bf16.mxu0 0
    %3776 = vmatpush1.bf16.msra.mxu0 0
    %3777 = vmatprep.subr.bf16.mxu0 0
    %3778 = vmatpush1.bf16.msra.mxu0 0
    %3779 = vmatprep.subr.bf16.mxu0 0
    %3780 = vmatpush1.bf16.msra.mxu0 0
    %3781 = vmatprep.subr.bf16.mxu0 0
    %3782 = vmatpush1.bf16.msra.mxu0 0
    %3783 = vmatprep.subr.bf16.mxu0 0
    %3784 = vmatpush1.bf16.msra.mxu0 0
    %3785 = vmatprep.subr.bf16.mxu0 0
    %3786 = vmatpush1.bf16.msra.mxu0 0
    %3787 = vmatprep.subr.bf16.mxu0 0
    %3788 = vmatpush1.bf16.msra.mxu0 0
    %3789 = vmatprep.mubr.bf16.mxu0 0
    %3790 = vmatmul.mubr.bf16.gmra.mrb[0].mxu0 %v3444
    %v3791 = vpop.f32.mrb[0].mxu0
    %v3792 = vadd.f32 %v3751, %v3791
    %v3793 = vpop.f32.mrb[0].mxu0
    %v3794 = vadd.f32 %v3753, %v3793
    %v3795 = vpop.f32.mrb[0].mxu0
    %v3796 = vpop.f32.mrb[0].mxu0
    %3797 = vdwg.mxu0
    %v3798 = vld [vmem:[%s21] sm:$0xff]
    %v3800 = vlaneseq
    %v3801 = vshrl.u32 %v3800, 7
    %v3802 = vsub.s32 0, %v3801
    %v3803 = vrot.slane %v3798, %v3802
    %v3804 = vlaneseq
    %v3805 = vshrl.u32 %v3804, 7
    %v3806 = vsub.s32 1, %v3805
    %v3807 = vrot.slane %v3798, %v3806
    %v3808 = vlaneseq
    %v3809 = vshrl.u32 %v3808, 7
    %v3810 = vsub.s32 2, %v3809
    %v3811 = vrot.slane %v3798, %v3810
    %v3812 = vlaneseq
    %v3813 = vshrl.u32 %v3812, 7
    %v3814 = vsub.s32 3, %v3813
    %v3815 = vrot.slane %v3798, %v3814
    %v3816 = vlaneseq
    %v3817 = vshrl.u32 %v3816, 7
    %v3818 = vsub.s32 4, %v3817
    %v3819 = vrot.slane %v3798, %v3818
    %v3820 = vlaneseq
    %v3821 = vshrl.u32 %v3820, 7
    %v3822 = vsub.s32 5, %v3821
    %v3823 = vrot.slane %v3798, %v3822
    %v3824 = vlaneseq
    %v3825 = vshrl.u32 %v3824, 7
    %v3826 = vsub.s32 6, %v3825
    %v3827 = vrot.slane %v3798, %v3826
    %v3828 = vlaneseq
    %v3829 = vshrl.u32 %v3828, 7
    %v3830 = vsub.s32 7, %v3829
    %v3831 = vrot.slane %v3798, %v3830
    %v3840 = vmul.f32 %v3546, %v3803
    %v3841 = vmul.f32 %v3548, %v3807
    %v3842 = vmul.f32 %v3628, %v3811
    %v3843 = vmul.f32 %v3630, %v3815
    %v3844 = vmul.f32 %v3710, %v3819
    %v3845 = vmul.f32 %v3712, %v3823
    %v3846 = vmul.f32 %v3792, %v3827
    %v3847 = vmul.f32 %v3794, %v3831
    %v3848 = vld [vmem:[%s22] sm:$0xff]
    %v3850 = vlaneseq
    %v3851 = vshrl.u32 %v3850, 7
    %v3852 = vsub.s32 0, %v3851
    %v3853 = vrot.slane %v3848, %v3852
    %v3854 = vlaneseq
    %v3855 = vshrl.u32 %v3854, 7
    %v3856 = vsub.s32 1, %v3855
    %v3857 = vrot.slane %v3848, %v3856
    %v3858 = vlaneseq
    %v3859 = vshrl.u32 %v3858, 7
    %v3860 = vsub.s32 2, %v3859
    %v3861 = vrot.slane %v3848, %v3860
    %v3862 = vlaneseq
    %v3863 = vshrl.u32 %v3862, 7
    %v3864 = vsub.s32 3, %v3863
    %v3865 = vrot.slane %v3848, %v3864
    %v3866 = vlaneseq
    %v3867 = vshrl.u32 %v3866, 7
    %v3868 = vsub.s32 4, %v3867
    %v3869 = vrot.slane %v3848, %v3868
    %v3870 = vlaneseq
    %v3871 = vshrl.u32 %v3870, 7
    %v3872 = vsub.s32 5, %v3871
    %v3873 = vrot.slane %v3848, %v3872
    %v3874 = vlaneseq
    %v3875 = vshrl.u32 %v3874, 7
    %v3876 = vsub.s32 6, %v3875
    %v3877 = vrot.slane %v3848, %v3876
    %v3878 = vlaneseq
    %v3879 = vshrl.u32 %v3878, 7
    %v3880 = vsub.s32 7, %v3879
    %v3881 = vrot.slane %v3848, %v3880
    %v3890 = vadd.f32 %v3840, %v3853
    %v3891 = vadd.f32 %v3841, %v3857
    %v3892 = vadd.f32 %v3842, %v3861
    %v3893 = vadd.f32 %v3843, %v3865
    %v3894 = vadd.f32 %v3844, %v3869
    %v3895 = vadd.f32 %v3845, %v3873
    %v3896 = vadd.f32 %v3846, %v3877
    %v3897 = vadd.f32 %v3847, %v3881
    %v3898 = vmax.f32 %v3890, 0.0
    %v3899 = vmax.f32 %v3891, 0.0
    %v3900 = vmax.f32 %v3892, 0.0
    %v3901 = vmax.f32 %v3893, 0.0
    %v3902 = vmax.f32 %v3894, 0.0
    %v3903 = vmax.f32 %v3895, 0.0
    %v3904 = vmax.f32 %v3896, 0.0
    %v3905 = vmax.f32 %v3897, 0.0
    %v3906 = vpack.c.bf16 %v3898, %v3898
    %v3907 = vpack.c.bf16 %v3899, %v3899
    %v3908 = vpack.c.bf16 %v3900, %v3900
    %v3909 = vpack.c.bf16 %v3901, %v3901
    %v3910 = vpack.c.bf16 %v3902, %v3902
    %v3911 = vpack.c.bf16 %v3903, %v3903
    %v3912 = vpack.c.bf16 %v3904, %v3904
    %v3913 = vpack.c.bf16 %v3905, %v3905
    %v3914 = vld [vmem:[#allocation19] sm:$0xf]
    %v3915 = vld [vmem:[#allocation19 + $0x4] sm:$0xf]
    %v3916 = vld [vmem:[#allocation19 + $0x8] sm:$0xf]
    %v3917 = vld [vmem:[#allocation19 + $0xc] sm:$0xf]
    %v3918 = vld [vmem:[#allocation19 + $0x10] sm:$0xf]
    %v3919 = vld [vmem:[#allocation19 + $0x14] sm:$0xf]
    %v3920 = vld [vmem:[#allocation19 + $0x18] sm:$0xf]
    %v3921 = vld [vmem:[#allocation19 + $0x1c] sm:$0xf]
    %v3922 = vld [vmem:[#allocation19 + $0x20] sm:$0xf]
    %v3923 = vld [vmem:[#allocation19 + $0x24] sm:$0xf]
    %v3924 = vld [vmem:[#allocation19 + $0x28] sm:$0xf]
    %v3925 = vld [vmem:[#allocation19 + $0x2c] sm:$0xf]
    %v3926 = vld [vmem:[#allocation19 + $0x30] sm:$0xf]
    %v3927 = vld [vmem:[#allocation19 + $0x34] sm:$0xf]
    %v3928 = vld [vmem:[#allocation19 + $0x38] sm:$0xf]
    %v3929 = vld [vmem:[#allocation19 + $0x3c] sm:$0xf]
    %v3930 = vld [vmem:[#allocation19 + $0x40] sm:$0xf]
    %v3931 = vld [vmem:[#allocation19 + $0x44] sm:$0xf]
    %v3932 = vld [vmem:[#allocation19 + $0x48] sm:$0xf]
    %v3933 = vld [vmem:[#allocation19 + $0x4c] sm:$0xf]
    %v3934 = vld [vmem:[#allocation19 + $0x50] sm:$0xf]
    %v3935 = vld [vmem:[#allocation19 + $0x54] sm:$0xf]
    %v3936 = vld [vmem:[#allocation19 + $0x58] sm:$0xf]
    %v3937 = vld [vmem:[#allocation19 + $0x5c] sm:$0xf]
    %v3938 = vld [vmem:[#allocation19 + $0x60] sm:$0xf]
    %v3939 = vld [vmem:[#allocation19 + $0x64] sm:$0xf]
    %v3940 = vld [vmem:[#allocation19 + $0x68] sm:$0xf]
    %v3941 = vld [vmem:[#allocation19 + $0x6c] sm:$0xf]
    %v3942 = vld [vmem:[#allocation19 + $0x70] sm:$0xf]
    %v3943 = vld [vmem:[#allocation19 + $0x74] sm:$0xf]
    %v3944 = vld [vmem:[#allocation19 + $0x78] sm:$0xf]
    %v3945 = vld [vmem:[#allocation19 + $0x7c] sm:$0xf]
    %v3946 = vld [vmem:[#allocation19 + $0x80] sm:$0xf]
    %v3947 = vld [vmem:[#allocation19 + $0x84] sm:$0xf]
    %v3948 = vld [vmem:[#allocation19 + $0x88] sm:$0xf]
    %v3949 = vld [vmem:[#allocation19 + $0x8c] sm:$0xf]
    %v3950 = vld [vmem:[#allocation19 + $0x90] sm:$0xf]
    %v3951 = vld [vmem:[#allocation19 + $0x94] sm:$0xf]
    %v3952 = vld [vmem:[#allocation19 + $0x98] sm:$0xf]
    %v3953 = vld [vmem:[#allocation19 + $0x9c] sm:$0xf]
    %v3954 = vld [vmem:[#allocation19 + $0xa0] sm:$0xf]
    %v3955 = vld [vmem:[#allocation19 + $0xa4] sm:$0xf]
    %v3956 = vld [vmem:[#allocation19 + $0xa8] sm:$0xf]
    %v3957 = vld [vmem:[#allocation19 + $0xac] sm:$0xf]
    %v3958 = vld [vmem:[#allocation19 + $0xb0] sm:$0xf]
    %v3959 = vld [vmem:[#allocation19 + $0xb4] sm:$0xf]
    %v3960 = vld [vmem:[#allocation19 + $0xb8] sm:$0xf]
    %v3961 = vld [vmem:[#allocation19 + $0xbc] sm:$0xf]
    %v3962 = vld [vmem:[#allocation19 + $0xc0] sm:$0xf]
    %v3963 = vld [vmem:[#allocation19 + $0xc4] sm:$0xf]
    %v3964 = vld [vmem:[#allocation19 + $0xc8] sm:$0xf]
    %v3965 = vld [vmem:[#allocation19 + $0xcc] sm:$0xf]
    %v3966 = vld [vmem:[#allocation19 + $0xd0] sm:$0xf]
    %v3967 = vld [vmem:[#allocation19 + $0xd4] sm:$0xf]
    %v3968 = vld [vmem:[#allocation19 + $0xd8] sm:$0xf]
    %v3969 = vld [vmem:[#allocation19 + $0xdc] sm:$0xf]
    %v3970 = vld [vmem:[#allocation19 + $0xe0] sm:$0xf]
    %v3971 = vld [vmem:[#allocation19 + $0xe4] sm:$0xf]
    %v3972 = vld [vmem:[#allocation19 + $0xe8] sm:$0xf]
    %v3973 = vld [vmem:[#allocation19 + $0xec] sm:$0xf]
    %v3974 = vld [vmem:[#allocation19 + $0xf0] sm:$0xf]
    %v3975 = vld [vmem:[#allocation19 + $0xf4] sm:$0xf]
    %v3976 = vld [vmem:[#allocation19 + $0xf8] sm:$0xf]
    %v3977 = vld [vmem:[#allocation19 + $0xfc] sm:$0xf]
    %v3978 = vld [vmem:[#allocation19 + $0x100] sm:$0xf]
    %v3979 = vld [vmem:[#allocation19 + $0x104] sm:$0xf]
    %v3980 = vld [vmem:[#allocation19 + $0x108] sm:$0xf]
    %v3981 = vld [vmem:[#allocation19 + $0x10c] sm:$0xf]
    %v3982 = vld [vmem:[#allocation19 + $0x110] sm:$0xf]
    %v3983 = vld [vmem:[#allocation19 + $0x114] sm:$0xf]
    %v3984 = vld [vmem:[#allocation19 + $0x118] sm:$0xf]
    %v3985 = vld [vmem:[#allocation19 + $0x11c] sm:$0xf]
    %v3986 = vld [vmem:[#allocation19 + $0x120] sm:$0xf]
    %v3987 = vld [vmem:[#allocation19 + $0x124] sm:$0xf]
    %v3988 = vld [vmem:[#allocation19 + $0x128] sm:$0xf]
    %v3989 = vld [vmem:[#allocation19 + $0x12c] sm:$0xf]
    %v3990 = vld [vmem:[#allocation19 + $0x130] sm:$0xf]
    %v3991 = vld [vmem:[#allocation19 + $0x134] sm:$0xf]
    %v3992 = vld [vmem:[#allocation19 + $0x138] sm:$0xf]
    %v3993 = vld [vmem:[#allocation19 + $0x13c] sm:$0xf]
    %v3994 = vld [vmem:[#allocation19 + $0x140] sm:$0xf]
    %v3995 = vld [vmem:[#allocation19 + $0x144] sm:$0xf]
    %v3996 = vld [vmem:[#allocation19 + $0x148] sm:$0xf]
    %v3997 = vld [vmem:[#allocation19 + $0x14c] sm:$0xf]
    %v3998 = vld [vmem:[#allocation19 + $0x150] sm:$0xf]
    %v3999 = vld [vmem:[#allocation19 + $0x154] sm:$0xf]
    %v4000 = vld [vmem:[#allocation19 + $0x158] sm:$0xf]
    %v4001 = vld [vmem:[#allocation19 + $0x15c] sm:$0xf]
    %v4002 = vld [vmem:[#allocation19 + $0x160] sm:$0xf]
    %v4003 = vld [vmem:[#allocation19 + $0x164] sm:$0xf]
    %v4004 = vld [vmem:[#allocation19 + $0x168] sm:$0xf]
    %v4005 = vld [vmem:[#allocation19 + $0x16c] sm:$0xf]
    %v4006 = vld [vmem:[#allocation19 + $0x170] sm:$0xf]
    %v4007 = vld [vmem:[#allocation19 + $0x174] sm:$0xf]
    %v4008 = vld [vmem:[#allocation19 + $0x178] sm:$0xf]
    %v4009 = vld [vmem:[#allocation19 + $0x17c] sm:$0xf]
    %v4010 = vld [vmem:[#allocation19 + $0x180] sm:$0xf]
    %v4011 = vld [vmem:[#allocation19 + $0x184] sm:$0xf]
    %v4012 = vld [vmem:[#allocation19 + $0x188] sm:$0xf]
    %v4013 = vld [vmem:[#allocation19 + $0x18c] sm:$0xf]
    %v4014 = vld [vmem:[#allocation19 + $0x190] sm:$0xf]
    %v4015 = vld [vmem:[#allocation19 + $0x194] sm:$0xf]
    %v4016 = vld [vmem:[#allocation19 + $0x198] sm:$0xf]
    %v4017 = vld [vmem:[#allocation19 + $0x19c] sm:$0xf]
    %v4018 = vld [vmem:[#allocation19 + $0x1a0] sm:$0xf]
    %v4019 = vld [vmem:[#allocation19 + $0x1a4] sm:$0xf]
    %v4020 = vld [vmem:[#allocation19 + $0x1a8] sm:$0xf]
    %v4021 = vld [vmem:[#allocation19 + $0x1ac] sm:$0xf]
    %v4022 = vld [vmem:[#allocation19 + $0x1b0] sm:$0xf]
    %v4023 = vld [vmem:[#allocation19 + $0x1b4] sm:$0xf]
    %v4024 = vld [vmem:[#allocation19 + $0x1b8] sm:$0xf]
    %v4025 = vld [vmem:[#allocation19 + $0x1bc] sm:$0xf]
    %v4026 = vld [vmem:[#allocation19 + $0x1c0] sm:$0xf]
    %v4027 = vld [vmem:[#allocation19 + $0x1c4] sm:$0xf]
    %v4028 = vld [vmem:[#allocation19 + $0x1c8] sm:$0xf]
    %v4029 = vld [vmem:[#allocation19 + $0x1cc] sm:$0xf]
    %v4030 = vld [vmem:[#allocation19 + $0x1d0] sm:$0xf]
    %v4031 = vld [vmem:[#allocation19 + $0x1d4] sm:$0xf]
    %v4032 = vld [vmem:[#allocation19 + $0x1d8] sm:$0xf]
    %v4033 = vld [vmem:[#allocation19 + $0x1dc] sm:$0xf]
    %v4034 = vld [vmem:[#allocation19 + $0x1e0] sm:$0xf]
    %v4035 = vld [vmem:[#allocation19 + $0x1e4] sm:$0xf]
    %v4036 = vld [vmem:[#allocation19 + $0x1e8] sm:$0xf]
    %v4037 = vld [vmem:[#allocation19 + $0x1ec] sm:$0xf]
    %v4038 = vld [vmem:[#allocation19 + $0x1f0] sm:$0xf]
    %v4039 = vld [vmem:[#allocation19 + $0x1f4] sm:$0xf]
    %v4040 = vld [vmem:[#allocation19 + $0x1f8] sm:$0xf]
    %v4041 = vld [vmem:[#allocation19 + $0x1fc] sm:$0xf]
    %v4042 = vld [vmem:[%s24] sm:$0x1]
    %v4044 = vlaneseq
    %v4045 = vshrl.u32 %v4044, 7
    %v4046 = vsub.s32 0, %v4045
    %v4047 = vrot.slane %v4042, %v4046
    %v4177 = vunpack.c.l.b16 %v3914
    %v4178 = vunpack.c.l.b16 %v3915
    %v4179 = vunpack.c.l.b16 %v3916
    %v4180 = vunpack.c.l.b16 %v3917
    %v4181 = vunpack.c.l.b16 %v3918
    %v4182 = vunpack.c.l.b16 %v3919
    %v4183 = vunpack.c.l.b16 %v3920
    %v4184 = vunpack.c.l.b16 %v3921
    %v4185 = vunpack.c.l.b16 %v3922
    %v4186 = vunpack.c.l.b16 %v3923
    %v4187 = vunpack.c.l.b16 %v3924
    %v4188 = vunpack.c.l.b16 %v3925
    %v4189 = vunpack.c.l.b16 %v3926
    %v4190 = vunpack.c.l.b16 %v3927
    %v4191 = vunpack.c.l.b16 %v3928
    %v4192 = vunpack.c.l.b16 %v3929
    %v4193 = vunpack.c.l.b16 %v3930
    %v4194 = vunpack.c.l.b16 %v3931
    %v4195 = vunpack.c.l.b16 %v3932
    %v4196 = vunpack.c.l.b16 %v3933
    %v4197 = vunpack.c.l.b16 %v3934
    %v4198 = vunpack.c.l.b16 %v3935
    %v4199 = vunpack.c.l.b16 %v3936
    %v4200 = vunpack.c.l.b16 %v3937
    %v4201 = vunpack.c.l.b16 %v3938
    %v4202 = vunpack.c.l.b16 %v3939
    %v4203 = vunpack.c.l.b16 %v3940
    %v4204 = vunpack.c.l.b16 %v3941
    %v4205 = vunpack.c.l.b16 %v3942
    %v4206 = vunpack.c.l.b16 %v3943
    %v4207 = vunpack.c.l.b16 %v3944
    %v4208 = vunpack.c.l.b16 %v3945
    %v4209 = vunpack.c.l.b16 %v3946
    %v4210 = vunpack.c.l.b16 %v3947
    %v4211 = vunpack.c.l.b16 %v3948
    %v4212 = vunpack.c.l.b16 %v3949
    %v4213 = vunpack.c.l.b16 %v3950
    %v4214 = vunpack.c.l.b16 %v3951
    %v4215 = vunpack.c.l.b16 %v3952
    %v4216 = vunpack.c.l.b16 %v3953
    %v4217 = vunpack.c.l.b16 %v3954
    %v4218 = vunpack.c.l.b16 %v3955
    %v4219 = vunpack.c.l.b16 %v3956
    %v4220 = vunpack.c.l.b16 %v3957
    %v4221 = vunpack.c.l.b16 %v3958
    %v4222 = vunpack.c.l.b16 %v3959
    %v4223 = vunpack.c.l.b16 %v3960
    %v4224 = vunpack.c.l.b16 %v3961
    %v4225 = vunpack.c.l.b16 %v3962
    %v4226 = vunpack.c.l.b16 %v3963
    %v4227 = vunpack.c.l.b16 %v3964
    %v4228 = vunpack.c.l.b16 %v3965
    %v4229 = vunpack.c.l.b16 %v3966
    %v4230 = vunpack.c.l.b16 %v3967
    %v4231 = vunpack.c.l.b16 %v3968
    %v4232 = vunpack.c.l.b16 %v3969
    %v4233 = vunpack.c.l.b16 %v3970
    %v4234 = vunpack.c.l.b16 %v3971
    %v4235 = vunpack.c.l.b16 %v3972
    %v4236 = vunpack.c.l.b16 %v3973
    %v4237 = vunpack.c.l.b16 %v3974
    %v4238 = vunpack.c.l.b16 %v3975
    %v4239 = vunpack.c.l.b16 %v3976
    %v4240 = vunpack.c.l.b16 %v3977
    %v4241 = vunpack.c.l.b16 %v3978
    %v4242 = vunpack.c.l.b16 %v3979
    %v4243 = vunpack.c.l.b16 %v3980
    %v4244 = vunpack.c.l.b16 %v3981
    %v4245 = vunpack.c.l.b16 %v3982
    %v4246 = vunpack.c.l.b16 %v3983
    %v4247 = vunpack.c.l.b16 %v3984
    %v4248 = vunpack.c.l.b16 %v3985
    %v4249 = vunpack.c.l.b16 %v3986
    %v4250 = vunpack.c.l.b16 %v3987
    %v4251 = vunpack.c.l.b16 %v3988
    %v4252 = vunpack.c.l.b16 %v3989
    %v4253 = vunpack.c.l.b16 %v3990
    %v4254 = vunpack.c.l.b16 %v3991
    %v4255 = vunpack.c.l.b16 %v3992
    %v4256 = vunpack.c.l.b16 %v3993
    %v4257 = vunpack.c.l.b16 %v3994
    %v4258 = vunpack.c.l.b16 %v3995
    %v4259 = vunpack.c.l.b16 %v3996
    %v4260 = vunpack.c.l.b16 %v3997
    %v4261 = vunpack.c.l.b16 %v3998
    %v4262 = vunpack.c.l.b16 %v3999
    %v4263 = vunpack.c.l.b16 %v4000
    %v4264 = vunpack.c.l.b16 %v4001
    %v4265 = vunpack.c.l.b16 %v4002
    %v4266 = vunpack.c.l.b16 %v4003
    %v4267 = vunpack.c.l.b16 %v4004
    %v4268 = vunpack.c.l.b16 %v4005
    %v4269 = vunpack.c.l.b16 %v4006
    %v4270 = vunpack.c.l.b16 %v4007
    %v4271 = vunpack.c.l.b16 %v4008
    %v4272 = vunpack.c.l.b16 %v4009
    %v4273 = vunpack.c.l.b16 %v4010
    %v4274 = vunpack.c.l.b16 %v4011
    %v4275 = vunpack.c.l.b16 %v4012
    %v4276 = vunpack.c.l.b16 %v4013
    %v4277 = vunpack.c.l.b16 %v4014
    %v4278 = vunpack.c.l.b16 %v4015
    %v4279 = vunpack.c.l.b16 %v4016
    %v4280 = vunpack.c.l.b16 %v4017
    %v4281 = vunpack.c.l.b16 %v4018
    %v4282 = vunpack.c.l.b16 %v4019
    %v4283 = vunpack.c.l.b16 %v4020
    %v4284 = vunpack.c.l.b16 %v4021
    %v4285 = vunpack.c.l.b16 %v4022
    %v4286 = vunpack.c.l.b16 %v4023
    %v4287 = vunpack.c.l.b16 %v4024
    %v4288 = vunpack.c.l.b16 %v4025
    %v4289 = vunpack.c.l.b16 %v4026
    %v4290 = vunpack.c.l.b16 %v4027
    %v4291 = vunpack.c.l.b16 %v4028
    %v4292 = vunpack.c.l.b16 %v4029
    %v4293 = vunpack.c.l.b16 %v4030
    %v4294 = vunpack.c.l.b16 %v4031
    %v4295 = vunpack.c.l.b16 %v4032
    %v4296 = vunpack.c.l.b16 %v4033
    %v4297 = vunpack.c.l.b16 %v4034
    %v4298 = vunpack.c.l.b16 %v4035
    %v4299 = vunpack.c.l.b16 %v4036
    %v4300 = vunpack.c.l.b16 %v4037
    %v4301 = vunpack.c.l.b16 %v4038
    %v4302 = vunpack.c.l.b16 %v4039
    %v4303 = vunpack.c.l.b16 %v4040
    %v4304 = vunpack.c.l.b16 %v4041
    %v4305 = vpack.c.b16 %v4178, %v4177
    %v4306 = vpack.c.b16 %v4180, %v4179
    %v4307 = vpack.c.b16 %v4182, %v4181
    %v4308 = vpack.c.b16 %v4184, %v4183
    %v4309 = vpack.c.b16 %v4186, %v4185
    %v4310 = vpack.c.b16 %v4188, %v4187
    %v4311 = vpack.c.b16 %v4190, %v4189
    %v4312 = vpack.c.b16 %v4192, %v4191
    %v4313 = vpack.c.b16 %v4194, %v4193
    %v4314 = vpack.c.b16 %v4196, %v4195
    %v4315 = vpack.c.b16 %v4198, %v4197
    %v4316 = vpack.c.b16 %v4200, %v4199
    %v4317 = vpack.c.b16 %v4202, %v4201
    %v4318 = vpack.c.b16 %v4204, %v4203
    %v4319 = vpack.c.b16 %v4206, %v4205
    %v4320 = vpack.c.b16 %v4208, %v4207
    %v4321 = vpack.c.b16 %v4210, %v4209
    %v4322 = vpack.c.b16 %v4212, %v4211
    %v4323 = vpack.c.b16 %v4214, %v4213
    %v4324 = vpack.c.b16 %v4216, %v4215
    %v4325 = vpack.c.b16 %v4218, %v4217
    %v4326 = vpack.c.b16 %v4220, %v4219
    %v4327 = vpack.c.b16 %v4222, %v4221
    %v4328 = vpack.c.b16 %v4224, %v4223
    %v4329 = vpack.c.b16 %v4226, %v4225
    %v4330 = vpack.c.b16 %v4228, %v4227
    %v4331 = vpack.c.b16 %v4230, %v4229
    %v4332 = vpack.c.b16 %v4232, %v4231
    %v4333 = vpack.c.b16 %v4234, %v4233
    %v4334 = vpack.c.b16 %v4236, %v4235
    %v4335 = vpack.c.b16 %v4238, %v4237
    %v4336 = vpack.c.b16 %v4240, %v4239
    %v4337 = vpack.c.b16 %v4242, %v4241
    %v4338 = vpack.c.b16 %v4244, %v4243
    %v4339 = vpack.c.b16 %v4246, %v4245
    %v4340 = vpack.c.b16 %v4248, %v4247
    %v4341 = vpack.c.b16 %v4250, %v4249
    %v4342 = vpack.c.b16 %v4252, %v4251
    %v4343 = vpack.c.b16 %v4254, %v4253
    %v4344 = vpack.c.b16 %v4256, %v4255
    %v4345 = vpack.c.b16 %v4258, %v4257
    %v4346 = vpack.c.b16 %v4260, %v4259
    %v4347 = vpack.c.b16 %v4262, %v4261
    %v4348 = vpack.c.b16 %v4264, %v4263
    %v4349 = vpack.c.b16 %v4266, %v4265
    %v4350 = vpack.c.b16 %v4268, %v4267
    %v4351 = vpack.c.b16 %v4270, %v4269
    %v4352 = vpack.c.b16 %v4272, %v4271
    %v4353 = vpack.c.b16 %v4274, %v4273
    %v4354 = vpack.c.b16 %v4276, %v4275
    %v4355 = vpack.c.b16 %v4278, %v4277
    %v4356 = vpack.c.b16 %v4280, %v4279
    %v4357 = vpack.c.b16 %v4282, %v4281
    %v4358 = vpack.c.b16 %v4284, %v4283
    %v4359 = vpack.c.b16 %v4286, %v4285
    %v4360 = vpack.c.b16 %v4288, %v4287
    %v4361 = vpack.c.b16 %v4290, %v4289
    %v4362 = vpack.c.b16 %v4292, %v4291
    %v4363 = vpack.c.b16 %v4294, %v4293
    %v4364 = vpack.c.b16 %v4296, %v4295
    %v4365 = vpack.c.b16 %v4298, %v4297
    %v4366 = vpack.c.b16 %v4300, %v4299
    %v4367 = vpack.c.b16 %v4302, %v4301
    %v4368 = vpack.c.b16 %v4304, %v4303
    %4433 = vmatprep.subr.bf16.mxu0 0
    %4434 = vmatpush1.bf16.msra.mxu0 %v4305
    %4435 = vmatprep.subr.bf16.mxu0 0
    %4436 = vmatpush1.bf16.msra.mxu0 %v4306
    %4437 = vmatprep.subr.bf16.mxu0 0
    %4438 = vmatpush1.bf16.msra.mxu0 %v4307
    %4439 = vmatprep.subr.bf16.mxu0 0
    %4440 = vmatpush1.bf16.msra.mxu0 %v4308
    %4441 = vmatprep.subr.bf16.mxu0 0
    %4442 = vmatpush1.bf16.msra.mxu0 %v4309
    %4443 = vmatprep.subr.bf16.mxu0 0
    %4444 = vmatpush1.bf16.msra.mxu0 %v4310
    %4445 = vmatprep.subr.bf16.mxu0 0
    %4446 = vmatpush1.bf16.msra.mxu0 %v4311
    %4447 = vmatprep.subr.bf16.mxu0 0
    %4448 = vmatpush1.bf16.msra.mxu0 %v4312
    %4449 = vmatprep.subr.bf16.mxu0 0
    %4450 = vmatpush1.bf16.msra.mxu0 %v4313
    %4451 = vmatprep.subr.bf16.mxu0 0
    %4452 = vmatpush1.bf16.msra.mxu0 %v4314
    %4453 = vmatprep.subr.bf16.mxu0 0
    %4454 = vmatpush1.bf16.msra.mxu0 %v4315
    %4455 = vmatprep.subr.bf16.mxu0 0
    %4456 = vmatpush1.bf16.msra.mxu0 %v4316
    %4457 = vmatprep.subr.bf16.mxu0 0
    %4458 = vmatpush1.bf16.msra.mxu0 %v4317
    %4459 = vmatprep.subr.bf16.mxu0 0
    %4460 = vmatpush1.bf16.msra.mxu0 %v4318
    %4461 = vmatprep.subr.bf16.mxu0 0
    %4462 = vmatpush1.bf16.msra.mxu0 %v4319
    %4463 = vmatprep.subr.bf16.mxu0 0
    %4464 = vmatpush1.bf16.msra.mxu0 %v4320
    %4465 = vmatprep.mubr.bf16.mxu0 %v3907
    %4466 = vmatmul.mubr.bf16.gmra.mrb[0].mxu0 %v3906
    %v4467 = vpop.f32.mrb[0].mxu0
    %v4468 = vadd.f32 %v4047, %v4467
    %v4469 = vpop.f32.mrb[0].mxu0
    %v4470 = vpop.f32.mrb[0].mxu0
    %v4471 = vpop.f32.mrb[0].mxu0
    %4472 = vdwg.mxu0
    %4473 = vmatprep.subr.bf16.mxu0 0
    %4474 = vmatpush1.bf16.msra.mxu0 %v4321
    %4475 = vmatprep.subr.bf16.mxu0 0
    %4476 = vmatpush1.bf16.msra.mxu0 %v4322
    %4477 = vmatprep.subr.bf16.mxu0 0
    %4478 = vmatpush1.bf16.msra.mxu0 %v4323
    %4479 = vmatprep.subr.bf16.mxu0 0
    %4480 = vmatpush1.bf16.msra.mxu0 %v4324
    %4481 = vmatprep.subr.bf16.mxu0 0
    %4482 = vmatpush1.bf16.msra.mxu0 %v4325
    %4483 = vmatprep.subr.bf16.mxu0 0
    %4484 = vmatpush1.bf16.msra.mxu0 %v4326
    %4485 = vmatprep.subr.bf16.mxu0 0
    %4486 = vmatpush1.bf16.msra.mxu0 %v4327
    %4487 = vmatprep.subr.bf16.mxu0 0
    %4488 = vmatpush1.bf16.msra.mxu0 %v4328
    %4489 = vmatprep.subr.bf16.mxu0 0
    %4490 = vmatpush1.bf16.msra.mxu0 %v4329
    %4491 = vmatprep.subr.bf16.mxu0 0
    %4492 = vmatpush1.bf16.msra.mxu0 %v4330
    %4493 = vmatprep.subr.bf16.mxu0 0
    %4494 = vmatpush1.bf16.msra.mxu0 %v4331
    %4495 = vmatprep.subr.bf16.mxu0 0
    %4496 = vmatpush1.bf16.msra.mxu0 %v4332
    %4497 = vmatprep.subr.bf16.mxu0 0
    %4498 = vmatpush1.bf16.msra.mxu0 %v4333
    %4499 = vmatprep.subr.bf16.mxu0 0
    %4500 = vmatpush1.bf16.msra.mxu0 %v4334
    %4501 = vmatprep.subr.bf16.mxu0 0
    %4502 = vmatpush1.bf16.msra.mxu0 %v4335
    %4503 = vmatprep.subr.bf16.mxu0 0
    %4504 = vmatpush1.bf16.msra.mxu0 %v4336
    %4505 = vmatprep.mubr.bf16.mxu0 %v3909
    %4506 = vmatmul.mubr.bf16.gmra.mrb[0].mxu0 %v3908
    %v4507 = vpop.f32.mrb[0].mxu0
    %v4508 = vadd.f32 %v4468, %v4507
    %v4509 = vpop.f32.mrb[0].mxu0
    %v4510 = vpop.f32.mrb[0].mxu0
    %v4511 = vpop.f32.mrb[0].mxu0
    %4512 = vdwg.mxu0
    %4513 = vmatprep.subr.bf16.mxu0 0
    %4514 = vmatpush1.bf16.msra.mxu0 %v4337
    %4515 = vmatprep.subr.bf16.mxu0 0
    %4516 = vmatpush1.bf16.msra.mxu0 %v4338
    %4517 = vmatprep.subr.bf16.mxu0 0
    %4518 = vmatpush1.bf16.msra.mxu0 %v4339
    %4519 = vmatprep.subr.bf16.mxu0 0
    %4520 = vmatpush1.bf16.msra.mxu0 %v4340
    %4521 = vmatprep.subr.bf16.mxu0 0
    %4522 = vmatpush1.bf16.msra.mxu0 %v4341
    %4523 = vmatprep.subr.bf16.mxu0 0
    %4524 = vmatpush1.bf16.msra.mxu0 %v4342
    %4525 = vmatprep.subr.bf16.mxu0 0
    %4526 = vmatpush1.bf16.msra.mxu0 %v4343
    %4527 = vmatprep.subr.bf16.mxu0 0
    %4528 = vmatpush1.bf16.msra.mxu0 %v4344
    %4529 = vmatprep.subr.bf16.mxu0 0
    %4530 = vmatpush1.bf16.msra.mxu0 %v4345
    %4531 = vmatprep.subr.bf16.mxu0 0
    %4532 = vmatpush1.bf16.msra.mxu0 %v4346
    %4533 = vmatprep.subr.bf16.mxu0 0
    %4534 = vmatpush1.bf16.msra.mxu0 %v4347
    %4535 = vmatprep.subr.bf16.mxu0 0
    %4536 = vmatpush1.bf16.msra.mxu0 %v4348
    %4537 = vmatprep.subr.bf16.mxu0 0
    %4538 = vmatpush1.bf16.msra.mxu0 %v4349
    %4539 = vmatprep.subr.bf16.mxu0 0
    %4540 = vmatpush1.bf16.msra.mxu0 %v4350
    %4541 = vmatprep.subr.bf16.mxu0 0
    %4542 = vmatpush1.bf16.msra.mxu0 %v4351
    %4543 = vmatprep.subr.bf16.mxu0 0
    %4544 = vmatpush1.bf16.msra.mxu0 %v4352
    %4545 = vmatprep.mubr.bf16.mxu0 %v3911
    %4546 = vmatmul.mubr.bf16.gmra.mrb[0].mxu0 %v3910
    %v4547 = vpop.f32.mrb[0].mxu0
    %v4548 = vadd.f32 %v4508, %v4547
    %v4549 = vpop.f32.mrb[0].mxu0
    %v4550 = vpop.f32.mrb[0].mxu0
    %v4551 = vpop.f32.mrb[0].mxu0
    %4552 = vdwg.mxu0
    %4553 = vmatprep.subr.bf16.mxu0 0
    %4554 = vmatpush1.bf16.msra.mxu0 %v4353
    %4555 = vmatprep.subr.bf16.mxu0 0
    %4556 = vmatpush1.bf16.msra.mxu0 %v4354
    %4557 = vmatprep.subr.bf16.mxu0 0
    %4558 = vmatpush1.bf16.msra.mxu0 %v4355
    %4559 = vmatprep.subr.bf16.mxu0 0
    %4560 = vmatpush1.bf16.msra.mxu0 %v4356
    %4561 = vmatprep.subr.bf16.mxu0 0
    %4562 = vmatpush1.bf16.msra.mxu0 %v4357
    %4563 = vmatprep.subr.bf16.mxu0 0
    %4564 = vmatpush1.bf16.msra.mxu0 %v4358
    %4565 = vmatprep.subr.bf16.mxu0 0
    %4566 = vmatpush1.bf16.msra.mxu0 %v4359
    %4567 = vmatprep.subr.bf16.mxu0 0
    %4568 = vmatpush1.bf16.msra.mxu0 %v4360
    %4569 = vmatprep.subr.bf16.mxu0 0
    %4570 = vmatpush1.bf16.msra.mxu0 %v4361
    %4571 = vmatprep.subr.bf16.mxu0 0
    %4572 = vmatpush1.bf16.msra.mxu0 %v4362
    %4573 = vmatprep.subr.bf16.mxu0 0
    %4574 = vmatpush1.bf16.msra.mxu0 %v4363
    %4575 = vmatprep.subr.bf16.mxu0 0
    %4576 = vmatpush1.bf16.msra.mxu0 %v4364
    %4577 = vmatprep.subr.bf16.mxu0 0
    %4578 = vmatpush1.bf16.msra.mxu0 %v4365
    %4579 = vmatprep.subr.bf16.mxu0 0
    %4580 = vmatpush1.bf16.msra.mxu0 %v4366
    %4581 = vmatprep.subr.bf16.mxu0 0
    %4582 = vmatpush1.bf16.msra.mxu0 %v4367
    %4583 = vmatprep.subr.bf16.mxu0 0
    %4584 = vmatpush1.bf16.msra.mxu0 %v4368
    %4585 = vmatprep.mubr.bf16.mxu0 %v3913
    %4586 = vmatmul.mubr.bf16.gmra.mrb[0].mxu0 %v3912
    %v4587 = vpop.f32.mrb[0].mxu0
    %v4588 = vadd.f32 %v4548, %v4587
    %v4589 = vpop.f32.mrb[0].mxu0
    %v4590 = vpop.f32.mrb[0].mxu0
    %v4591 = vpop.f32.mrb[0].mxu0
    %4592 = vdwg.mxu0
    %v4593 = vmax.f32 %v4588, 0.0
    %4594 = vst [vmem:[#allocation20] sm:$0x3] %v4593
    // Predicated region
    $region146: #{tpu_custom_call.1} parent=1 // pred_check
      _
    $region147: #{tpu_custom_call.1} parent=1 // pred_check_branch
      %4596 = sbr.rel (0) target = $region149
    $region148: #{tpu_custom_call.1} parent=1 // pred_region
      %s4598 = ssub.s32 32, 32
      %4599 = vsyncadd [#allocation4], %s4598
      %s4601 = sshll.u32 [#allocation20], 4
      %s4602 = int_to_ptr.vmem [resolvable:$true] %s4601
      %4604 = dma.vmem_to_hbm [thread:$0]  %s4602, 32, %s25, [#allocation4]
    $region149: #{tpu_custom_call.1} parent=1 // pred_fallthru
      _
    // Predicated region
    $region150: #{tpu_custom_call.1} parent=1 // pred_check
      _
    $region151: #{tpu_custom_call.1} parent=1 // pred_check_branch
      %4606 = sbr.rel (0) target = $region153
    $region152: #{tpu_custom_call.1} parent=1 // pred_region
      %4607 = dma.done [#allocation4], 32
    $region153: #{tpu_custom_call.1} parent=1 // pred_fallthru
      _
    %4608 = vsyncpa [#allocation3], 1
    %4609 = vsyncpa [#allocation6], 1
    %4610 = vsyncpa [#allocation9], 1
    %4611 = vsyncpa [#allocation12], 1
    %4612 = vsyncpa [#allocation15], 1
    %4613 = vsyncpa [#allocation18], 1
    %4614 = vsyncpa [#allocation4], 1

</llo_original>
